<compile_context>
chip_gen: v7x
topology: tpu7x:2x2x1
jax: 0.10.0
libtpu: 0.0.40
codegen_flags: <defaults>
</compile_context>

<pallas_src>
import numpy as np
import jax
import jax.numpy as jnp
from jax.experimental import pallas as pl
from jax.experimental.pallas import tpu as pltpu

# ----- model hyperparameters (atk_Generator defaults) -----
Z_DIM = 256
Y_EMBED = 256
BOTTOM = 4                 # bottom_width
NUM_CLASSES = 10
FEA = 16                   # self.fea
P = BOTTOM * BOTTOM        # 16 spatial positions
EPS = 1e-5


# ----------------------------------------------------------------------------
# Pallas kernel: the entire forward pass (l1, block2, block3, l4)
# ----------------------------------------------------------------------------
def gen_kernel(yemb_ref, z_ref, w1_ref, b1_ref,
               r16_ref, bc16_ref, r32_ref, bc32_ref,
               b2c1_ref, b2c1b_ref, b2c2_ref, b2c2b_ref, b2sc_ref, b2scb_ref,
               b3c1_ref, b3c1b_ref, b3c2_ref, b3c2b_ref, b3sc_ref, b3scb_ref,
               w4_ref, b4_ref, out_ref):
    f32 = jnp.float32
    bf16 = jnp.bfloat16

    B = z_ref.shape[0]
    inv_bp = 1.0 / float(B * P)          # static at trace time

    def mm(a, b):
        return jnp.dot(a, b, preferred_element_type=f32)

    def conv(x, w_ref, b_ref):
        # bf16 MXU matmul against a precomputed (Toeplitz / linear) weight + f32 bias.
        return mm(x.astype(bf16), w_ref[...]) + b_ref[...]

    def bn(x, r_ref, bc_ref):
        # Training-mode, non-affine BatchNorm2d: per-channel mean/var over (B,H,W).
        # One tiny reduce matmul for [sum(x); sum(x^2)] -> (2, C), then one tiny
        # broadcast matmul for [mean; inv_std] -> (2, C*P).  f32 throughout.
        s = jnp.sum(x, axis=0, keepdims=True)                    # (1, C*P)
        s2 = jnp.sum(x * x, axis=0, keepdims=True)               # (1, C*P)
        red = mm(jnp.concatenate([s, s2], axis=0), r_ref[...]) * inv_bp   # (2, C)
        mean_c = red[0:1, :]
        var_c = red[1:2, :] - mean_c * mean_c
        inv_c = jax.lax.rsqrt(var_c + EPS)
        bc = mm(jnp.concatenate([mean_c, inv_c], axis=0), bc_ref[...])    # (2, C*P)
        return (x - bc[0:1, :]) * bc[1:2, :]

    def relu(x):
        return jnp.maximum(x, 0.0)

    # ----- yembed = normalize(embedding(y));  yz = z * yembed -----
    # (embedding gather is done outside the kernel; normalization here, rsqrt on EUP)
    ye = yemb_ref[...]
    ye = ye * jax.lax.rsqrt(jnp.sum(ye * ye, axis=1, keepdims=True) + 1e-12)
    yz = z_ref[...] * ye                                         # (B, Z_DIM) f32

    # ----- l1 (weights already permuted to NHWC-flat, C = FEA = 16) -----
    h = conv(yz, w1_ref, b1_ref)                                 # (B, P*16)

    # ----- Block 2: 16 -> 32 (h_ch = 32), no upsample -----
    sc = conv(h, b2sc_ref, b2scb_ref)                            # 1x1 shortcut conv
    r = relu(bn(h, r16_ref, bc16_ref))
    r = conv(r, b2c1_ref, b2c1b_ref)                             # 3x3 conv
    r = relu(bn(r, r32_ref, bc32_ref))
    r = conv(r, b2c2_ref, b2c2b_ref)                             # 3x3 conv
    h = sc + r                                                   # (B, P*32)

    # ----- Block 3: 32 -> 16 (h_ch = 16), no upsample -----
    sc = conv(h, b3sc_ref, b3scb_ref)
    r = relu(bn(h, r32_ref, bc32_ref))
    r = conv(r, b3c1_ref, b3c1b_ref)
    r = relu(bn(r, r16_ref, bc16_ref))
    r = conv(r, b3c2_ref, b3c2b_ref)
    h = sc + r                                                   # (B, P*16)

    # ----- l4 (rows already permuted to match torch's NCHW flatten) -----
    out_ref[...] = conv(h, w4_ref, b4_ref)


# ----------------------------------------------------------------------------
# Host-side (one-time) parameter preprocessing
# ----------------------------------------------------------------------------
def conv_toeplitz(w, H, W, pad):
    """w: (kh, kw, Cin, Cout) -> T (H*W*Cin, H*W*Cout) with out_flat = x_flat @ T,
    x_flat/out_flat in position-major, channel-minor (NHWC-flat) layout."""
    kh, kw, cin, cout = w.shape
    T = np.zeros((H * W * cin, H * W * cout), dtype=np.float32)
    for py in range(H):
        for px in range(W):
            p = py * W + px
            for ky in range(kh):
                for kx in range(kw):
                    qy, qx = py + ky - pad, px + kx - pad
                    if 0 <= qy < H and 0 <= qx < W:
                        q = qy * W + qx
                        T[q * cin:(q + 1) * cin, p * cout:(p + 1) * cout] = w[ky, kx]
    return T


def _reduce_matrix(C):
    # (P*C, C): sums the NHWC-flat row over positions per channel (no 1/(B*P) —
    # that factor is applied in-kernel so the matrices are batch-size independent).
    return np.kron(np.ones((P, 1), np.float32), np.eye(C, dtype=np.float32))


def _broadcast_matrix(C):
    # (C, P*C): broadcasts per-channel values back to the NHWC-flat row layout.
    return np.kron(np.ones((1, P), np.float32), np.eye(C, dtype=np.float32))


def prepare_params(params):
    """Call ONCE.  Builds Toeplitz conv matrices, permutes l1/l4 to NHWC-flat
    layout, tiles biases, casts matmul weights to bf16, and returns a dict of
    device arrays that can be reused across (jitted) calls."""
    np_p = jax.tree_util.tree_map(np.asarray, params)
    bf16 = jnp.bfloat16
    f32 = jnp.float32

    # permutation between torch NCHW-flat index (c*P + p) and kernel NHWC-flat (p*C + c)
    perm = np.arange(FEA * P).reshape(FEA, P).T.reshape(-1)

    def bias_row(b):
        return jnp.asarray(np.tile(b, P)[None, :], f32)

    def blk(bp, pfx):
        return {
            pfx + 'c1': jnp.asarray(conv_toeplitz(bp['c1_w'], BOTTOM, BOTTOM, 1), bf16),
            pfx + 'c1b': bias_row(bp['c1_b']),
            pfx + 'c2': jnp.asarray(conv_toeplitz(bp['c2_w'], BOTTOM, BOTTOM, 1), bf16),
            pfx + 'c2b': bias_row(bp['c2_b']),
            pfx + 'sc': jnp.asarray(conv_toeplitz(bp['sc_w'], BOTTOM, BOTTOM, 0), bf16),
            pfx + 'scb': bias_row(bp['sc_b']),
        }

    prep = dict(
        emb=jnp.asarray(np_p['emb'], f32),
        w1=jnp.asarray(np_p['w1'][:, perm], bf16),
        b1=jnp.asarray(np_p['b1'][perm][None, :], f32),
        w4=jnp.asarray(np_p['w4'][perm, :], bf16),
        b4=jnp.asarray(np_p['b4'][None, :], f32),
        r16=jnp.asarray(_reduce_matrix(16), f32),
        bc16=jnp.asarray(_broadcast_matrix(16), f32),
        r32=jnp.asarray(_reduce_matrix(32), f32),
        bc32=jnp.asarray(_broadcast_matrix(32), f32),
    )
    prep.update(blk(np_p['block2'], 'b2'))
    prep.update(blk(np_p['block3'], 'b3'))
    return prep


# ----------------------------------------------------------------------------
# Jitted wrapper: gather embedding, then one fused pallas_call
# ----------------------------------------------------------------------------
@jax.jit
def atk_generator_pallas(z, y, prep):
    B = z.shape[0]
    yembed = jnp.take(prep['emb'], y.astype(jnp.int32), axis=0)   # (B, Y_EMBED) gather

    args = (yembed, z.astype(jnp.float32),
            prep['w1'], prep['b1'],
            prep['r16'], prep['bc16'], prep['r32'], prep['bc32'],
            prep['b2c1'], prep['b2c1b'], prep['b2c2'], prep['b2c2b'],
            prep['b2sc'], prep['b2scb'],
            prep['b3c1'], prep['b3c1b'], prep['b3c2'], prep['b3c2b'],
            prep['b3sc'], prep['b3scb'],
            prep['w4'], prep['b4'])

    return pl.pallas_call(
        gen_kernel,
        out_shape=jax.ShapeDtypeStruct((B, Z_DIM), jnp.float32),
        in_specs=[pl.BlockSpec(memory_space=pltpu.MemorySpace.VMEM)] * len(args),
        out_specs=pl.BlockSpec(memory_space=pltpu.MemorySpace.VMEM),
    )(*args)


# ----------------------------------------------------------------------------
# Parameter init + pure-JAX reference (mirrors the PyTorch NCHW math)
# ----------------------------------------------------------------------------
def init_params(key):
    keys = iter(jax.random.split(key, 20))

    def w(shape, scale=0.1):
        return scale * jax.random.normal(next(keys), shape, jnp.float32)

    def block_params(cin, ch, cout):
        return dict(
            c1_w=w((3, 3, cin, ch)), c1_b=w((ch,)),
            c2_w=w((3, 3, ch, cout)), c2_b=w((cout,)),
            sc_w=w((1, 1, cin, cout)), sc_b=w((cout,)),
        )

    # CategoricalConditionalBatchNorm2d embeddings are initialized to ones/zeros
    # in the reference module, so conditional BN == plain (non-affine) BN exactly.
    return dict(
        emb=w((NUM_CLASSES, Y_EMBED), 1.0),
        w1=w((Z_DIM, FEA * P)), b1=w((FEA * P,)),
        block2=block_params(16, 32, 32),
        block3=block_params(32, 16, 16),
        w4=w((FEA * P, Z_DIM)), b4=w((Z_DIM,)),
    )


def _bn_ref(x):
    mean = jnp.mean(x, axis=(0, 2, 3), keepdims=True)
    var = jnp.mean((x - mean) ** 2, axis=(0, 2, 3), keepdims=True)
    return (x - mean) / jnp.sqrt(var + EPS)


def _conv_ref(x, w, b, pad):
    wt = jnp.transpose(w, (3, 2, 0, 1))            # (kh,kw,Cin,Cout) -> OIHW
    out = jax.lax.conv_general_dilated(x, wt, (1, 1), [(pad, pad)] * 2,
                                       dimension_numbers=('NCHW', 'OIHW', 'NCHW'))
    return out + b[None, :, None, None]


def _block_ref(x, bp):
    sc = _conv_ref(x, bp['sc_w'], bp['sc_b'], 0)
    h = jnp.maximum(_bn_ref(x), 0.0)
    h = _conv_ref(h, bp['c1_w'], bp['c1_b'], 1)
    h = jnp.maximum(_bn_ref(h), 0.0)
    h = _conv_ref(h, bp['c2_w'], bp['c2_b'], 1)
    return sc + h


def reference_forward(z, y, params):
    B = z.shape[0]
    yembed = params['emb'][y]
    yembed = yembed / jnp.sqrt(jnp.sum(yembed ** 2, axis=1, keepdims=True))
    yz = z * yembed
    h = yz @ params['w1'] + params['b1']
    h = h.reshape(B, FEA, BOTTOM, BOTTOM)          # NCHW, like torch .view()
    h = _block_ref(h, params['block2'])
    h = _block_ref(h, params['block3'])
    return h.reshape(B, -1) @ params['w4'] + params['b4']


if __name__ == "__main__":
    key = jax.random.PRNGKey(0)
    kz, ky, kp = jax.random.split(key, 3)
    B = 4
    z = jax.random.normal(kz, (B, Z_DIM), jnp.float32)
    y = jax.random.randint(ky, (B,), 0, NUM_CLASSES)
    params = init_params(kp)

    prep = prepare_params(params)          # one-time host-side preprocessing
    out = atk_generator_pallas(z, y, prep)
    out = jax.block_until_ready(out)

    ref = reference_forward(z, y, params)
    # loose tolerance: bf16 weights + TPU default matmul precision in both the
    # Pallas kernel and the XLA reference.
    np.testing.assert_allclose(np.asarray(out), np.asarray(ref), rtol=5e-2, atol=5e-2)
    print("KERNEL_OK")
</pallas_src>

<mosaic_0001>
module attributes {stable_mosaic.version = 11 : i64} {
  func.func @gen_kernel(%arg0: memref<4x256xf32, #tpu.memory_space<vmem>>, %arg1: memref<4x256xf32, #tpu.memory_space<vmem>>, %arg2: memref<256x256xbf16, #tpu.memory_space<vmem>>, %arg3: memref<1x256xf32, #tpu.memory_space<vmem>>, %arg4: memref<256x16xf32, #tpu.memory_space<vmem>>, %arg5: memref<16x256xf32, #tpu.memory_space<vmem>>, %arg6: memref<512x32xf32, #tpu.memory_space<vmem>>, %arg7: memref<32x512xf32, #tpu.memory_space<vmem>>, %arg8: memref<256x512xbf16, #tpu.memory_space<vmem>>, %arg9: memref<1x512xf32, #tpu.memory_space<vmem>>, %arg10: memref<512x512xbf16, #tpu.memory_space<vmem>>, %arg11: memref<1x512xf32, #tpu.memory_space<vmem>>, %arg12: memref<256x512xbf16, #tpu.memory_space<vmem>>, %arg13: memref<1x512xf32, #tpu.memory_space<vmem>>, %arg14: memref<512x256xbf16, #tpu.memory_space<vmem>>, %arg15: memref<1x256xf32, #tpu.memory_space<vmem>>, %arg16: memref<256x256xbf16, #tpu.memory_space<vmem>>, %arg17: memref<1x256xf32, #tpu.memory_space<vmem>>, %arg18: memref<512x256xbf16, #tpu.memory_space<vmem>>, %arg19: memref<1x256xf32, #tpu.memory_space<vmem>>, %arg20: memref<256x256xbf16, #tpu.memory_space<vmem>>, %arg21: memref<1x256xf32, #tpu.memory_space<vmem>>, %arg22: memref<4x256xf32, #tpu.memory_space<vmem>>) attributes {dimension_semantics = [], scalar_prefetch = 0 : i64, scratch_operands = 0 : i64, tpu.core_type = #tpu.core_type<tc>} {
    %c0 = arith.constant 0 : index
    %c0_0 = arith.constant 0 : index
    %0 = vector.load %arg0[%c0, %c0_0] : memref<4x256xf32, #tpu.memory_space<vmem>>, vector<4x256xf32>
    %1 = arith.mulf %0, %0 : vector<4x256xf32>
    %cst = arith.constant dense<0.000000e+00> : vector<4xf32>
    %2 = vector.multi_reduction <add>, %1, %cst [1] : vector<4x256xf32> to vector<4xf32>
    %3 = vector.shape_cast %2 : vector<4xf32> to vector<4x1xf32>
    %cst_1 = arith.constant 9.99999996E-13 : f32
    %4 = vector.broadcast %cst_1 : f32 to vector<4x1xf32>
    %5 = arith.addf %3, %4 : vector<4x1xf32>
    %6 = math.rsqrt %5 : vector<4x1xf32>
    %7 = vector.broadcast %6 : vector<4x1xf32> to vector<4x256xf32>
    %8 = arith.mulf %0, %7 : vector<4x256xf32>
    %c0_2 = arith.constant 0 : index
    %c0_3 = arith.constant 0 : index
    %9 = vector.load %arg1[%c0_2, %c0_3] : memref<4x256xf32, #tpu.memory_space<vmem>>, vector<4x256xf32>
    %10 = arith.mulf %9, %8 : vector<4x256xf32>
    %11 = arith.truncf %10 : vector<4x256xf32> to vector<4x256xbf16>
    %c0_4 = arith.constant 0 : index
    %c0_5 = arith.constant 0 : index
    %12 = vector.load %arg2[%c0_4, %c0_5] : memref<256x256xbf16, #tpu.memory_space<vmem>>, vector<256x256xbf16>
    %cst_6 = arith.constant dense<0.000000e+00> : vector<4x256xf32>
    %13 = tpu.matmul %11, %12, %cst_6 {dimension_numbers = #tpu.dot_dimension_numbers<[1], [0], [0], [1], [0, 0, 1, 1], [], []>} : vector<4x256xbf16>, vector<256x256xbf16>, vector<4x256xf32> -> vector<4x256xf32>
    %c0_7 = arith.constant 0 : index
    %c0_8 = arith.constant 0 : index
    %14 = vector.load %arg3[%c0_7, %c0_8] : memref<1x256xf32, #tpu.memory_space<vmem>>, vector<1x256xf32>
    %15 = vector.broadcast %14 : vector<1x256xf32> to vector<4x256xf32>
    %16 = arith.addf %13, %15 : vector<4x256xf32>
    %17 = arith.truncf %16 : vector<4x256xf32> to vector<4x256xbf16>
    %c0_9 = arith.constant 0 : index
    %c0_10 = arith.constant 0 : index
    %18 = vector.load %arg12[%c0_9, %c0_10] : memref<256x512xbf16, #tpu.memory_space<vmem>>, vector<256x512xbf16>
    %cst_11 = arith.constant dense<0.000000e+00> : vector<4x512xf32>
    %19 = tpu.matmul %17, %18, %cst_11 {dimension_numbers = #tpu.dot_dimension_numbers<[1], [0], [0], [1], [0, 0, 1, 1], [], []>} : vector<4x256xbf16>, vector<256x512xbf16>, vector<4x512xf32> -> vector<4x512xf32>
    %c0_12 = arith.constant 0 : index
    %c0_13 = arith.constant 0 : index
    %20 = vector.load %arg13[%c0_12, %c0_13] : memref<1x512xf32, #tpu.memory_space<vmem>>, vector<1x512xf32>
    %21 = vector.broadcast %20 : vector<1x512xf32> to vector<4x512xf32>
    %22 = arith.addf %19, %21 : vector<4x512xf32>
    %cst_14 = arith.constant dense<0.000000e+00> : vector<256xf32>
    %23 = vector.multi_reduction <add>, %16, %cst_14 [0] : vector<4x256xf32> to vector<256xf32>
    %24 = vector.shape_cast %23 : vector<256xf32> to vector<1x256xf32>
    %25 = arith.mulf %16, %16 : vector<4x256xf32>
    %cst_15 = arith.constant dense<0.000000e+00> : vector<256xf32>
    %26 = vector.multi_reduction <add>, %25, %cst_15 [0] : vector<4x256xf32> to vector<256xf32>
    %27 = vector.shape_cast %26 : vector<256xf32> to vector<1x256xf32>
    %28 = tpu.concatenate %24, %27 in 0 : vector<1x256xf32>, vector<1x256xf32> -> vector<2x256xf32>
    %c0_16 = arith.constant 0 : index
    %c0_17 = arith.constant 0 : index
    %29 = vector.load %arg4[%c0_16, %c0_17] : memref<256x16xf32, #tpu.memory_space<vmem>>, vector<256x16xf32>
    %cst_18 = arith.constant dense<0.000000e+00> : vector<2x16xf32>
    %30 = tpu.matmul %28, %29, %cst_18 {dimension_numbers = #tpu.dot_dimension_numbers<[1], [0], [0], [1], [0, 0, 1, 1], [], []>} : vector<2x256xf32>, vector<256x16xf32>, vector<2x16xf32> -> vector<2x16xf32>
    %cst_19 = arith.constant 1.562500e-02 : f32
    %31 = vector.broadcast %cst_19 : f32 to vector<2x16xf32>
    %32 = arith.mulf %30, %31 : vector<2x16xf32>
    %33 = vector.extract_strided_slice %32 {offsets = [0, 0], sizes = [1, 16], strides = [1, 1]} : vector<2x16xf32> to vector<1x16xf32>
    %34 = vector.extract_strided_slice %32 {offsets = [1, 0], sizes = [1, 16], strides = [1, 1]} : vector<2x16xf32> to vector<1x16xf32>
    %35 = arith.mulf %33, %33 : vector<1x16xf32>
    %36 = arith.subf %34, %35 : vector<1x16xf32>
    %cst_20 = arith.constant 9.99999974E-6 : f32
    %37 = vector.broadcast %cst_20 : f32 to vector<1x16xf32>
    %38 = arith.addf %36, %37 : vector<1x16xf32>
    %39 = math.rsqrt %38 : vector<1x16xf32>
    %40 = tpu.concatenate %33, %39 in 0 : vector<1x16xf32>, vector<1x16xf32> -> vector<2x16xf32>
    %c0_21 = arith.constant 0 : index
    %c0_22 = arith.constant 0 : index
    %41 = vector.load %arg5[%c0_21, %c0_22] : memref<16x256xf32, #tpu.memory_space<vmem>>, vector<16x256xf32>
    %cst_23 = arith.constant dense<0.000000e+00> : vector<2x256xf32>
    %42 = tpu.matmul %40, %41, %cst_23 {dimension_numbers = #tpu.dot_dimension_numbers<[1], [0], [0], [1], [0, 0, 1, 1], [], []>} : vector<2x16xf32>, vector<16x256xf32>, vector<2x256xf32> -> vector<2x256xf32>
    %43 = vector.extract_strided_slice %42 {offsets = [0, 0], sizes = [1, 256], strides = [1, 1]} : vector<2x256xf32> to vector<1x256xf32>
    %44 = vector.broadcast %43 : vector<1x256xf32> to vector<4x256xf32>
    %45 = arith.subf %16, %44 : vector<4x256xf32>
    %46 = vector.extract_strided_slice %42 {offsets = [1, 0], sizes = [1, 256], strides = [1, 1]} : vector<2x256xf32> to vector<1x256xf32>
    %47 = vector.broadcast %46 : vector<1x256xf32> to vector<4x256xf32>
    %48 = arith.mulf %45, %47 : vector<4x256xf32>
    %cst_24 = arith.constant 0.000000e+00 : f32
    %49 = vector.broadcast %cst_24 : f32 to vector<4x256xf32>
    %50 = arith.maximumf %48, %49 : vector<4x256xf32>
    %51 = arith.truncf %50 : vector<4x256xf32> to vector<4x256xbf16>
    %c0_25 = arith.constant 0 : index
    %c0_26 = arith.constant 0 : index
    %52 = vector.load %arg8[%c0_25, %c0_26] : memref<256x512xbf16, #tpu.memory_space<vmem>>, vector<256x512xbf16>
    %cst_27 = arith.constant dense<0.000000e+00> : vector<4x512xf32>
    %53 = tpu.matmul %51, %52, %cst_27 {dimension_numbers = #tpu.dot_dimension_numbers<[1], [0], [0], [1], [0, 0, 1, 1], [], []>} : vector<4x256xbf16>, vector<256x512xbf16>, vector<4x512xf32> -> vector<4x512xf32>
    %c0_28 = arith.constant 0 : index
    %c0_29 = arith.constant 0 : index
    %54 = vector.load %arg9[%c0_28, %c0_29] : memref<1x512xf32, #tpu.memory_space<vmem>>, vector<1x512xf32>
    %55 = vector.broadcast %54 : vector<1x512xf32> to vector<4x512xf32>
    %56 = arith.addf %53, %55 : vector<4x512xf32>
    %cst_30 = arith.constant dense<0.000000e+00> : vector<512xf32>
    %57 = vector.multi_reduction <add>, %56, %cst_30 [0] : vector<4x512xf32> to vector<512xf32>
    %58 = vector.shape_cast %57 : vector<512xf32> to vector<1x512xf32>
    %59 = arith.mulf %56, %56 : vector<4x512xf32>
    %cst_31 = arith.constant dense<0.000000e+00> : vector<512xf32>
    %60 = vector.multi_reduction <add>, %59, %cst_31 [0] : vector<4x512xf32> to vector<512xf32>
    %61 = vector.shape_cast %60 : vector<512xf32> to vector<1x512xf32>
    %62 = tpu.concatenate %58, %61 in 0 : vector<1x512xf32>, vector<1x512xf32> -> vector<2x512xf32>
    %c0_32 = arith.constant 0 : index
    %c0_33 = arith.constant 0 : index
    %63 = vector.load %arg6[%c0_32, %c0_33] : memref<512x32xf32, #tpu.memory_space<vmem>>, vector<512x32xf32>
    %cst_34 = arith.constant dense<0.000000e+00> : vector<2x32xf32>
    %64 = tpu.matmul %62, %63, %cst_34 {dimension_numbers = #tpu.dot_dimension_numbers<[1], [0], [0], [1], [0, 0, 1, 1], [], []>} : vector<2x512xf32>, vector<512x32xf32>, vector<2x32xf32> -> vector<2x32xf32>
    %cst_35 = arith.constant 1.562500e-02 : f32
    %65 = vector.broadcast %cst_35 : f32 to vector<2x32xf32>
    %66 = arith.mulf %64, %65 : vector<2x32xf32>
    %67 = vector.extract_strided_slice %66 {offsets = [0, 0], sizes = [1, 32], strides = [1, 1]} : vector<2x32xf32> to vector<1x32xf32>
    %68 = vector.extract_strided_slice %66 {offsets = [1, 0], sizes = [1, 32], strides = [1, 1]} : vector<2x32xf32> to vector<1x32xf32>
    %69 = arith.mulf %67, %67 : vector<1x32xf32>
    %70 = arith.subf %68, %69 : vector<1x32xf32>
    %cst_36 = arith.constant 9.99999974E-6 : f32
    %71 = vector.broadcast %cst_36 : f32 to vector<1x32xf32>
    %72 = arith.addf %70, %71 : vector<1x32xf32>
    %73 = math.rsqrt %72 : vector<1x32xf32>
    %74 = tpu.concatenate %67, %73 in 0 : vector<1x32xf32>, vector<1x32xf32> -> vector<2x32xf32>
    %c0_37 = arith.constant 0 : index
    %c0_38 = arith.constant 0 : index
    %75 = vector.load %arg7[%c0_37, %c0_38] : memref<32x512xf32, #tpu.memory_space<vmem>>, vector<32x512xf32>
    %cst_39 = arith.constant dense<0.000000e+00> : vector<2x512xf32>
    %76 = tpu.matmul %74, %75, %cst_39 {dimension_numbers = #tpu.dot_dimension_numbers<[1], [0], [0], [1], [0, 0, 1, 1], [], []>} : vector<2x32xf32>, vector<32x512xf32>, vector<2x512xf32> -> vector<2x512xf32>
    %77 = vector.extract_strided_slice %76 {offsets = [0, 0], sizes = [1, 512], strides = [1, 1]} : vector<2x512xf32> to vector<1x512xf32>
    %78 = vector.broadcast %77 : vector<1x512xf32> to vector<4x512xf32>
    %79 = arith.subf %56, %78 : vector<4x512xf32>
    %80 = vector.extract_strided_slice %76 {offsets = [1, 0], sizes = [1, 512], strides = [1, 1]} : vector<2x512xf32> to vector<1x512xf32>
    %81 = vector.broadcast %80 : vector<1x512xf32> to vector<4x512xf32>
    %82 = arith.mulf %79, %81 : vector<4x512xf32>
    %cst_40 = arith.constant 0.000000e+00 : f32
    %83 = vector.broadcast %cst_40 : f32 to vector<4x512xf32>
    %84 = arith.maximumf %82, %83 : vector<4x512xf32>
    %85 = arith.truncf %84 : vector<4x512xf32> to vector<4x512xbf16>
    %c0_41 = arith.constant 0 : index
    %c0_42 = arith.constant 0 : index
    %86 = vector.load %arg10[%c0_41, %c0_42] : memref<512x512xbf16, #tpu.memory_space<vmem>>, vector<512x512xbf16>
    %cst_43 = arith.constant dense<0.000000e+00> : vector<4x512xf32>
    %87 = tpu.matmul %85, %86, %cst_43 {dimension_numbers = #tpu.dot_dimension_numbers<[1], [0], [0], [1], [0, 0, 1, 1], [], []>} : vector<4x512xbf16>, vector<512x512xbf16>, vector<4x512xf32> -> vector<4x512xf32>
    %c0_44 = arith.constant 0 : index
    %c0_45 = arith.constant 0 : index
    %88 = vector.load %arg11[%c0_44, %c0_45] : memref<1x512xf32, #tpu.memory_space<vmem>>, vector<1x512xf32>
    %89 = vector.broadcast %88 : vector<1x512xf32> to vector<4x512xf32>
    %90 = arith.addf %87, %89 : vector<4x512xf32>
    %91 = arith.addf %22, %90 : vector<4x512xf32>
    %92 = arith.truncf %91 : vector<4x512xf32> to vector<4x512xbf16>
    %c0_46 = arith.constant 0 : index
    %c0_47 = arith.constant 0 : index
    %93 = vector.load %arg18[%c0_46, %c0_47] : memref<512x256xbf16, #tpu.memory_space<vmem>>, vector<512x256xbf16>
    %cst_48 = arith.constant dense<0.000000e+00> : vector<4x256xf32>
    %94 = tpu.matmul %92, %93, %cst_48 {dimension_numbers = #tpu.dot_dimension_numbers<[1], [0], [0], [1], [0, 0, 1, 1], [], []>} : vector<4x512xbf16>, vector<512x256xbf16>, vector<4x256xf32> -> vector<4x256xf32>
    %c0_49 = arith.constant 0 : index
    %c0_50 = arith.constant 0 : index
    %95 = vector.load %arg19[%c0_49, %c0_50] : memref<1x256xf32, #tpu.memory_space<vmem>>, vector<1x256xf32>
    %96 = vector.broadcast %95 : vector<1x256xf32> to vector<4x256xf32>
    %97 = arith.addf %94, %96 : vector<4x256xf32>
    %cst_51 = arith.constant dense<0.000000e+00> : vector<512xf32>
    %98 = vector.multi_reduction <add>, %91, %cst_51 [0] : vector<4x512xf32> to vector<512xf32>
    %99 = vector.shape_cast %98 : vector<512xf32> to vector<1x512xf32>
    %100 = arith.mulf %91, %91 : vector<4x512xf32>
    %cst_52 = arith.constant dense<0.000000e+00> : vector<512xf32>
    %101 = vector.multi_reduction <add>, %100, %cst_52 [0] : vector<4x512xf32> to vector<512xf32>
    %102 = vector.shape_cast %101 : vector<512xf32> to vector<1x512xf32>
    %103 = tpu.concatenate %99, %102 in 0 : vector<1x512xf32>, vector<1x512xf32> -> vector<2x512xf32>
    %c0_53 = arith.constant 0 : index
    %c0_54 = arith.constant 0 : index
    %104 = vector.load %arg6[%c0_53, %c0_54] : memref<512x32xf32, #tpu.memory_space<vmem>>, vector<512x32xf32>
    %cst_55 = arith.constant dense<0.000000e+00> : vector<2x32xf32>
    %105 = tpu.matmul %103, %104, %cst_55 {dimension_numbers = #tpu.dot_dimension_numbers<[1], [0], [0], [1], [0, 0, 1, 1], [], []>} : vector<2x512xf32>, vector<512x32xf32>, vector<2x32xf32> -> vector<2x32xf32>
    %cst_56 = arith.constant 1.562500e-02 : f32
    %106 = vector.broadcast %cst_56 : f32 to vector<2x32xf32>
    %107 = arith.mulf %105, %106 : vector<2x32xf32>
    %108 = vector.extract_strided_slice %107 {offsets = [0, 0], sizes = [1, 32], strides = [1, 1]} : vector<2x32xf32> to vector<1x32xf32>
    %109 = vector.extract_strided_slice %107 {offsets = [1, 0], sizes = [1, 32], strides = [1, 1]} : vector<2x32xf32> to vector<1x32xf32>
    %110 = arith.mulf %108, %108 : vector<1x32xf32>
    %111 = arith.subf %109, %110 : vector<1x32xf32>
    %cst_57 = arith.constant 9.99999974E-6 : f32
    %112 = vector.broadcast %cst_57 : f32 to vector<1x32xf32>
    %113 = arith.addf %111, %112 : vector<1x32xf32>
    %114 = math.rsqrt %113 : vector<1x32xf32>
    %115 = tpu.concatenate %108, %114 in 0 : vector<1x32xf32>, vector<1x32xf32> -> vector<2x32xf32>
    %c0_58 = arith.constant 0 : index
    %c0_59 = arith.constant 0 : index
    %116 = vector.load %arg7[%c0_58, %c0_59] : memref<32x512xf32, #tpu.memory_space<vmem>>, vector<32x512xf32>
    %cst_60 = arith.constant dense<0.000000e+00> : vector<2x512xf32>
    %117 = tpu.matmul %115, %116, %cst_60 {dimension_numbers = #tpu.dot_dimension_numbers<[1], [0], [0], [1], [0, 0, 1, 1], [], []>} : vector<2x32xf32>, vector<32x512xf32>, vector<2x512xf32> -> vector<2x512xf32>
    %118 = vector.extract_strided_slice %117 {offsets = [0, 0], sizes = [1, 512], strides = [1, 1]} : vector<2x512xf32> to vector<1x512xf32>
    %119 = vector.broadcast %118 : vector<1x512xf32> to vector<4x512xf32>
    %120 = arith.subf %91, %119 : vector<4x512xf32>
    %121 = vector.extract_strided_slice %117 {offsets = [1, 0], sizes = [1, 512], strides = [1, 1]} : vector<2x512xf32> to vector<1x512xf32>
    %122 = vector.broadcast %121 : vector<1x512xf32> to vector<4x512xf32>
    %123 = arith.mulf %120, %122 : vector<4x512xf32>
    %cst_61 = arith.constant 0.000000e+00 : f32
    %124 = vector.broadcast %cst_61 : f32 to vector<4x512xf32>
    %125 = arith.maximumf %123, %124 : vector<4x512xf32>
    %126 = arith.truncf %125 : vector<4x512xf32> to vector<4x512xbf16>
    %c0_62 = arith.constant 0 : index
    %c0_63 = arith.constant 0 : index
    %127 = vector.load %arg14[%c0_62, %c0_63] : memref<512x256xbf16, #tpu.memory_space<vmem>>, vector<512x256xbf16>
    %cst_64 = arith.constant dense<0.000000e+00> : vector<4x256xf32>
    %128 = tpu.matmul %126, %127, %cst_64 {dimension_numbers = #tpu.dot_dimension_numbers<[1], [0], [0], [1], [0, 0, 1, 1], [], []>} : vector<4x512xbf16>, vector<512x256xbf16>, vector<4x256xf32> -> vector<4x256xf32>
    %c0_65 = arith.constant 0 : index
    %c0_66 = arith.constant 0 : index
    %129 = vector.load %arg15[%c0_65, %c0_66] : memref<1x256xf32, #tpu.memory_space<vmem>>, vector<1x256xf32>
    %130 = vector.broadcast %129 : vector<1x256xf32> to vector<4x256xf32>
    %131 = arith.addf %128, %130 : vector<4x256xf32>
    %cst_67 = arith.constant dense<0.000000e+00> : vector<256xf32>
    %132 = vector.multi_reduction <add>, %131, %cst_67 [0] : vector<4x256xf32> to vector<256xf32>
    %133 = vector.shape_cast %132 : vector<256xf32> to vector<1x256xf32>
    %134 = arith.mulf %131, %131 : vector<4x256xf32>
    %cst_68 = arith.constant dense<0.000000e+00> : vector<256xf32>
    %135 = vector.multi_reduction <add>, %134, %cst_68 [0] : vector<4x256xf32> to vector<256xf32>
    %136 = vector.shape_cast %135 : vector<256xf32> to vector<1x256xf32>
    %137 = tpu.concatenate %133, %136 in 0 : vector<1x256xf32>, vector<1x256xf32> -> vector<2x256xf32>
    %c0_69 = arith.constant 0 : index
    %c0_70 = arith.constant 0 : index
    %138 = vector.load %arg4[%c0_69, %c0_70] : memref<256x16xf32, #tpu.memory_space<vmem>>, vector<256x16xf32>
    %cst_71 = arith.constant dense<0.000000e+00> : vector<2x16xf32>
    %139 = tpu.matmul %137, %138, %cst_71 {dimension_numbers = #tpu.dot_dimension_numbers<[1], [0], [0], [1], [0, 0, 1, 1], [], []>} : vector<2x256xf32>, vector<256x16xf32>, vector<2x16xf32> -> vector<2x16xf32>
    %cst_72 = arith.constant 1.562500e-02 : f32
    %140 = vector.broadcast %cst_72 : f32 to vector<2x16xf32>
    %141 = arith.mulf %139, %140 : vector<2x16xf32>
    %142 = vector.extract_strided_slice %141 {offsets = [0, 0], sizes = [1, 16], strides = [1, 1]} : vector<2x16xf32> to vector<1x16xf32>
    %143 = vector.extract_strided_slice %141 {offsets = [1, 0], sizes = [1, 16], strides = [1, 1]} : vector<2x16xf32> to vector<1x16xf32>
    %144 = arith.mulf %142, %142 : vector<1x16xf32>
    %145 = arith.subf %143, %144 : vector<1x16xf32>
    %cst_73 = arith.constant 9.99999974E-6 : f32
    %146 = vector.broadcast %cst_73 : f32 to vector<1x16xf32>
    %147 = arith.addf %145, %146 : vector<1x16xf32>
    %148 = math.rsqrt %147 : vector<1x16xf32>
    %149 = tpu.concatenate %142, %148 in 0 : vector<1x16xf32>, vector<1x16xf32> -> vector<2x16xf32>
    %c0_74 = arith.constant 0 : index
    %c0_75 = arith.constant 0 : index
    %150 = vector.load %arg5[%c0_74, %c0_75] : memref<16x256xf32, #tpu.memory_space<vmem>>, vector<16x256xf32>
    %cst_76 = arith.constant dense<0.000000e+00> : vector<2x256xf32>
    %151 = tpu.matmul %149, %150, %cst_76 {dimension_numbers = #tpu.dot_dimension_numbers<[1], [0], [0], [1], [0, 0, 1, 1], [], []>} : vector<2x16xf32>, vector<16x256xf32>, vector<2x256xf32> -> vector<2x256xf32>
    %152 = vector.extract_strided_slice %151 {offsets = [0, 0], sizes = [1, 256], strides = [1, 1]} : vector<2x256xf32> to vector<1x256xf32>
    %153 = vector.broadcast %152 : vector<1x256xf32> to vector<4x256xf32>
    %154 = arith.subf %131, %153 : vector<4x256xf32>
    %155 = vector.extract_strided_slice %151 {offsets = [1, 0], sizes = [1, 256], strides = [1, 1]} : vector<2x256xf32> to vector<1x256xf32>
    %156 = vector.broadcast %155 : vector<1x256xf32> to vector<4x256xf32>
    %157 = arith.mulf %154, %156 : vector<4x256xf32>
    %cst_77 = arith.constant 0.000000e+00 : f32
    %158 = vector.broadcast %cst_77 : f32 to vector<4x256xf32>
    %159 = arith.maximumf %157, %158 : vector<4x256xf32>
    %160 = arith.truncf %159 : vector<4x256xf32> to vector<4x256xbf16>
    %c0_78 = arith.constant 0 : index
    %c0_79 = arith.constant 0 : index
    %161 = vector.load %arg16[%c0_78, %c0_79] : memref<256x256xbf16, #tpu.memory_space<vmem>>, vector<256x256xbf16>
    %cst_80 = arith.constant dense<0.000000e+00> : vector<4x256xf32>
    %162 = tpu.matmul %160, %161, %cst_80 {dimension_numbers = #tpu.dot_dimension_numbers<[1], [0], [0], [1], [0, 0, 1, 1], [], []>} : vector<4x256xbf16>, vector<256x256xbf16>, vector<4x256xf32> -> vector<4x256xf32>
    %c0_81 = arith.constant 0 : index
    %c0_82 = arith.constant 0 : index
    %163 = vector.load %arg17[%c0_81, %c0_82] : memref<1x256xf32, #tpu.memory_space<vmem>>, vector<1x256xf32>
    %164 = vector.broadcast %163 : vector<1x256xf32> to vector<4x256xf32>
    %165 = arith.addf %162, %164 : vector<4x256xf32>
    %166 = arith.addf %97, %165 : vector<4x256xf32>
    %167 = arith.truncf %166 : vector<4x256xf32> to vector<4x256xbf16>
    %c0_83 = arith.constant 0 : index
    %c0_84 = arith.constant 0 : index
    %168 = vector.load %arg20[%c0_83, %c0_84] : memref<256x256xbf16, #tpu.memory_space<vmem>>, vector<256x256xbf16>
    %cst_85 = arith.constant dense<0.000000e+00> : vector<4x256xf32>
    %169 = tpu.matmul %167, %168, %cst_85 {dimension_numbers = #tpu.dot_dimension_numbers<[1], [0], [0], [1], [0, 0, 1, 1], [], []>} : vector<4x256xbf16>, vector<256x256xbf16>, vector<4x256xf32> -> vector<4x256xf32>
    %c0_86 = arith.constant 0 : index
    %c0_87 = arith.constant 0 : index
    %170 = vector.load %arg21[%c0_86, %c0_87] : memref<1x256xf32, #tpu.memory_space<vmem>>, vector<1x256xf32>
    %171 = vector.broadcast %170 : vector<1x256xf32> to vector<4x256xf32>
    %172 = arith.addf %169, %171 : vector<4x256xf32>
    %c0_88 = arith.constant 0 : index
    %c0_89 = arith.constant 0 : index
    %173 = vector.load %arg22[%c0_88, %c0_89] : memref<4x256xf32, #tpu.memory_space<vmem>>, vector<4x256xf32>
    tpu.vector_store %arg22[%c0_88, %c0_89], %172 {strides = array<i32>} : memref<4x256xf32, #tpu.memory_space<vmem>>, vector<4x256xf32>,
    return
  }
}

</mosaic_0001>

<llo_original>
// kernel: atk_generator_pallas.1
$region0: #{atk_generator_pallas.1}
  #allocation0 [shape = 'u32[]', space=smem, size = 0x4, offset = 0x4, fixed_abs, tag = 'smem constant byte address 0x4 - core index']
  #allocation1 [shape = 'u32[144,128]{1,0:T(1,128)}', space=vmem, size = 0x12000, scoped, tag = 'internal scratch']
  %s0 = inlined_call_operand.vmem [shape: f32[4,256], index: 0, kind: input, shape index: {}]
  %s1 = inlined_call_operand.hbm [shape: f32[4,256], index: 1, kind: input, shape index: {}]
  %s2 = inlined_call_operand.hbm [shape: bf16[256,256], index: 2, kind: input, shape index: {}]
  %s3 = inlined_call_operand.hbm [shape: f32[1,256], index: 3, kind: input, shape index: {}]
  %s4 = inlined_call_operand.vmem [shape: f32[256,16], index: 4, kind: input, shape index: {}]
  %s5 = inlined_call_operand.hbm [shape: f32[16,256], index: 5, kind: input, shape index: {}]
  %s6 = inlined_call_operand.vmem [shape: f32[512,32], index: 6, kind: input, shape index: {}]
  %s7 = inlined_call_operand.hbm [shape: f32[32,512], index: 7, kind: input, shape index: {}]
  %s8 = inlined_call_operand.hbm [shape: bf16[256,512], index: 8, kind: input, shape index: {}]
  %s9 = inlined_call_operand.hbm [shape: f32[1,512], index: 9, kind: input, shape index: {}]
  %s10 = inlined_call_operand.vmem [shape: bf16[512,512], index: 10, kind: input, shape index: {}]
  %s11 = inlined_call_operand.hbm [shape: f32[1,512], index: 11, kind: input, shape index: {}]
  %s12 = inlined_call_operand.hbm [shape: bf16[256,512], index: 12, kind: input, shape index: {}]
  %s13 = inlined_call_operand.hbm [shape: f32[1,512], index: 13, kind: input, shape index: {}]
  %s14 = inlined_call_operand.hbm [shape: bf16[512,256], index: 14, kind: input, shape index: {}]
  %s15 = inlined_call_operand.vmem [shape: f32[1,256], index: 15, kind: input, shape index: {}]
  %s16 = inlined_call_operand.hbm [shape: bf16[256,256], index: 16, kind: input, shape index: {}]
  %s17 = inlined_call_operand.vmem [shape: f32[1,256], index: 17, kind: input, shape index: {}]
  %s18 = inlined_call_operand.hbm [shape: bf16[512,256], index: 18, kind: input, shape index: {}]
  %s19 = inlined_call_operand.vmem [shape: f32[1,256], index: 19, kind: input, shape index: {}]
  %s20 = inlined_call_operand.hbm [shape: bf16[256,256], index: 20, kind: input, shape index: {}]
  %s21 = inlined_call_operand.vmem [shape: f32[1,256], index: 21, kind: input, shape index: {}]
  %s22 = inlined_call_operand.hbm [shape: f32[4,256], index: 22, kind: output, shape index: {}]
  %s23 = sld [smem:[#allocation0]]
  $region154: #{atk_generator_pallas.1} parent=0
    _
  %s25 = ssub.s32 1, %s23
  %s26 = scalar_select 0, %s25, %s23
  $region1: #{atk_generator_pallas.1} parent=0
    #allocation2 [shape = 'u8[4096]{0}', space=vmem, size = 0x1000, scoped, tag = 'input window, operand 1, single buffered']
    #allocation3 [shape = 's32[1]{0}', space=sflag, size = 0x4, scoped, tag = 'scoped memory for atk_generator_pallas.1']
    #allocation4 [shape = 's32[1]{0}', space=sflag, size = 0x4, scoped, tag = 'scoped memory for atk_generator_pallas.1']
    #allocation5 [shape = 'u8[131072]{0}', space=vmem, size = 0x20000, scoped, tag = 'input window, operand 2, single buffered']
    #allocation6 [shape = 's32[1]{0}', space=sflag, size = 0x4, scoped, tag = 'scoped memory for atk_generator_pallas.1']
    #allocation7 [shape = 'u8[1024]{0}', space=vmem, size = 0x400, scoped, tag = 'input window, operand 3, single buffered']
    #allocation8 [shape = 'u8[16384]{0}', space=vmem, size = 0x4000, scoped, tag = 'input window, operand 5, single buffered']
    #allocation9 [shape = 's32[1]{0}', space=sflag, size = 0x4, scoped, tag = 'scoped memory for atk_generator_pallas.1']
    #allocation10 [shape = 'u8[65536]{0}', space=vmem, size = 0x10000, scoped, tag = 'input window, operand 7, single buffered']
    #allocation11 [shape = 'u8[262144]{0}', space=vmem, size = 0x40000, scoped, tag = 'input window, operand 8, single buffered']
    #allocation12 [shape = 's32[1]{0}', space=sflag, size = 0x4, scoped, tag = 'scoped memory for atk_generator_pallas.1']
    #allocation13 [shape = 'u8[2048]{0}', space=vmem, size = 0x800, scoped, tag = 'input window, operand 9, single buffered']
    #allocation14 [shape = 'u8[2048]{0}', space=vmem, size = 0x800, scoped, tag = 'input window, operand 11, single buffered']
    #allocation15 [shape = 's32[1]{0}', space=sflag, size = 0x4, scoped, tag = 'scoped memory for atk_generator_pallas.1']
    #allocation16 [shape = 'u8[262144]{0}', space=vmem, size = 0x40000, scoped, tag = 'input window, operand 12, single buffered']
    #allocation17 [shape = 'u8[2048]{0}', space=vmem, size = 0x800, scoped, tag = 'input window, operand 13, single buffered']
    #allocation18 [shape = 's32[1]{0}', space=sflag, size = 0x4, scoped, tag = 'scoped memory for atk_generator_pallas.1']
    #allocation19 [shape = 'u8[262144]{0}', space=vmem, size = 0x40000, scoped, tag = 'input window, operand 14, single buffered']
    #allocation20 [shape = 'u8[131072]{0}', space=vmem, size = 0x20000, scoped, tag = 'input window, operand 16, single buffered']
    #allocation21 [shape = 's32[1]{0}', space=sflag, size = 0x4, scoped, tag = 'scoped memory for atk_generator_pallas.1']
    #allocation22 [shape = 'u8[262144]{0}', space=vmem, size = 0x40000, scoped, tag = 'input window, operand 18, single buffered']
    #allocation23 [shape = 'u8[131072]{0}', space=vmem, size = 0x20000, scoped, tag = 'input window, operand 20, single buffered']
    #allocation24 [shape = 's32[1]{0}', space=sflag, size = 0x4, scoped, tag = 'scoped memory for atk_generator_pallas.1']
    #allocation25 [shape = 'u8[4096]{0}', space=vmem, size = 0x1000, scoped, tag = 'output window, operand 0, single buffered']
    %27 = vsyncpa [#allocation3], 0
    %28 = vsyncpa [#allocation6], 0
    %29 = vsyncpa [#allocation9], 0
    %30 = vsyncpa [#allocation12], 0
    %31 = vsyncpa [#allocation15], 0
    %32 = vsyncpa [#allocation18], 0
    %33 = vsyncpa [#allocation21], 0
    %34 = vsyncpa [#allocation24], 0
    %35 = vsyncpa [#allocation4], 0
    // Predicated region
    $region2: #{atk_generator_pallas.1} parent=1 // pred_check
      _
    $region3: #{atk_generator_pallas.1} parent=1 // pred_check_branch
      %37 = sbr.rel (0) target = $region5
    $region4: #{atk_generator_pallas.1} parent=1 // pred_region
      _
    $region5: #{atk_generator_pallas.1} parent=1 // pred_fallthru
      _
    // Predicated region
    $region6: #{atk_generator_pallas.1} parent=1 // pred_check
      _
    $region7: #{atk_generator_pallas.1} parent=1 // pred_check_branch
      %39 = sbr.rel (0) target = $region9
    $region8: #{atk_generator_pallas.1} parent=1 // pred_region
      %s41 = ssub.s32 128, 128
      %42 = vsyncadd [#allocation3], %s41
      %s44 = sshll.u32 [#allocation2], 4
      %s45 = int_to_ptr.vmem [resolvable:$true] %s44
      %47 = dma.hbm_to_vmem [thread:$0]  %s1, 128, %s45, [#allocation3]
    $region9: #{atk_generator_pallas.1} parent=1 // pred_fallthru
      _
    // Predicated region
    $region10: #{atk_generator_pallas.1} parent=1 // pred_check
      _
    $region11: #{atk_generator_pallas.1} parent=1 // pred_check_branch
      %49 = sbr.rel (0) target = $region13
    $region12: #{atk_generator_pallas.1} parent=1 // pred_region
      %s51 = ssub.s32 4096, 4096
      %52 = vsyncadd [#allocation6], %s51
      %s53 = sshll.u32 [#allocation5], 4
      %s54 = int_to_ptr.vmem [resolvable:$true] %s53
      %59 = dma.hbm_to_vmem [thread:$0]  %s2, 4096, %s54, [#allocation6], 128, 128, 8
    $region13: #{atk_generator_pallas.1} parent=1 // pred_fallthru
      _
    // Predicated region
    $region14: #{atk_generator_pallas.1} parent=1 // pred_check
      _
    $region15: #{atk_generator_pallas.1} parent=1 // pred_check_branch
      %61 = sbr.rel (0) target = $region17
    $region16: #{atk_generator_pallas.1} parent=1 // pred_region
      %s63 = ssub.s32 32, 32
      %64 = vsyncadd [#allocation6], %s63
      %s66 = sshll.u32 [#allocation7], 4
      %s67 = int_to_ptr.vmem [resolvable:$true] %s66
      %69 = dma.hbm_to_vmem [thread:$0]  %s3, 32, %s67, [#allocation6]
    $region17: #{atk_generator_pallas.1} parent=1 // pred_fallthru
      _
    // Predicated region
    $region18: #{atk_generator_pallas.1} parent=1 // pred_check
      _
    $region19: #{atk_generator_pallas.1} parent=1 // pred_check_branch
      %71 = sbr.rel (0) target = $region21
    $region20: #{atk_generator_pallas.1} parent=1 // pred_region
      _
    $region21: #{atk_generator_pallas.1} parent=1 // pred_fallthru
      _
    // Predicated region
    $region22: #{atk_generator_pallas.1} parent=1 // pred_check
      _
    $region23: #{atk_generator_pallas.1} parent=1 // pred_check_branch
      %73 = sbr.rel (0) target = $region25
    $region24: #{atk_generator_pallas.1} parent=1 // pred_region
      %s75 = ssub.s32 512, 512
      %76 = vsyncadd [#allocation9], %s75
      %s77 = sshll.u32 [#allocation8], 4
      %s78 = int_to_ptr.vmem [resolvable:$true] %s77
      %83 = dma.hbm_to_vmem [thread:$0]  %s5, 512, %s78, [#allocation9], 256, 256, 16
    $region25: #{atk_generator_pallas.1} parent=1 // pred_fallthru
      _
    // Predicated region
    $region26: #{atk_generator_pallas.1} parent=1 // pred_check
      _
    $region27: #{atk_generator_pallas.1} parent=1 // pred_check_branch
      %85 = sbr.rel (0) target = $region29
    $region28: #{atk_generator_pallas.1} parent=1 // pred_region
      _
    $region29: #{atk_generator_pallas.1} parent=1 // pred_fallthru
      _
    // Predicated region
    $region30: #{atk_generator_pallas.1} parent=1 // pred_check
      _
    $region31: #{atk_generator_pallas.1} parent=1 // pred_check_branch
      %87 = sbr.rel (0) target = $region33
    $region32: #{atk_generator_pallas.1} parent=1 // pred_region
      %s89 = ssub.s32 2048, 2048
      %90 = vsyncadd [#allocation9], %s89
      %s91 = sshll.u32 [#allocation10], 4
      %s92 = int_to_ptr.vmem [resolvable:$true] %s91
      %97 = dma.hbm_to_vmem [thread:$0]  %s7, 2048, %s92, [#allocation9], 512, 512, 32
    $region33: #{atk_generator_pallas.1} parent=1 // pred_fallthru
      _
    // Predicated region
    $region34: #{atk_generator_pallas.1} parent=1 // pred_check
      _
    $region35: #{atk_generator_pallas.1} parent=1 // pred_check_branch
      %99 = sbr.rel (0) target = $region37
    $region36: #{atk_generator_pallas.1} parent=1 // pred_region
      %s101 = ssub.s32 8192, 8192
      %102 = vsyncadd [#allocation12], %s101
      %s103 = sshll.u32 [#allocation11], 4
      %s104 = int_to_ptr.vmem [resolvable:$true] %s103
      %109 = dma.hbm_to_vmem [thread:$0]  %s8, 8192, %s104, [#allocation12], 256, 256, 16
    $region37: #{atk_generator_pallas.1} parent=1 // pred_fallthru
      _
    // Predicated region
    $region38: #{atk_generator_pallas.1} parent=1 // pred_check
      _
    $region39: #{atk_generator_pallas.1} parent=1 // pred_check_branch
      %111 = sbr.rel (0) target = $region41
    $region40: #{atk_generator_pallas.1} parent=1 // pred_region
      %s113 = ssub.s32 64, 64
      %114 = vsyncadd [#allocation12], %s113
      %s116 = sshll.u32 [#allocation13], 4
      %s117 = int_to_ptr.vmem [resolvable:$true] %s116
      %119 = dma.hbm_to_vmem [thread:$0]  %s9, 64, %s117, [#allocation12]
    $region41: #{atk_generator_pallas.1} parent=1 // pred_fallthru
      _
    // Predicated region
    $region42: #{atk_generator_pallas.1} parent=1 // pred_check
      _
    $region43: #{atk_generator_pallas.1} parent=1 // pred_check_branch
      %121 = sbr.rel (0) target = $region45
    $region44: #{atk_generator_pallas.1} parent=1 // pred_region
      _
    $region45: #{atk_generator_pallas.1} parent=1 // pred_fallthru
      _
    // Predicated region
    $region46: #{atk_generator_pallas.1} parent=1 // pred_check
      _
    $region47: #{atk_generator_pallas.1} parent=1 // pred_check_branch
      %123 = sbr.rel (0) target = $region49
    $region48: #{atk_generator_pallas.1} parent=1 // pred_region
      %s125 = ssub.s32 64, 64
      %126 = vsyncadd [#allocation15], %s125
      %s128 = sshll.u32 [#allocation14], 4
      %s129 = int_to_ptr.vmem [resolvable:$true] %s128
      %131 = dma.hbm_to_vmem [thread:$0]  %s11, 64, %s129, [#allocation15]
    $region49: #{atk_generator_pallas.1} parent=1 // pred_fallthru
      _
    // Predicated region
    $region50: #{atk_generator_pallas.1} parent=1 // pred_check
      _
    $region51: #{atk_generator_pallas.1} parent=1 // pred_check_branch
      %133 = sbr.rel (0) target = $region53
    $region52: #{atk_generator_pallas.1} parent=1 // pred_region
      %s135 = ssub.s32 8192, 8192
      %136 = vsyncadd [#allocation15], %s135
      %s137 = sshll.u32 [#allocation16], 4
      %s138 = int_to_ptr.vmem [resolvable:$true] %s137
      %143 = dma.hbm_to_vmem [thread:$0]  %s12, 8192, %s138, [#allocation15], 256, 256, 16
    $region53: #{atk_generator_pallas.1} parent=1 // pred_fallthru
      _
    // Predicated region
    $region54: #{atk_generator_pallas.1} parent=1 // pred_check
      _
    $region55: #{atk_generator_pallas.1} parent=1 // pred_check_branch
      %145 = sbr.rel (0) target = $region57
    $region56: #{atk_generator_pallas.1} parent=1 // pred_region
      %s147 = ssub.s32 64, 64
      %148 = vsyncadd [#allocation18], %s147
      %s150 = sshll.u32 [#allocation17], 4
      %s151 = int_to_ptr.vmem [resolvable:$true] %s150
      %153 = dma.hbm_to_vmem [thread:$0]  %s13, 64, %s151, [#allocation18]
    $region57: #{atk_generator_pallas.1} parent=1 // pred_fallthru
      _
    // Predicated region
    $region58: #{atk_generator_pallas.1} parent=1 // pred_check
      _
    $region59: #{atk_generator_pallas.1} parent=1 // pred_check_branch
      %155 = sbr.rel (0) target = $region61
    $region60: #{atk_generator_pallas.1} parent=1 // pred_region
      %s157 = ssub.s32 8192, 8192
      %158 = vsyncadd [#allocation18], %s157
      %s159 = sshll.u32 [#allocation19], 4
      %s160 = int_to_ptr.vmem [resolvable:$true] %s159
      %165 = dma.hbm_to_vmem [thread:$0]  %s14, 8192, %s160, [#allocation18], 128, 128, 8
    $region61: #{atk_generator_pallas.1} parent=1 // pred_fallthru
      _
    // Predicated region
    $region62: #{atk_generator_pallas.1} parent=1 // pred_check
      _
    $region63: #{atk_generator_pallas.1} parent=1 // pred_check_branch
      %167 = sbr.rel (0) target = $region65
    $region64: #{atk_generator_pallas.1} parent=1 // pred_region
      _
    $region65: #{atk_generator_pallas.1} parent=1 // pred_fallthru
      _
    // Predicated region
    $region66: #{atk_generator_pallas.1} parent=1 // pred_check
      _
    $region67: #{atk_generator_pallas.1} parent=1 // pred_check_branch
      %169 = sbr.rel (0) target = $region69
    $region68: #{atk_generator_pallas.1} parent=1 // pred_region
      %s171 = ssub.s32 4096, 4096
      %172 = vsyncadd [#allocation21], %s171
      %s173 = sshll.u32 [#allocation20], 4
      %s174 = int_to_ptr.vmem [resolvable:$true] %s173
      %179 = dma.hbm_to_vmem [thread:$0]  %s16, 4096, %s174, [#allocation21], 128, 128, 8
    $region69: #{atk_generator_pallas.1} parent=1 // pred_fallthru
      _
    // Predicated region
    $region70: #{atk_generator_pallas.1} parent=1 // pred_check
      _
    $region71: #{atk_generator_pallas.1} parent=1 // pred_check_branch
      %181 = sbr.rel (0) target = $region73
    $region72: #{atk_generator_pallas.1} parent=1 // pred_region
      _
    $region73: #{atk_generator_pallas.1} parent=1 // pred_fallthru
      _
    // Predicated region
    $region74: #{atk_generator_pallas.1} parent=1 // pred_check
      _
    $region75: #{atk_generator_pallas.1} parent=1 // pred_check_branch
      %183 = sbr.rel (0) target = $region77
    $region76: #{atk_generator_pallas.1} parent=1 // pred_region
      %s185 = ssub.s32 8192, 8192
      %186 = vsyncadd [#allocation21], %s185
      %s187 = sshll.u32 [#allocation22], 4
      %s188 = int_to_ptr.vmem [resolvable:$true] %s187
      %193 = dma.hbm_to_vmem [thread:$0]  %s18, 8192, %s188, [#allocation21], 128, 128, 8
    $region77: #{atk_generator_pallas.1} parent=1 // pred_fallthru
      _
    // Predicated region
    $region78: #{atk_generator_pallas.1} parent=1 // pred_check
      _
    $region79: #{atk_generator_pallas.1} parent=1 // pred_check_branch
      %195 = sbr.rel (0) target = $region81
    $region80: #{atk_generator_pallas.1} parent=1 // pred_region
      _
    $region81: #{atk_generator_pallas.1} parent=1 // pred_fallthru
      _
    // Predicated region
    $region82: #{atk_generator_pallas.1} parent=1 // pred_check
      _
    $region83: #{atk_generator_pallas.1} parent=1 // pred_check_branch
      %197 = sbr.rel (0) target = $region85
    $region84: #{atk_generator_pallas.1} parent=1 // pred_region
      %s199 = ssub.s32 4096, 4096
      %200 = vsyncadd [#allocation24], %s199
      %s201 = sshll.u32 [#allocation23], 4
      %s202 = int_to_ptr.vmem [resolvable:$true] %s201
      %207 = dma.hbm_to_vmem [thread:$0]  %s20, 4096, %s202, [#allocation24], 128, 128, 8
    $region85: #{atk_generator_pallas.1} parent=1 // pred_fallthru
      _
    // Predicated region
    $region86: #{atk_generator_pallas.1} parent=1 // pred_check
      _
    $region87: #{atk_generator_pallas.1} parent=1 // pred_check_branch
      %209 = sbr.rel (0) target = $region89
    $region88: #{atk_generator_pallas.1} parent=1 // pred_region
      _
    $region89: #{atk_generator_pallas.1} parent=1 // pred_fallthru
      _
    // Predicated region
    $region90: #{atk_generator_pallas.1} parent=1 // pred_check
      _
    $region91: #{atk_generator_pallas.1} parent=1 // pred_check_branch
      %211 = sbr.rel (0) target = $region93
    $region92: #{atk_generator_pallas.1} parent=1 // pred_region
      %212 = dma.done [#allocation3], 128
    $region93: #{atk_generator_pallas.1} parent=1 // pred_fallthru
      _
    // Predicated region
    $region94: #{atk_generator_pallas.1} parent=1 // pred_check
      _
    $region95: #{atk_generator_pallas.1} parent=1 // pred_check_branch
      %214 = sbr.rel (0) target = $region97
    $region96: #{atk_generator_pallas.1} parent=1 // pred_region
      %215 = dma.done [#allocation6], 4096
    $region97: #{atk_generator_pallas.1} parent=1 // pred_fallthru
      _
    // Predicated region
    $region98: #{atk_generator_pallas.1} parent=1 // pred_check
      _
    $region99: #{atk_generator_pallas.1} parent=1 // pred_check_branch
      %217 = sbr.rel (0) target = $region101
    $region100: #{atk_generator_pallas.1} parent=1 // pred_region
      %218 = dma.done [#allocation6], 32
    $region101: #{atk_generator_pallas.1} parent=1 // pred_fallthru
      _
    // Predicated region
    $region102: #{atk_generator_pallas.1} parent=1 // pred_check
      _
    $region103: #{atk_generator_pallas.1} parent=1 // pred_check_branch
      %220 = sbr.rel (0) target = $region105
    $region104: #{atk_generator_pallas.1} parent=1 // pred_region
      %221 = dma.done [#allocation9], 512
    $region105: #{atk_generator_pallas.1} parent=1 // pred_fallthru
      _
    // Predicated region
    $region106: #{atk_generator_pallas.1} parent=1 // pred_check
      _
    $region107: #{atk_generator_pallas.1} parent=1 // pred_check_branch
      %223 = sbr.rel (0) target = $region109
    $region108: #{atk_generator_pallas.1} parent=1 // pred_region
      %224 = dma.done [#allocation9], 2048
    $region109: #{atk_generator_pallas.1} parent=1 // pred_fallthru
      _
    // Predicated region
    $region110: #{atk_generator_pallas.1} parent=1 // pred_check
      _
    $region111: #{atk_generator_pallas.1} parent=1 // pred_check_branch
      %226 = sbr.rel (0) target = $region113
    $region112: #{atk_generator_pallas.1} parent=1 // pred_region
      %227 = dma.done [#allocation12], 8192
    $region113: #{atk_generator_pallas.1} parent=1 // pred_fallthru
      _
    // Predicated region
    $region114: #{atk_generator_pallas.1} parent=1 // pred_check
      _
    $region115: #{atk_generator_pallas.1} parent=1 // pred_check_branch
      %229 = sbr.rel (0) target = $region117
    $region116: #{atk_generator_pallas.1} parent=1 // pred_region
      %230 = dma.done [#allocation12], 64
    $region117: #{atk_generator_pallas.1} parent=1 // pred_fallthru
      _
    // Predicated region
    $region118: #{atk_generator_pallas.1} parent=1 // pred_check
      _
    $region119: #{atk_generator_pallas.1} parent=1 // pred_check_branch
      %232 = sbr.rel (0) target = $region121
    $region120: #{atk_generator_pallas.1} parent=1 // pred_region
      %233 = dma.done [#allocation15], 64
    $region121: #{atk_generator_pallas.1} parent=1 // pred_fallthru
      _
    // Predicated region
    $region122: #{atk_generator_pallas.1} parent=1 // pred_check
      _
    $region123: #{atk_generator_pallas.1} parent=1 // pred_check_branch
      %235 = sbr.rel (0) target = $region125
    $region124: #{atk_generator_pallas.1} parent=1 // pred_region
      %236 = dma.done [#allocation15], 8192
    $region125: #{atk_generator_pallas.1} parent=1 // pred_fallthru
      _
    // Predicated region
    $region126: #{atk_generator_pallas.1} parent=1 // pred_check
      _
    $region127: #{atk_generator_pallas.1} parent=1 // pred_check_branch
      %238 = sbr.rel (0) target = $region129
    $region128: #{atk_generator_pallas.1} parent=1 // pred_region
      %239 = dma.done [#allocation18], 64
    $region129: #{atk_generator_pallas.1} parent=1 // pred_fallthru
      _
    // Predicated region
    $region130: #{atk_generator_pallas.1} parent=1 // pred_check
      _
    $region131: #{atk_generator_pallas.1} parent=1 // pred_check_branch
      %241 = sbr.rel (0) target = $region133
    $region132: #{atk_generator_pallas.1} parent=1 // pred_region
      %242 = dma.done [#allocation18], 8192
    $region133: #{atk_generator_pallas.1} parent=1 // pred_fallthru
      _
    // Predicated region
    $region134: #{atk_generator_pallas.1} parent=1 // pred_check
      _
    $region135: #{atk_generator_pallas.1} parent=1 // pred_check_branch
      %244 = sbr.rel (0) target = $region137
    $region136: #{atk_generator_pallas.1} parent=1 // pred_region
      %245 = dma.done [#allocation21], 4096
    $region137: #{atk_generator_pallas.1} parent=1 // pred_fallthru
      _
    // Predicated region
    $region138: #{atk_generator_pallas.1} parent=1 // pred_check
      _
    $region139: #{atk_generator_pallas.1} parent=1 // pred_check_branch
      %247 = sbr.rel (0) target = $region141
    $region140: #{atk_generator_pallas.1} parent=1 // pred_region
      %248 = dma.done [#allocation21], 8192
    $region141: #{atk_generator_pallas.1} parent=1 // pred_fallthru
      _
    // Predicated region
    $region142: #{atk_generator_pallas.1} parent=1 // pred_check
      _
    $region143: #{atk_generator_pallas.1} parent=1 // pred_check_branch
      %250 = sbr.rel (0) target = $region145
    $region144: #{atk_generator_pallas.1} parent=1 // pred_region
      %251 = dma.done [#allocation24], 4096
    $region145: #{atk_generator_pallas.1} parent=1 // pred_fallthru
      _
    %v252 = vld [vmem:[%s0] sm:$0xff]
    %v253 = vmul.f32 %v252, %v252
    %v255 = vcombine.high %v253, %v253
    %vm257 = vcmask 1043456
    %v258 = vsel %vm257, %v253, 0.0
    %v259 = vsel %vm257, %v255, 0.0
    %v260 = vadd.f32 %v258, %v259
    %261 = vadd.xlane.f32.xlu0 %v260
    %v262 = vpop.xlane.xlu0 %261
    %v263 = vadd.f32 %v262, 1e-12
    %v264 = vrsqrt.pop %v263
    %v267 = vunpack.c.l.s4 839922192
    %v268 = vunpack.c.0.s8 %v267
    %v269 = vlaneseq
    %v270 = vshrl.u32 %v269, 7
    %v271 = vsub.s32 %v268, %v270
    %v272 = vrot.slane %v264, %v271
    %v274 = vmul.f32 %v252, %v272
    %v275 = vld [vmem:[#allocation2] sm:$0xff]
    %v276 = vmul.f32 %v275, %v274
    %v278 = vcombine.high %v276, %v276
    %v280 = vpack.c.bf16 %v276, %v276
    %v281 = vpack.c.bf16 %v278, %v278
    %v282 = vld [vmem:[#allocation5] sm:$0xff]
    %v283 = vld [vmem:[#allocation5 + $0x8] sm:$0xff]
    %v284 = vld [vmem:[#allocation5 + $0x10] sm:$0xff]
    %v285 = vld [vmem:[#allocation5 + $0x18] sm:$0xff]
    %v286 = vld [vmem:[#allocation5 + $0x20] sm:$0xff]
    %v287 = vld [vmem:[#allocation5 + $0x28] sm:$0xff]
    %v288 = vld [vmem:[#allocation5 + $0x30] sm:$0xff]
    %v289 = vld [vmem:[#allocation5 + $0x38] sm:$0xff]
    %v290 = vld [vmem:[#allocation5 + $0x40] sm:$0xff]
    %v291 = vld [vmem:[#allocation5 + $0x48] sm:$0xff]
    %v292 = vld [vmem:[#allocation5 + $0x50] sm:$0xff]
    %v293 = vld [vmem:[#allocation5 + $0x58] sm:$0xff]
    %v294 = vld [vmem:[#allocation5 + $0x60] sm:$0xff]
    %v295 = vld [vmem:[#allocation5 + $0x68] sm:$0xff]
    %v296 = vld [vmem:[#allocation5 + $0x70] sm:$0xff]
    %v297 = vld [vmem:[#allocation5 + $0x78] sm:$0xff]
    %v298 = vld [vmem:[#allocation5 + $0x80] sm:$0xff]
    %v299 = vld [vmem:[#allocation5 + $0x88] sm:$0xff]
    %v300 = vld [vmem:[#allocation5 + $0x90] sm:$0xff]
    %v301 = vld [vmem:[#allocation5 + $0x98] sm:$0xff]
    %v302 = vld [vmem:[#allocation5 + $0xa0] sm:$0xff]
    %v303 = vld [vmem:[#allocation5 + $0xa8] sm:$0xff]
    %v304 = vld [vmem:[#allocation5 + $0xb0] sm:$0xff]
    %v305 = vld [vmem:[#allocation5 + $0xb8] sm:$0xff]
    %v306 = vld [vmem:[#allocation5 + $0xc0] sm:$0xff]
    %v307 = vld [vmem:[#allocation5 + $0xc8] sm:$0xff]
    %v308 = vld [vmem:[#allocation5 + $0xd0] sm:$0xff]
    %v309 = vld [vmem:[#allocation5 + $0xd8] sm:$0xff]
    %v310 = vld [vmem:[#allocation5 + $0xe0] sm:$0xff]
    %v311 = vld [vmem:[#allocation5 + $0xe8] sm:$0xff]
    %v312 = vld [vmem:[#allocation5 + $0xf0] sm:$0xff]
    %v313 = vld [vmem:[#allocation5 + $0xf8] sm:$0xff]
    %v314 = vld [vmem:[#allocation7] sm:$0x3]
    %v316 = vlaneseq
    %v317 = vshrl.u32 %v316, 7
    %v318 = vsub.s32 0, %v317
    %v319 = vrot.slane %v314, %v318
    %v320 = vlaneseq
    %v321 = vshrl.u32 %v320, 7
    %v322 = vsub.s32 1, %v321
    %v323 = vrot.slane %v314, %v322
    %v358 = vunpack.c.l.b16 %v282
    %v359 = vunpack.c.h.b16 %v282
    %v360 = vunpack.c.l.b16 %v283
    %v361 = vunpack.c.h.b16 %v283
    %v362 = vunpack.c.l.b16 %v284
    %v363 = vunpack.c.h.b16 %v284
    %v364 = vunpack.c.l.b16 %v285
    %v365 = vunpack.c.h.b16 %v285
    %v366 = vunpack.c.l.b16 %v286
    %v367 = vunpack.c.h.b16 %v286
    %v368 = vunpack.c.l.b16 %v287
    %v369 = vunpack.c.h.b16 %v287
    %v370 = vunpack.c.l.b16 %v288
    %v371 = vunpack.c.h.b16 %v288
    %v372 = vunpack.c.l.b16 %v289
    %v373 = vunpack.c.h.b16 %v289
    %v374 = vunpack.c.l.b16 %v290
    %v375 = vunpack.c.h.b16 %v290
    %v376 = vunpack.c.l.b16 %v291
    %v377 = vunpack.c.h.b16 %v291
    %v378 = vunpack.c.l.b16 %v292
    %v379 = vunpack.c.h.b16 %v292
    %v380 = vunpack.c.l.b16 %v293
    %v381 = vunpack.c.h.b16 %v293
    %v382 = vunpack.c.l.b16 %v294
    %v383 = vunpack.c.h.b16 %v294
    %v384 = vunpack.c.l.b16 %v295
    %v385 = vunpack.c.h.b16 %v295
    %v386 = vunpack.c.l.b16 %v296
    %v387 = vunpack.c.h.b16 %v296
    %v388 = vunpack.c.l.b16 %v297
    %v389 = vunpack.c.h.b16 %v297
    %v390 = vunpack.c.l.b16 %v298
    %v391 = vunpack.c.h.b16 %v298
    %v392 = vunpack.c.l.b16 %v299
    %v393 = vunpack.c.h.b16 %v299
    %v394 = vunpack.c.l.b16 %v300
    %v395 = vunpack.c.h.b16 %v300
    %v396 = vunpack.c.l.b16 %v301
    %v397 = vunpack.c.h.b16 %v301
    %v398 = vunpack.c.l.b16 %v302
    %v399 = vunpack.c.h.b16 %v302
    %v400 = vunpack.c.l.b16 %v303
    %v401 = vunpack.c.h.b16 %v303
    %v402 = vunpack.c.l.b16 %v304
    %v403 = vunpack.c.h.b16 %v304
    %v404 = vunpack.c.l.b16 %v305
    %v405 = vunpack.c.h.b16 %v305
    %v406 = vunpack.c.l.b16 %v306
    %v407 = vunpack.c.h.b16 %v306
    %v408 = vunpack.c.l.b16 %v307
    %v409 = vunpack.c.h.b16 %v307
    %v410 = vunpack.c.l.b16 %v308
    %v411 = vunpack.c.h.b16 %v308
    %v412 = vunpack.c.l.b16 %v309
    %v413 = vunpack.c.h.b16 %v309
    %v414 = vunpack.c.l.b16 %v310
    %v415 = vunpack.c.h.b16 %v310
    %v416 = vunpack.c.l.b16 %v311
    %v417 = vunpack.c.h.b16 %v311
    %v418 = vunpack.c.l.b16 %v312
    %v419 = vunpack.c.h.b16 %v312
    %v420 = vunpack.c.l.b16 %v313
    %v421 = vunpack.c.h.b16 %v313
    %v422 = vpack.c.b16 %v360, %v358
    %v423 = vpack.c.b16 %v361, %v359
    %v424 = vpack.c.b16 %v364, %v362
    %v425 = vpack.c.b16 %v365, %v363
    %v426 = vpack.c.b16 %v368, %v366
    %v427 = vpack.c.b16 %v369, %v367
    %v428 = vpack.c.b16 %v372, %v370
    %v429 = vpack.c.b16 %v373, %v371
    %v430 = vpack.c.b16 %v376, %v374
    %v431 = vpack.c.b16 %v377, %v375
    %v432 = vpack.c.b16 %v380, %v378
    %v433 = vpack.c.b16 %v381, %v379
    %v434 = vpack.c.b16 %v384, %v382
    %v435 = vpack.c.b16 %v385, %v383
    %v436 = vpack.c.b16 %v388, %v386
    %v437 = vpack.c.b16 %v389, %v387
    %v438 = vpack.c.b16 %v392, %v390
    %v439 = vpack.c.b16 %v393, %v391
    %v440 = vpack.c.b16 %v396, %v394
    %v441 = vpack.c.b16 %v397, %v395
    %v442 = vpack.c.b16 %v400, %v398
    %v443 = vpack.c.b16 %v401, %v399
    %v444 = vpack.c.b16 %v404, %v402
    %v445 = vpack.c.b16 %v405, %v403
    %v446 = vpack.c.b16 %v408, %v406
    %v447 = vpack.c.b16 %v409, %v407
    %v448 = vpack.c.b16 %v412, %v410
    %v449 = vpack.c.b16 %v413, %v411
    %v450 = vpack.c.b16 %v416, %v414
    %v451 = vpack.c.b16 %v417, %v415
    %v452 = vpack.c.b16 %v420, %v418
    %v453 = vpack.c.b16 %v421, %v419
    %486 = vmatprep.subr.bf16.mxu0 %v423
    %487 = vmatpush1.bf16.msra.mxu0 %v422
    %488 = vmatprep.subr.bf16.mxu0 %v425
    %489 = vmatpush1.bf16.msra.mxu0 %v424
    %490 = vmatprep.subr.bf16.mxu0 %v427
    %491 = vmatpush1.bf16.msra.mxu0 %v426
    %492 = vmatprep.subr.bf16.mxu0 %v429
    %493 = vmatpush1.bf16.msra.mxu0 %v428
    %494 = vmatprep.subr.bf16.mxu0 %v431
    %495 = vmatpush1.bf16.msra.mxu0 %v430
    %496 = vmatprep.subr.bf16.mxu0 %v433
    %497 = vmatpush1.bf16.msra.mxu0 %v432
    %498 = vmatprep.subr.bf16.mxu0 %v435
    %499 = vmatpush1.bf16.msra.mxu0 %v434
    %500 = vmatprep.subr.bf16.mxu0 %v437
    %501 = vmatpush1.bf16.msra.mxu0 %v436
    %502 = vmatprep.subr.bf16.mxu0 %v439
    %503 = vmatpush1.bf16.msra.mxu0 %v438
    %504 = vmatprep.subr.bf16.mxu0 %v441
    %505 = vmatpush1.bf16.msra.mxu0 %v440
    %506 = vmatprep.subr.bf16.mxu0 %v443
    %507 = vmatpush1.bf16.msra.mxu0 %v442
    %508 = vmatprep.subr.bf16.mxu0 %v445
    %509 = vmatpush1.bf16.msra.mxu0 %v444
    %510 = vmatprep.subr.bf16.mxu0 %v447
    %511 = vmatpush1.bf16.msra.mxu0 %v446
    %512 = vmatprep.subr.bf16.mxu0 %v449
    %513 = vmatpush1.bf16.msra.mxu0 %v448
    %514 = vmatprep.subr.bf16.mxu0 %v451
    %515 = vmatpush1.bf16.msra.mxu0 %v450
    %516 = vmatprep.subr.bf16.mxu0 %v453
    %517 = vmatpush1.bf16.msra.mxu0 %v452
    %518 = vmatprep.mubr.bf16.mxu0 %v281
    %519 = vmatmul.mubr.bf16.gmra.mrb[0].mxu0 %v280
    %v520 = vpop.f32.mrb[0].mxu0
    %v521 = vadd.f32 %v319, %v520
    %v522 = vpop.f32.mrb[0].mxu0
    %v523 = vadd.f32 %v323, %v522
    %v524 = vpop.f32.mrb[0].mxu0
    %v525 = vpop.f32.mrb[0].mxu0
    %526 = vdwg.mxu0
    %v527 = vpack.c.bf16 %v521, %v521
    %v528 = vpack.c.bf16 %v523, %v523
    %v529 = vld [vmem:[#allocation16] sm:$0xff]
    %v530 = vld [vmem:[#allocation16 + $0x8] sm:$0xff]
    %v531 = vld [vmem:[#allocation16 + $0x10] sm:$0xff]
    %v532 = vld [vmem:[#allocation16 + $0x18] sm:$0xff]
    %v533 = vld [vmem:[#allocation16 + $0x20] sm:$0xff]
    %v534 = vld [vmem:[#allocation16 + $0x28] sm:$0xff]
    %v535 = vld [vmem:[#allocation16 + $0x30] sm:$0xff]
    %v536 = vld [vmem:[#allocation16 + $0x38] sm:$0xff]
    %v537 = vld [vmem:[#allocation16 + $0x40] sm:$0xff]
    %v538 = vld [vmem:[#allocation16 + $0x48] sm:$0xff]
    %v539 = vld [vmem:[#allocation16 + $0x50] sm:$0xff]
    %v540 = vld [vmem:[#allocation16 + $0x58] sm:$0xff]
    %v541 = vld [vmem:[#allocation16 + $0x60] sm:$0xff]
    %v542 = vld [vmem:[#allocation16 + $0x68] sm:$0xff]
    %v543 = vld [vmem:[#allocation16 + $0x70] sm:$0xff]
    %v544 = vld [vmem:[#allocation16 + $0x78] sm:$0xff]
    %v545 = vld [vmem:[#allocation16 + $0x80] sm:$0xff]
    %v546 = vld [vmem:[#allocation16 + $0x88] sm:$0xff]
    %v547 = vld [vmem:[#allocation16 + $0x90] sm:$0xff]
    %v548 = vld [vmem:[#allocation16 + $0x98] sm:$0xff]
    %v549 = vld [vmem:[#allocation16 + $0xa0] sm:$0xff]
    %v550 = vld [vmem:[#allocation16 + $0xa8] sm:$0xff]
    %v551 = vld [vmem:[#allocation16 + $0xb0] sm:$0xff]
    %v552 = vld [vmem:[#allocation16 + $0xb8] sm:$0xff]
    %v553 = vld [vmem:[#allocation16 + $0xc0] sm:$0xff]
    %v554 = vld [vmem:[#allocation16 + $0xc8] sm:$0xff]
    %v555 = vld [vmem:[#allocation16 + $0xd0] sm:$0xff]
    %v556 = vld [vmem:[#allocation16 + $0xd8] sm:$0xff]
    %v557 = vld [vmem:[#allocation16 + $0xe0] sm:$0xff]
    %v558 = vld [vmem:[#allocation16 + $0xe8] sm:$0xff]
    %v559 = vld [vmem:[#allocation16 + $0xf0] sm:$0xff]
    %v560 = vld [vmem:[#allocation16 + $0xf8] sm:$0xff]
    %v561 = vld [vmem:[#allocation16 + $0x100] sm:$0xff]
    %v562 = vld [vmem:[#allocation16 + $0x108] sm:$0xff]
    %v563 = vld [vmem:[#allocation16 + $0x110] sm:$0xff]
    %v564 = vld [vmem:[#allocation16 + $0x118] sm:$0xff]
    %v565 = vld [vmem:[#allocation16 + $0x120] sm:$0xff]
    %v566 = vld [vmem:[#allocation16 + $0x128] sm:$0xff]
    %v567 = vld [vmem:[#allocation16 + $0x130] sm:$0xff]
    %v568 = vld [vmem:[#allocation16 + $0x138] sm:$0xff]
    %v569 = vld [vmem:[#allocation16 + $0x140] sm:$0xff]
    %v570 = vld [vmem:[#allocation16 + $0x148] sm:$0xff]
    %v571 = vld [vmem:[#allocation16 + $0x150] sm:$0xff]
    %v572 = vld [vmem:[#allocation16 + $0x158] sm:$0xff]
    %v573 = vld [vmem:[#allocation16 + $0x160] sm:$0xff]
    %v574 = vld [vmem:[#allocation16 + $0x168] sm:$0xff]
    %v575 = vld [vmem:[#allocation16 + $0x170] sm:$0xff]
    %v576 = vld [vmem:[#allocation16 + $0x178] sm:$0xff]
    %v577 = vld [vmem:[#allocation16 + $0x180] sm:$0xff]
    %v578 = vld [vmem:[#allocation16 + $0x188] sm:$0xff]
    %v579 = vld [vmem:[#allocation16 + $0x190] sm:$0xff]
    %v580 = vld [vmem:[#allocation16 + $0x198] sm:$0xff]
    %v581 = vld [vmem:[#allocation16 + $0x1a0] sm:$0xff]
    %v582 = vld [vmem:[#allocation16 + $0x1a8] sm:$0xff]
    %v583 = vld [vmem:[#allocation16 + $0x1b0] sm:$0xff]
    %v584 = vld [vmem:[#allocation16 + $0x1b8] sm:$0xff]
    %v585 = vld [vmem:[#allocation16 + $0x1c0] sm:$0xff]
    %v586 = vld [vmem:[#allocation16 + $0x1c8] sm:$0xff]
    %v587 = vld [vmem:[#allocation16 + $0x1d0] sm:$0xff]
    %v588 = vld [vmem:[#allocation16 + $0x1d8] sm:$0xff]
    %v589 = vld [vmem:[#allocation16 + $0x1e0] sm:$0xff]
    %v590 = vld [vmem:[#allocation16 + $0x1e8] sm:$0xff]
    %v591 = vld [vmem:[#allocation16 + $0x1f0] sm:$0xff]
    %v592 = vld [vmem:[#allocation16 + $0x1f8] sm:$0xff]
    %v593 = vld [vmem:[#allocation17] sm:$0xf]
    %v595 = vlaneseq
    %v596 = vshrl.u32 %v595, 7
    %v597 = vsub.s32 0, %v596
    %v598 = vrot.slane %v593, %v597
    %v599 = vlaneseq
    %v600 = vshrl.u32 %v599, 7
    %v601 = vsub.s32 1, %v600
    %v602 = vrot.slane %v593, %v601
    %v603 = vlaneseq
    %v604 = vshrl.u32 %v603, 7
    %v605 = vsub.s32 2, %v604
    %v606 = vrot.slane %v593, %v605
    %v607 = vlaneseq
    %v608 = vshrl.u32 %v607, 7
    %v609 = vsub.s32 3, %v608
    %v610 = vrot.slane %v593, %v609
    %v679 = vunpack.c.l.b16 %v529
    %v680 = vunpack.c.h.b16 %v529
    %v681 = vunpack.c.l.b16 %v530
    %v682 = vunpack.c.h.b16 %v530
    %v683 = vunpack.c.l.b16 %v531
    %v684 = vunpack.c.h.b16 %v531
    %v685 = vunpack.c.l.b16 %v532
    %v686 = vunpack.c.h.b16 %v532
    %v687 = vunpack.c.l.b16 %v533
    %v688 = vunpack.c.h.b16 %v533
    %v689 = vunpack.c.l.b16 %v534
    %v690 = vunpack.c.h.b16 %v534
    %v691 = vunpack.c.l.b16 %v535
    %v692 = vunpack.c.h.b16 %v535
    %v693 = vunpack.c.l.b16 %v536
    %v694 = vunpack.c.h.b16 %v536
    %v695 = vunpack.c.l.b16 %v537
    %v696 = vunpack.c.h.b16 %v537
    %v697 = vunpack.c.l.b16 %v538
    %v698 = vunpack.c.h.b16 %v538
    %v699 = vunpack.c.l.b16 %v539
    %v700 = vunpack.c.h.b16 %v539
    %v701 = vunpack.c.l.b16 %v540
    %v702 = vunpack.c.h.b16 %v540
    %v703 = vunpack.c.l.b16 %v541
    %v704 = vunpack.c.h.b16 %v541
    %v705 = vunpack.c.l.b16 %v542
    %v706 = vunpack.c.h.b16 %v542
    %v707 = vunpack.c.l.b16 %v543
    %v708 = vunpack.c.h.b16 %v543
    %v709 = vunpack.c.l.b16 %v544
    %v710 = vunpack.c.h.b16 %v544
    %v711 = vunpack.c.l.b16 %v545
    %v712 = vunpack.c.h.b16 %v545
    %v713 = vunpack.c.l.b16 %v546
    %v714 = vunpack.c.h.b16 %v546
    %v715 = vunpack.c.l.b16 %v547
    %v716 = vunpack.c.h.b16 %v547
    %v717 = vunpack.c.l.b16 %v548
    %v718 = vunpack.c.h.b16 %v548
    %v719 = vunpack.c.l.b16 %v549
    %v720 = vunpack.c.h.b16 %v549
    %v721 = vunpack.c.l.b16 %v550
    %v722 = vunpack.c.h.b16 %v550
    %v723 = vunpack.c.l.b16 %v551
    %v724 = vunpack.c.h.b16 %v551
    %v725 = vunpack.c.l.b16 %v552
    %v726 = vunpack.c.h.b16 %v552
    %v727 = vunpack.c.l.b16 %v553
    %v728 = vunpack.c.h.b16 %v553
    %v729 = vunpack.c.l.b16 %v554
    %v730 = vunpack.c.h.b16 %v554
    %v731 = vunpack.c.l.b16 %v555
    %v732 = vunpack.c.h.b16 %v555
    %v733 = vunpack.c.l.b16 %v556
    %v734 = vunpack.c.h.b16 %v556
    %v735 = vunpack.c.l.b16 %v557
    %v736 = vunpack.c.h.b16 %v557
    %v737 = vunpack.c.l.b16 %v558
    %v738 = vunpack.c.h.b16 %v558
    %v739 = vunpack.c.l.b16 %v559
    %v740 = vunpack.c.h.b16 %v559
    %v741 = vunpack.c.l.b16 %v560
    %v742 = vunpack.c.h.b16 %v560
    %v743 = vunpack.c.l.b16 %v561
    %v744 = vunpack.c.h.b16 %v561
    %v745 = vunpack.c.l.b16 %v562
    %v746 = vunpack.c.h.b16 %v562
    %v747 = vunpack.c.l.b16 %v563
    %v748 = vunpack.c.h.b16 %v563
    %v749 = vunpack.c.l.b16 %v564
    %v750 = vunpack.c.h.b16 %v564
    %v751 = vunpack.c.l.b16 %v565
    %v752 = vunpack.c.h.b16 %v565
    %v753 = vunpack.c.l.b16 %v566
    %v754 = vunpack.c.h.b16 %v566
    %v755 = vunpack.c.l.b16 %v567
    %v756 = vunpack.c.h.b16 %v567
    %v757 = vunpack.c.l.b16 %v568
    %v758 = vunpack.c.h.b16 %v568
    %v759 = vunpack.c.l.b16 %v569
    %v760 = vunpack.c.h.b16 %v569
    %v761 = vunpack.c.l.b16 %v570
    %v762 = vunpack.c.h.b16 %v570
    %v763 = vunpack.c.l.b16 %v571
    %v764 = vunpack.c.h.b16 %v571
    %v765 = vunpack.c.l.b16 %v572
    %v766 = vunpack.c.h.b16 %v572
    %v767 = vunpack.c.l.b16 %v573
    %v768 = vunpack.c.h.b16 %v573
    %v769 = vunpack.c.l.b16 %v574
    %v770 = vunpack.c.h.b16 %v574
    %v771 = vunpack.c.l.b16 %v575
    %v772 = vunpack.c.h.b16 %v575
    %v773 = vunpack.c.l.b16 %v576
    %v774 = vunpack.c.h.b16 %v576
    %v775 = vunpack.c.l.b16 %v577
    %v776 = vunpack.c.h.b16 %v577
    %v777 = vunpack.c.l.b16 %v578
    %v778 = vunpack.c.h.b16 %v578
    %v779 = vunpack.c.l.b16 %v579
    %v780 = vunpack.c.h.b16 %v579
    %v781 = vunpack.c.l.b16 %v580
    %v782 = vunpack.c.h.b16 %v580
    %v783 = vunpack.c.l.b16 %v581
    %v784 = vunpack.c.h.b16 %v581
    %v785 = vunpack.c.l.b16 %v582
    %v786 = vunpack.c.h.b16 %v582
    %v787 = vunpack.c.l.b16 %v583
    %v788 = vunpack.c.h.b16 %v583
    %v789 = vunpack.c.l.b16 %v584
    %v790 = vunpack.c.h.b16 %v584
    %v791 = vunpack.c.l.b16 %v585
    %v792 = vunpack.c.h.b16 %v585
    %v793 = vunpack.c.l.b16 %v586
    %v794 = vunpack.c.h.b16 %v586
    %v795 = vunpack.c.l.b16 %v587
    %v796 = vunpack.c.h.b16 %v587
    %v797 = vunpack.c.l.b16 %v588
    %v798 = vunpack.c.h.b16 %v588
    %v799 = vunpack.c.l.b16 %v589
    %v800 = vunpack.c.h.b16 %v589
    %v801 = vunpack.c.l.b16 %v590
    %v802 = vunpack.c.h.b16 %v590
    %v803 = vunpack.c.l.b16 %v591
    %v804 = vunpack.c.h.b16 %v591
    %v805 = vunpack.c.l.b16 %v592
    %v806 = vunpack.c.h.b16 %v592
    %v807 = vpack.c.b16 %v683, %v679
    %v808 = vpack.c.b16 %v684, %v680
    %v809 = vpack.c.b16 %v685, %v681
    %v810 = vpack.c.b16 %v686, %v682
    %v811 = vpack.c.b16 %v691, %v687
    %v812 = vpack.c.b16 %v692, %v688
    %v813 = vpack.c.b16 %v693, %v689
    %v814 = vpack.c.b16 %v694, %v690
    %v815 = vpack.c.b16 %v699, %v695
    %v816 = vpack.c.b16 %v700, %v696
    %v817 = vpack.c.b16 %v701, %v697
    %v818 = vpack.c.b16 %v702, %v698
    %v819 = vpack.c.b16 %v707, %v703
    %v820 = vpack.c.b16 %v708, %v704
    %v821 = vpack.c.b16 %v709, %v705
    %v822 = vpack.c.b16 %v710, %v706
    %v823 = vpack.c.b16 %v715, %v711
    %v824 = vpack.c.b16 %v716, %v712
    %v825 = vpack.c.b16 %v717, %v713
    %v826 = vpack.c.b16 %v718, %v714
    %v827 = vpack.c.b16 %v723, %v719
    %v828 = vpack.c.b16 %v724, %v720
    %v829 = vpack.c.b16 %v725, %v721
    %v830 = vpack.c.b16 %v726, %v722
    %v831 = vpack.c.b16 %v731, %v727
    %v832 = vpack.c.b16 %v732, %v728
    %v833 = vpack.c.b16 %v733, %v729
    %v834 = vpack.c.b16 %v734, %v730
    %v835 = vpack.c.b16 %v739, %v735
    %v836 = vpack.c.b16 %v740, %v736
    %v837 = vpack.c.b16 %v741, %v737
    %v838 = vpack.c.b16 %v742, %v738
    %v839 = vpack.c.b16 %v747, %v743
    %v840 = vpack.c.b16 %v748, %v744
    %v841 = vpack.c.b16 %v749, %v745
    %v842 = vpack.c.b16 %v750, %v746
    %v843 = vpack.c.b16 %v755, %v751
    %v844 = vpack.c.b16 %v756, %v752
    %v845 = vpack.c.b16 %v757, %v753
    %v846 = vpack.c.b16 %v758, %v754
    %v847 = vpack.c.b16 %v763, %v759
    %v848 = vpack.c.b16 %v764, %v760
    %v849 = vpack.c.b16 %v765, %v761
    %v850 = vpack.c.b16 %v766, %v762
    %v851 = vpack.c.b16 %v771, %v767
    %v852 = vpack.c.b16 %v772, %v768
    %v853 = vpack.c.b16 %v773, %v769
    %v854 = vpack.c.b16 %v774, %v770
    %v855 = vpack.c.b16 %v779, %v775
    %v856 = vpack.c.b16 %v780, %v776
    %v857 = vpack.c.b16 %v781, %v777
    %v858 = vpack.c.b16 %v782, %v778
    %v859 = vpack.c.b16 %v787, %v783
    %v860 = vpack.c.b16 %v788, %v784
    %v861 = vpack.c.b16 %v789, %v785
    %v862 = vpack.c.b16 %v790, %v786
    %v863 = vpack.c.b16 %v795, %v791
    %v864 = vpack.c.b16 %v796, %v792
    %v865 = vpack.c.b16 %v797, %v793
    %v866 = vpack.c.b16 %v798, %v794
    %v867 = vpack.c.b16 %v803, %v799
    %v868 = vpack.c.b16 %v804, %v800
    %v869 = vpack.c.b16 %v805, %v801
    %v870 = vpack.c.b16 %v806, %v802
    %935 = vmatprep.subr.bf16.mxu0 %v808
    %936 = vmatpush1.bf16.msra.mxu0 %v807
    %937 = vmatprep.subr.bf16.mxu0 %v812
    %938 = vmatpush1.bf16.msra.mxu0 %v811
    %939 = vmatprep.subr.bf16.mxu0 %v816
    %940 = vmatpush1.bf16.msra.mxu0 %v815
    %941 = vmatprep.subr.bf16.mxu0 %v820
    %942 = vmatpush1.bf16.msra.mxu0 %v819
    %943 = vmatprep.subr.bf16.mxu0 %v824
    %944 = vmatpush1.bf16.msra.mxu0 %v823
    %945 = vmatprep.subr.bf16.mxu0 %v828
    %946 = vmatpush1.bf16.msra.mxu0 %v827
    %947 = vmatprep.subr.bf16.mxu0 %v832
    %948 = vmatpush1.bf16.msra.mxu0 %v831
    %949 = vmatprep.subr.bf16.mxu0 %v836
    %950 = vmatpush1.bf16.msra.mxu0 %v835
    %951 = vmatprep.subr.bf16.mxu0 %v840
    %952 = vmatpush1.bf16.msra.mxu0 %v839
    %953 = vmatprep.subr.bf16.mxu0 %v844
    %954 = vmatpush1.bf16.msra.mxu0 %v843
    %955 = vmatprep.subr.bf16.mxu0 %v848
    %956 = vmatpush1.bf16.msra.mxu0 %v847
    %957 = vmatprep.subr.bf16.mxu0 %v852
    %958 = vmatpush1.bf16.msra.mxu0 %v851
    %959 = vmatprep.subr.bf16.mxu0 %v856
    %960 = vmatpush1.bf16.msra.mxu0 %v855
    %961 = vmatprep.subr.bf16.mxu0 %v860
    %962 = vmatpush1.bf16.msra.mxu0 %v859
    %963 = vmatprep.subr.bf16.mxu0 %v864
    %964 = vmatpush1.bf16.msra.mxu0 %v863
    %965 = vmatprep.subr.bf16.mxu0 %v868
    %966 = vmatpush1.bf16.msra.mxu0 %v867
    %967 = vmatprep.mubr.bf16.mxu0 %v528
    %968 = vmatmul.mubr.bf16.gmra.mrb[0].mxu0 %v527
    %v969 = vpop.f32.mrb[0].mxu0
    %v970 = vadd.f32 %v598, %v969
    %v971 = vpop.f32.mrb[0].mxu0
    %v972 = vadd.f32 %v602, %v971
    %v973 = vpop.f32.mrb[0].mxu0
    %v974 = vpop.f32.mrb[0].mxu0
    %975 = vdwg.mxu0
    %976 = vmatprep.subr.bf16.mxu0 %v810
    %977 = vmatpush1.bf16.msra.mxu0 %v809
    %978 = vmatprep.subr.bf16.mxu0 %v814
    %979 = vmatpush1.bf16.msra.mxu0 %v813
    %980 = vmatprep.subr.bf16.mxu0 %v818
    %981 = vmatpush1.bf16.msra.mxu0 %v817
    %982 = vmatprep.subr.bf16.mxu0 %v822
    %983 = vmatpush1.bf16.msra.mxu0 %v821
    %984 = vmatprep.subr.bf16.mxu0 %v826
    %985 = vmatpush1.bf16.msra.mxu0 %v825
    %986 = vmatprep.subr.bf16.mxu0 %v830
    %987 = vmatpush1.bf16.msra.mxu0 %v829
    %988 = vmatprep.subr.bf16.mxu0 %v834
    %989 = vmatpush1.bf16.msra.mxu0 %v833
    %990 = vmatprep.subr.bf16.mxu0 %v838
    %991 = vmatpush1.bf16.msra.mxu0 %v837
    %992 = vmatprep.subr.bf16.mxu0 %v842
    %993 = vmatpush1.bf16.msra.mxu0 %v841
    %994 = vmatprep.subr.bf16.mxu0 %v846
    %995 = vmatpush1.bf16.msra.mxu0 %v845
    %996 = vmatprep.subr.bf16.mxu0 %v850
    %997 = vmatpush1.bf16.msra.mxu0 %v849
    %998 = vmatprep.subr.bf16.mxu0 %v854
    %999 = vmatpush1.bf16.msra.mxu0 %v853
    %1000 = vmatprep.subr.bf16.mxu0 %v858
    %1001 = vmatpush1.bf16.msra.mxu0 %v857
    %1002 = vmatprep.subr.bf16.mxu0 %v862
    %1003 = vmatpush1.bf16.msra.mxu0 %v861
    %1004 = vmatprep.subr.bf16.mxu0 %v866
    %1005 = vmatpush1.bf16.msra.mxu0 %v865
    %1006 = vmatprep.subr.bf16.mxu0 %v870
    %1007 = vmatpush1.bf16.msra.mxu0 %v869
    %1008 = vmatprep.mubr.bf16.mxu0 %v528
    %1009 = vmatmul.mubr.bf16.gmra.mrb[0].mxu0 %v527
    %v1010 = vpop.f32.mrb[0].mxu0
    %v1011 = vadd.f32 %v606, %v1010
    %v1012 = vpop.f32.mrb[0].mxu0
    %v1013 = vadd.f32 %v610, %v1012
    %v1014 = vpop.f32.mrb[0].mxu0
    %v1015 = vpop.f32.mrb[0].mxu0
    %1016 = vdwg.mxu0
    %v1017 = vsel %vm257, %v521, 0.0
    %v1018 = vrot.slane %v1017, 4
    %v1019 = vadd.f32 %v1017, %v1018
    %v1020 = vrot.slane %v1019, 2
    %v1021 = vadd.f32 %v1019, %v1020
    %v1022 = vrot.slane %v1021, 1
    %v1023 = vadd.f32 %v1021, %v1022
    %v1024 = vsel %vm257, %v523, 0.0
    %v1025 = vrot.slane %v1024, 4
    %v1026 = vadd.f32 %v1024, %v1025
    %v1027 = vrot.slane %v1026, 2
    %v1028 = vadd.f32 %v1026, %v1027
    %v1029 = vrot.slane %v1028, 1
    %v1030 = vadd.f32 %v1028, %v1029
    %v1031 = vmul.f32 %v521, %v521
    %v1032 = vmul.f32 %v523, %v523
    %v1033 = vsel %vm257, %v1031, 0.0
    %v1034 = vrot.slane %v1033, 4
    %v1035 = vadd.f32 %v1033, %v1034
    %v1036 = vrot.slane %v1035, 2
    %v1037 = vadd.f32 %v1035, %v1036
    %v1038 = vrot.slane %v1037, 1
    %v1039 = vadd.f32 %v1037, %v1038
    %v1040 = vsel %vm257, %v1032, 0.0
    %v1041 = vrot.slane %v1040, 4
    %v1042 = vadd.f32 %v1040, %v1041
    %v1043 = vrot.slane %v1042, 2
    %v1044 = vadd.f32 %v1042, %v1043
    %v1045 = vrot.slane %v1044, 1
    %v1046 = vadd.f32 %v1044, %v1045
    %vm1047 = vcmask 1040384
    %v1048 = vsel %vm1047, %v1023, %v1039
    %v1049 = vsel %vm1047, %v1030, %v1046
    %v1050 = vld [vmem:[%s4] sm:$0xff]
    %v1051 = vld [vmem:[%s4 + $0x8] sm:$0xff]
    %v1052 = vld [vmem:[%s4 + $0x10] sm:$0xff]
    %v1053 = vld [vmem:[%s4 + $0x18] sm:$0xff]
    %v1054 = vld [vmem:[%s4 + $0x20] sm:$0xff]
    %v1055 = vld [vmem:[%s4 + $0x28] sm:$0xff]
    %v1056 = vld [vmem:[%s4 + $0x30] sm:$0xff]
    %v1057 = vld [vmem:[%s4 + $0x38] sm:$0xff]
    %v1058 = vld [vmem:[%s4 + $0x40] sm:$0xff]
    %v1059 = vld [vmem:[%s4 + $0x48] sm:$0xff]
    %v1060 = vld [vmem:[%s4 + $0x50] sm:$0xff]
    %v1061 = vld [vmem:[%s4 + $0x58] sm:$0xff]
    %v1062 = vld [vmem:[%s4 + $0x60] sm:$0xff]
    %v1063 = vld [vmem:[%s4 + $0x68] sm:$0xff]
    %v1064 = vld [vmem:[%s4 + $0x70] sm:$0xff]
    %v1065 = vld [vmem:[%s4 + $0x78] sm:$0xff]
    %v1066 = vld [vmem:[%s4 + $0x80] sm:$0xff]
    %v1067 = vld [vmem:[%s4 + $0x88] sm:$0xff]
    %v1068 = vld [vmem:[%s4 + $0x90] sm:$0xff]
    %v1069 = vld [vmem:[%s4 + $0x98] sm:$0xff]
    %v1070 = vld [vmem:[%s4 + $0xa0] sm:$0xff]
    %v1071 = vld [vmem:[%s4 + $0xa8] sm:$0xff]
    %v1072 = vld [vmem:[%s4 + $0xb0] sm:$0xff]
    %v1073 = vld [vmem:[%s4 + $0xb8] sm:$0xff]
    %v1074 = vld [vmem:[%s4 + $0xc0] sm:$0xff]
    %v1075 = vld [vmem:[%s4 + $0xc8] sm:$0xff]
    %v1076 = vld [vmem:[%s4 + $0xd0] sm:$0xff]
    %v1077 = vld [vmem:[%s4 + $0xd8] sm:$0xff]
    %v1078 = vld [vmem:[%s4 + $0xe0] sm:$0xff]
    %v1079 = vld [vmem:[%s4 + $0xe8] sm:$0xff]
    %v1080 = vld [vmem:[%s4 + $0xf0] sm:$0xff]
    %v1081 = vld [vmem:[%s4 + $0xf8] sm:$0xff]
    %1082 = vmatprep.subr.mxu0 0.0
    %1083 = vmatpush1.msra.mxu0 %v1050
    %1084 = vmatprep.subr.mxu0 0.0
    %1085 = vmatpush1.msra.mxu0 %v1051
    %1086 = vmatprep.subr.mxu0 0.0
    %1087 = vmatpush1.msra.mxu0 %v1052
    %1088 = vmatprep.subr.mxu0 0.0
    %1089 = vmatpush1.msra.mxu0 %v1053
    %1090 = vmatprep.subr.mxu0 0.0
    %1091 = vmatpush1.msra.mxu0 %v1054
    %1092 = vmatprep.subr.mxu0 0.0
    %1093 = vmatpush1.msra.mxu0 %v1055
    %1094 = vmatprep.subr.mxu0 0.0
    %1095 = vmatpush1.msra.mxu0 %v1056
    %1096 = vmatprep.subr.mxu0 0.0
    %1097 = vmatpush1.msra.mxu0 %v1057
    %1098 = vmatprep.subr.mxu0 0.0
    %1099 = vmatpush1.msra.mxu0 %v1058
    %1100 = vmatprep.subr.mxu0 0.0
    %1101 = vmatpush1.msra.mxu0 %v1059
    %1102 = vmatprep.subr.mxu0 0.0
    %1103 = vmatpush1.msra.mxu0 %v1060
    %1104 = vmatprep.subr.mxu0 0.0
    %1105 = vmatpush1.msra.mxu0 %v1061
    %1106 = vmatprep.subr.mxu0 0.0
    %1107 = vmatpush1.msra.mxu0 %v1062
    %1108 = vmatprep.subr.mxu0 0.0
    %1109 = vmatpush1.msra.mxu0 %v1063
    %1110 = vmatprep.subr.mxu0 0.0
    %1111 = vmatpush1.msra.mxu0 %v1064
    %1112 = vmatprep.subr.mxu0 0.0
    %1113 = vmatpush1.msra.mxu0 %v1065
    %1114 = vmatprep.subr.mxu0 0.0
    %1115 = vmatpush1.msra.mxu0 %v1066
    %1116 = vmatprep.subr.mxu0 0.0
    %1117 = vmatpush1.msra.mxu0 %v1067
    %1118 = vmatprep.subr.mxu0 0.0
    %1119 = vmatpush1.msra.mxu0 %v1068
    %1120 = vmatprep.subr.mxu0 0.0
    %1121 = vmatpush1.msra.mxu0 %v1069
    %1122 = vmatprep.subr.mxu0 0.0
    %1123 = vmatpush1.msra.mxu0 %v1070
    %1124 = vmatprep.subr.mxu0 0.0
    %1125 = vmatpush1.msra.mxu0 %v1071
    %1126 = vmatprep.subr.mxu0 0.0
    %1127 = vmatpush1.msra.mxu0 %v1072
    %1128 = vmatprep.subr.mxu0 0.0
    %1129 = vmatpush1.msra.mxu0 %v1073
    %1130 = vmatprep.subr.mxu0 0.0
    %1131 = vmatpush1.msra.mxu0 %v1074
    %1132 = vmatprep.subr.mxu0 0.0
    %1133 = vmatpush1.msra.mxu0 %v1075
    %1134 = vmatprep.subr.mxu0 0.0
    %1135 = vmatpush1.msra.mxu0 %v1076
    %1136 = vmatprep.subr.mxu0 0.0
    %1137 = vmatpush1.msra.mxu0 %v1077
    %1138 = vmatprep.subr.mxu0 0.0
    %1139 = vmatpush1.msra.mxu0 %v1078
    %1140 = vmatprep.subr.mxu0 0.0
    %1141 = vmatpush1.msra.mxu0 %v1079
    %1142 = vmatprep.subr.mxu0 0.0
    %1143 = vmatpush1.msra.mxu0 %v1080
    %1144 = vmatprep.subr.mxu0 0.0
    %1145 = vmatpush1.msra.mxu0 %v1081
    %1146 = vmatprep.mubr.f32.mxu0 %v1049
    %1147 = vmatmul.mubr.f32.gmra.mrb[0].mxu0 %v1048
    %v1148 = vpop.f32.mrb[0].mxu0
    %v1149 = vadd.f32 0.0, %v1148
    %v1150 = vpop.f32.mrb[0].mxu0
    %1151 = vdwg.mxu0
    %v1152 = vmul.f32 %v1149, 0.015625
    %v1153 = vmul.f32 %v1152, %v1152
    %v1155 = vrot.slane %v1153, 7
    %v1157 = vsub.f32 %v1152, %v1155
    %v1158 = vadd.f32 %v1157, 1e-05
    %v1159 = vrsqrt.pop %v1158
    %v1160 = vsel %vm1047, %v1152, %v1159
    %v1161 = vld [vmem:[#allocation8] sm:$0xff]
    %v1162 = vld [vmem:[#allocation8 + $0x8] sm:$0xff]
    %v1163 = vld [vmem:[#allocation8 + $0x10] sm:$0xff]
    %v1164 = vld [vmem:[#allocation8 + $0x18] sm:$0xff]
    %vm1165 = vcmask 130048
    %v1167 = vsel %vm1165, %v1160, 0
    %1169 = vmatprep.subr.mxu0 %v1162
    %1170 = vmatpush1.msra.mxu0 %v1161
    %1171 = vmatprep.subr.mxu0 %v1164
    %1172 = vmatpush1.msra.mxu0 %v1163
    %1173 = vmatprep.subr.mxu0 0.0
    %1174 = vmatpush1.msra.mxu0 0.0
    %1175 = vmatprep.subr.mxu0 0.0
    %1176 = vmatpush1.msra.mxu0 0.0
    %1177 = vmatprep.subr.mxu0 0.0
    %1178 = vmatpush1.msra.mxu0 0.0
    %1179 = vmatprep.subr.mxu0 0.0
    %1180 = vmatpush1.msra.mxu0 0.0
    %1181 = vmatprep.subr.mxu0 0.0
    %1182 = vmatpush1.msra.mxu0 0.0
    %1183 = vmatprep.subr.mxu0 0.0
    %1184 = vmatpush1.msra.mxu0 0.0
    %1185 = vmatprep.subr.mxu0 0.0
    %1186 = vmatpush1.msra.mxu0 0.0
    %1187 = vmatprep.subr.mxu0 0.0
    %1188 = vmatpush1.msra.mxu0 0.0
    %1189 = vmatprep.subr.mxu0 0.0
    %1190 = vmatpush1.msra.mxu0 0.0
    %1191 = vmatprep.subr.mxu0 0.0
    %1192 = vmatpush1.msra.mxu0 0.0
    %1193 = vmatprep.subr.mxu0 0.0
    %1194 = vmatpush1.msra.mxu0 0.0
    %1195 = vmatprep.subr.mxu0 0.0
    %1196 = vmatpush1.msra.mxu0 0.0
    %1197 = vmatprep.subr.mxu0 0.0
    %1198 = vmatpush1.msra.mxu0 0.0
    %1199 = vmatprep.subr.mxu0 0.0
    %1200 = vmatpush1.msra.mxu0 0.0
    %1201 = vmatprep.subr.mxu0 0.0
    %1202 = vmatpush1.msra.mxu0 0.0
    %1203 = vmatprep.subr.mxu0 0.0
    %1204 = vmatpush1.msra.mxu0 0.0
    %1205 = vmatprep.subr.mxu0 0.0
    %1206 = vmatpush1.msra.mxu0 0.0
    %1207 = vmatprep.subr.mxu0 0.0
    %1208 = vmatpush1.msra.mxu0 0.0
    %1209 = vmatprep.subr.mxu0 0.0
    %1210 = vmatpush1.msra.mxu0 0.0
    %1211 = vmatprep.subr.mxu0 0.0
    %1212 = vmatpush1.msra.mxu0 0.0
    %1213 = vmatprep.subr.mxu0 0.0
    %1214 = vmatpush1.msra.mxu0 0.0
    %1215 = vmatprep.subr.mxu0 0.0
    %1216 = vmatpush1.msra.mxu0 0.0
    %1217 = vmatprep.subr.mxu0 0.0
    %1218 = vmatpush1.msra.mxu0 0.0
    %1219 = vmatprep.subr.mxu0 0.0
    %1220 = vmatpush1.msra.mxu0 0.0
    %1221 = vmatprep.subr.mxu0 0.0
    %1222 = vmatpush1.msra.mxu0 0.0
    %1223 = vmatprep.subr.mxu0 0.0
    %1224 = vmatpush1.msra.mxu0 0.0
    %1225 = vmatprep.subr.mxu0 0.0
    %1226 = vmatpush1.msra.mxu0 0.0
    %1227 = vmatprep.subr.mxu0 0.0
    %1228 = vmatpush1.msra.mxu0 0.0
    %1229 = vmatprep.subr.mxu0 0.0
    %1230 = vmatpush1.msra.mxu0 0.0
    %1231 = vmatprep.subr.mxu0 0.0
    %1232 = vmatpush1.msra.mxu0 0.0
    %1233 = vmatprep.mubr.f32.mxu0 0.0
    %1234 = vmatmul.mubr.f32.gmra.mrb[0].mxu0 %v1167
    %v1235 = vpop.f32.mrb[0].mxu0
    %v1236 = vadd.f32 0.0, %v1235
    %v1237 = vpop.f32.mrb[0].mxu0
    %v1238 = vadd.f32 0.0, %v1237
    %1239 = vdwg.mxu0
    %v1240 = vlaneseq
    %v1241 = vshrl.u32 %v1240, 7
    %v1242 = vsub.s32 0, %v1241
    %v1243 = vrot.slane %v1236, %v1242
    %v1244 = vlaneseq
    %v1245 = vshrl.u32 %v1244, 7
    %v1246 = vsub.s32 0, %v1245
    %v1247 = vrot.slane %v1238, %v1246
    %v1248 = vsub.f32 %v521, %v1243
    %v1249 = vsub.f32 %v523, %v1247
    %v1250 = vlaneseq
    %v1251 = vshrl.u32 %v1250, 7
    %v1252 = vsub.s32 1, %v1251
    %v1253 = vrot.slane %v1236, %v1252
    %v1254 = vlaneseq
    %v1255 = vshrl.u32 %v1254, 7
    %v1256 = vsub.s32 1, %v1255
    %v1257 = vrot.slane %v1238, %v1256
    %v1258 = vmul.f32 %v1248, %v1253
    %v1259 = vmul.f32 %v1249, %v1257
    %v1260 = vmax.f32 %v1258, 0.0
    %v1261 = vmax.f32 %v1259, 0.0
    %v1262 = vpack.c.bf16 %v1260, %v1260
    %v1263 = vpack.c.bf16 %v1261, %v1261
    %v1264 = vld [vmem:[#allocation11] sm:$0xff]
    %v1265 = vld [vmem:[#allocation11 + $0x8] sm:$0xff]
    %v1266 = vld [vmem:[#allocation11 + $0x10] sm:$0xff]
    %v1267 = vld [vmem:[#allocation11 + $0x18] sm:$0xff]
    %v1268 = vld [vmem:[#allocation11 + $0x20] sm:$0xff]
    %v1269 = vld [vmem:[#allocation11 + $0x28] sm:$0xff]
    %v1270 = vld [vmem:[#allocation11 + $0x30] sm:$0xff]
    %v1271 = vld [vmem:[#allocation11 + $0x38] sm:$0xff]
    %v1272 = vld [vmem:[#allocation11 + $0x40] sm:$0xff]
    %v1273 = vld [vmem:[#allocation11 + $0x48] sm:$0xff]
    %v1274 = vld [vmem:[#allocation11 + $0x50] sm:$0xff]
    %v1275 = vld [vmem:[#allocation11 + $0x58] sm:$0xff]
    %v1276 = vld [vmem:[#allocation11 + $0x60] sm:$0xff]
    %v1277 = vld [vmem:[#allocation11 + $0x68] sm:$0xff]
    %v1278 = vld [vmem:[#allocation11 + $0x70] sm:$0xff]
    %v1279 = vld [vmem:[#allocation11 + $0x78] sm:$0xff]
    %v1280 = vld [vmem:[#allocation11 + $0x80] sm:$0xff]
    %v1281 = vld [vmem:[#allocation11 + $0x88] sm:$0xff]
    %v1282 = vld [vmem:[#allocation11 + $0x90] sm:$0xff]
    %v1283 = vld [vmem:[#allocation11 + $0x98] sm:$0xff]
    %v1284 = vld [vmem:[#allocation11 + $0xa0] sm:$0xff]
    %v1285 = vld [vmem:[#allocation11 + $0xa8] sm:$0xff]
    %v1286 = vld [vmem:[#allocation11 + $0xb0] sm:$0xff]
    %v1287 = vld [vmem:[#allocation11 + $0xb8] sm:$0xff]
    %v1288 = vld [vmem:[#allocation11 + $0xc0] sm:$0xff]
    %v1289 = vld [vmem:[#allocation11 + $0xc8] sm:$0xff]
    %v1290 = vld [vmem:[#allocation11 + $0xd0] sm:$0xff]
    %v1291 = vld [vmem:[#allocation11 + $0xd8] sm:$0xff]
    %v1292 = vld [vmem:[#allocation11 + $0xe0] sm:$0xff]
    %v1293 = vld [vmem:[#allocation11 + $0xe8] sm:$0xff]
    %v1294 = vld [vmem:[#allocation11 + $0xf0] sm:$0xff]
    %v1295 = vld [vmem:[#allocation11 + $0xf8] sm:$0xff]
    %v1296 = vld [vmem:[#allocation11 + $0x100] sm:$0xff]
    %v1297 = vld [vmem:[#allocation11 + $0x108] sm:$0xff]
    %v1298 = vld [vmem:[#allocation11 + $0x110] sm:$0xff]
    %v1299 = vld [vmem:[#allocation11 + $0x118] sm:$0xff]
    %v1300 = vld [vmem:[#allocation11 + $0x120] sm:$0xff]
    %v1301 = vld [vmem:[#allocation11 + $0x128] sm:$0xff]
    %v1302 = vld [vmem:[#allocation11 + $0x130] sm:$0xff]
    %v1303 = vld [vmem:[#allocation11 + $0x138] sm:$0xff]
    %v1304 = vld [vmem:[#allocation11 + $0x140] sm:$0xff]
    %v1305 = vld [vmem:[#allocation11 + $0x148] sm:$0xff]
    %v1306 = vld [vmem:[#allocation11 + $0x150] sm:$0xff]
    %v1307 = vld [vmem:[#allocation11 + $0x158] sm:$0xff]
    %v1308 = vld [vmem:[#allocation11 + $0x160] sm:$0xff]
    %v1309 = vld [vmem:[#allocation11 + $0x168] sm:$0xff]
    %v1310 = vld [vmem:[#allocation11 + $0x170] sm:$0xff]
    %v1311 = vld [vmem:[#allocation11 + $0x178] sm:$0xff]
    %v1312 = vld [vmem:[#allocation11 + $0x180] sm:$0xff]
    %v1313 = vld [vmem:[#allocation11 + $0x188] sm:$0xff]
    %v1314 = vld [vmem:[#allocation11 + $0x190] sm:$0xff]
    %v1315 = vld [vmem:[#allocation11 + $0x198] sm:$0xff]
    %v1316 = vld [vmem:[#allocation11 + $0x1a0] sm:$0xff]
    %v1317 = vld [vmem:[#allocation11 + $0x1a8] sm:$0xff]
    %v1318 = vld [vmem:[#allocation11 + $0x1b0] sm:$0xff]
    %v1319 = vld [vmem:[#allocation11 + $0x1b8] sm:$0xff]
    %v1320 = vld [vmem:[#allocation11 + $0x1c0] sm:$0xff]
    %v1321 = vld [vmem:[#allocation11 + $0x1c8] sm:$0xff]
    %v1322 = vld [vmem:[#allocation11 + $0x1d0] sm:$0xff]
    %v1323 = vld [vmem:[#allocation11 + $0x1d8] sm:$0xff]
    %v1324 = vld [vmem:[#allocation11 + $0x1e0] sm:$0xff]
    %v1325 = vld [vmem:[#allocation11 + $0x1e8] sm:$0xff]
    %v1326 = vld [vmem:[#allocation11 + $0x1f0] sm:$0xff]
    %v1327 = vld [vmem:[#allocation11 + $0x1f8] sm:$0xff]
    %v1328 = vld [vmem:[#allocation13] sm:$0xf]
    %v1330 = vlaneseq
    %v1331 = vshrl.u32 %v1330, 7
    %v1332 = vsub.s32 0, %v1331
    %v1333 = vrot.slane %v1328, %v1332
    %v1334 = vlaneseq
    %v1335 = vshrl.u32 %v1334, 7
    %v1336 = vsub.s32 1, %v1335
    %v1337 = vrot.slane %v1328, %v1336
    %v1338 = vlaneseq
    %v1339 = vshrl.u32 %v1338, 7
    %v1340 = vsub.s32 2, %v1339
    %v1341 = vrot.slane %v1328, %v1340
    %v1342 = vlaneseq
    %v1343 = vshrl.u32 %v1342, 7
    %v1344 = vsub.s32 3, %v1343
    %v1345 = vrot.slane %v1328, %v1344
    %v1414 = vunpack.c.l.b16 %v1264
    %v1415 = vunpack.c.h.b16 %v1264
    %v1416 = vunpack.c.l.b16 %v1265
    %v1417 = vunpack.c.h.b16 %v1265
    %v1418 = vunpack.c.l.b16 %v1266
    %v1419 = vunpack.c.h.b16 %v1266
    %v1420 = vunpack.c.l.b16 %v1267
    %v1421 = vunpack.c.h.b16 %v1267
    %v1422 = vunpack.c.l.b16 %v1268
    %v1423 = vunpack.c.h.b16 %v1268
    %v1424 = vunpack.c.l.b16 %v1269
    %v1425 = vunpack.c.h.b16 %v1269
    %v1426 = vunpack.c.l.b16 %v1270
    %v1427 = vunpack.c.h.b16 %v1270
    %v1428 = vunpack.c.l.b16 %v1271
    %v1429 = vunpack.c.h.b16 %v1271
    %v1430 = vunpack.c.l.b16 %v1272
    %v1431 = vunpack.c.h.b16 %v1272
    %v1432 = vunpack.c.l.b16 %v1273
    %v1433 = vunpack.c.h.b16 %v1273
    %v1434 = vunpack.c.l.b16 %v1274
    %v1435 = vunpack.c.h.b16 %v1274
    %v1436 = vunpack.c.l.b16 %v1275
    %v1437 = vunpack.c.h.b16 %v1275
    %v1438 = vunpack.c.l.b16 %v1276
    %v1439 = vunpack.c.h.b16 %v1276
    %v1440 = vunpack.c.l.b16 %v1277
    %v1441 = vunpack.c.h.b16 %v1277
    %v1442 = vunpack.c.l.b16 %v1278
    %v1443 = vunpack.c.h.b16 %v1278
    %v1444 = vunpack.c.l.b16 %v1279
    %v1445 = vunpack.c.h.b16 %v1279
    %v1446 = vunpack.c.l.b16 %v1280
    %v1447 = vunpack.c.h.b16 %v1280
    %v1448 = vunpack.c.l.b16 %v1281
    %v1449 = vunpack.c.h.b16 %v1281
    %v1450 = vunpack.c.l.b16 %v1282
    %v1451 = vunpack.c.h.b16 %v1282
    %v1452 = vunpack.c.l.b16 %v1283
    %v1453 = vunpack.c.h.b16 %v1283
    %v1454 = vunpack.c.l.b16 %v1284
    %v1455 = vunpack.c.h.b16 %v1284
    %v1456 = vunpack.c.l.b16 %v1285
    %v1457 = vunpack.c.h.b16 %v1285
    %v1458 = vunpack.c.l.b16 %v1286
    %v1459 = vunpack.c.h.b16 %v1286
    %v1460 = vunpack.c.l.b16 %v1287
    %v1461 = vunpack.c.h.b16 %v1287
    %v1462 = vunpack.c.l.b16 %v1288
    %v1463 = vunpack.c.h.b16 %v1288
    %v1464 = vunpack.c.l.b16 %v1289
    %v1465 = vunpack.c.h.b16 %v1289
    %v1466 = vunpack.c.l.b16 %v1290
    %v1467 = vunpack.c.h.b16 %v1290
    %v1468 = vunpack.c.l.b16 %v1291
    %v1469 = vunpack.c.h.b16 %v1291
    %v1470 = vunpack.c.l.b16 %v1292
    %v1471 = vunpack.c.h.b16 %v1292
    %v1472 = vunpack.c.l.b16 %v1293
    %v1473 = vunpack.c.h.b16 %v1293
    %v1474 = vunpack.c.l.b16 %v1294
    %v1475 = vunpack.c.h.b16 %v1294
    %v1476 = vunpack.c.l.b16 %v1295
    %v1477 = vunpack.c.h.b16 %v1295
    %v1478 = vunpack.c.l.b16 %v1296
    %v1479 = vunpack.c.h.b16 %v1296
    %v1480 = vunpack.c.l.b16 %v1297
    %v1481 = vunpack.c.h.b16 %v1297
    %v1482 = vunpack.c.l.b16 %v1298
    %v1483 = vunpack.c.h.b16 %v1298
    %v1484 = vunpack.c.l.b16 %v1299
    %v1485 = vunpack.c.h.b16 %v1299
    %v1486 = vunpack.c.l.b16 %v1300
    %v1487 = vunpack.c.h.b16 %v1300
    %v1488 = vunpack.c.l.b16 %v1301
    %v1489 = vunpack.c.h.b16 %v1301
    %v1490 = vunpack.c.l.b16 %v1302
    %v1491 = vunpack.c.h.b16 %v1302
    %v1492 = vunpack.c.l.b16 %v1303
    %v1493 = vunpack.c.h.b16 %v1303
    %v1494 = vunpack.c.l.b16 %v1304
    %v1495 = vunpack.c.h.b16 %v1304
    %v1496 = vunpack.c.l.b16 %v1305
    %v1497 = vunpack.c.h.b16 %v1305
    %v1498 = vunpack.c.l.b16 %v1306
    %v1499 = vunpack.c.h.b16 %v1306
    %v1500 = vunpack.c.l.b16 %v1307
    %v1501 = vunpack.c.h.b16 %v1307
    %v1502 = vunpack.c.l.b16 %v1308
    %v1503 = vunpack.c.h.b16 %v1308
    %v1504 = vunpack.c.l.b16 %v1309
    %v1505 = vunpack.c.h.b16 %v1309
    %v1506 = vunpack.c.l.b16 %v1310
    %v1507 = vunpack.c.h.b16 %v1310
    %v1508 = vunpack.c.l.b16 %v1311
    %v1509 = vunpack.c.h.b16 %v1311
    %v1510 = vunpack.c.l.b16 %v1312
    %v1511 = vunpack.c.h.b16 %v1312
    %v1512 = vunpack.c.l.b16 %v1313
    %v1513 = vunpack.c.h.b16 %v1313
    %v1514 = vunpack.c.l.b16 %v1314
    %v1515 = vunpack.c.h.b16 %v1314
    %v1516 = vunpack.c.l.b16 %v1315
    %v1517 = vunpack.c.h.b16 %v1315
    %v1518 = vunpack.c.l.b16 %v1316
    %v1519 = vunpack.c.h.b16 %v1316
    %v1520 = vunpack.c.l.b16 %v1317
    %v1521 = vunpack.c.h.b16 %v1317
    %v1522 = vunpack.c.l.b16 %v1318
    %v1523 = vunpack.c.h.b16 %v1318
    %v1524 = vunpack.c.l.b16 %v1319
    %v1525 = vunpack.c.h.b16 %v1319
    %v1526 = vunpack.c.l.b16 %v1320
    %v1527 = vunpack.c.h.b16 %v1320
    %v1528 = vunpack.c.l.b16 %v1321
    %v1529 = vunpack.c.h.b16 %v1321
    %v1530 = vunpack.c.l.b16 %v1322
    %v1531 = vunpack.c.h.b16 %v1322
    %v1532 = vunpack.c.l.b16 %v1323
    %v1533 = vunpack.c.h.b16 %v1323
    %v1534 = vunpack.c.l.b16 %v1324
    %v1535 = vunpack.c.h.b16 %v1324
    %v1536 = vunpack.c.l.b16 %v1325
    %v1537 = vunpack.c.h.b16 %v1325
    %v1538 = vunpack.c.l.b16 %v1326
    %v1539 = vunpack.c.h.b16 %v1326
    %v1540 = vunpack.c.l.b16 %v1327
    %v1541 = vunpack.c.h.b16 %v1327
    %v1542 = vpack.c.b16 %v1418, %v1414
    %v1543 = vpack.c.b16 %v1419, %v1415
    %v1544 = vpack.c.b16 %v1420, %v1416
    %v1545 = vpack.c.b16 %v1421, %v1417
    %v1546 = vpack.c.b16 %v1426, %v1422
    %v1547 = vpack.c.b16 %v1427, %v1423
    %v1548 = vpack.c.b16 %v1428, %v1424
    %v1549 = vpack.c.b16 %v1429, %v1425
    %v1550 = vpack.c.b16 %v1434, %v1430
    %v1551 = vpack.c.b16 %v1435, %v1431
    %v1552 = vpack.c.b16 %v1436, %v1432
    %v1553 = vpack.c.b16 %v1437, %v1433
    %v1554 = vpack.c.b16 %v1442, %v1438
    %v1555 = vpack.c.b16 %v1443, %v1439
    %v1556 = vpack.c.b16 %v1444, %v1440
    %v1557 = vpack.c.b16 %v1445, %v1441
    %v1558 = vpack.c.b16 %v1450, %v1446
    %v1559 = vpack.c.b16 %v1451, %v1447
    %v1560 = vpack.c.b16 %v1452, %v1448
    %v1561 = vpack.c.b16 %v1453, %v1449
    %v1562 = vpack.c.b16 %v1458, %v1454
    %v1563 = vpack.c.b16 %v1459, %v1455
    %v1564 = vpack.c.b16 %v1460, %v1456
    %v1565 = vpack.c.b16 %v1461, %v1457
    %v1566 = vpack.c.b16 %v1466, %v1462
    %v1567 = vpack.c.b16 %v1467, %v1463
    %v1568 = vpack.c.b16 %v1468, %v1464
    %v1569 = vpack.c.b16 %v1469, %v1465
    %v1570 = vpack.c.b16 %v1474, %v1470
    %v1571 = vpack.c.b16 %v1475, %v1471
    %v1572 = vpack.c.b16 %v1476, %v1472
    %v1573 = vpack.c.b16 %v1477, %v1473
    %v1574 = vpack.c.b16 %v1482, %v1478
    %v1575 = vpack.c.b16 %v1483, %v1479
    %v1576 = vpack.c.b16 %v1484, %v1480
    %v1577 = vpack.c.b16 %v1485, %v1481
    %v1578 = vpack.c.b16 %v1490, %v1486
    %v1579 = vpack.c.b16 %v1491, %v1487
    %v1580 = vpack.c.b16 %v1492, %v1488
    %v1581 = vpack.c.b16 %v1493, %v1489
    %v1582 = vpack.c.b16 %v1498, %v1494
    %v1583 = vpack.c.b16 %v1499, %v1495
    %v1584 = vpack.c.b16 %v1500, %v1496
    %v1585 = vpack.c.b16 %v1501, %v1497
    %v1586 = vpack.c.b16 %v1506, %v1502
    %v1587 = vpack.c.b16 %v1507, %v1503
    %v1588 = vpack.c.b16 %v1508, %v1504
    %v1589 = vpack.c.b16 %v1509, %v1505
    %v1590 = vpack.c.b16 %v1514, %v1510
    %v1591 = vpack.c.b16 %v1515, %v1511
    %v1592 = vpack.c.b16 %v1516, %v1512
    %v1593 = vpack.c.b16 %v1517, %v1513
    %v1594 = vpack.c.b16 %v1522, %v1518
    %v1595 = vpack.c.b16 %v1523, %v1519
    %v1596 = vpack.c.b16 %v1524, %v1520
    %v1597 = vpack.c.b16 %v1525, %v1521
    %v1598 = vpack.c.b16 %v1530, %v1526
    %v1599 = vpack.c.b16 %v1531, %v1527
    %v1600 = vpack.c.b16 %v1532, %v1528
    %v1601 = vpack.c.b16 %v1533, %v1529
    %v1602 = vpack.c.b16 %v1538, %v1534
    %v1603 = vpack.c.b16 %v1539, %v1535
    %v1604 = vpack.c.b16 %v1540, %v1536
    %v1605 = vpack.c.b16 %v1541, %v1537
    %1670 = vmatprep.subr.bf16.mxu0 %v1543
    %1671 = vmatpush1.bf16.msra.mxu0 %v1542
    %1672 = vmatprep.subr.bf16.mxu0 %v1547
    %1673 = vmatpush1.bf16.msra.mxu0 %v1546
    %1674 = vmatprep.subr.bf16.mxu0 %v1551
    %1675 = vmatpush1.bf16.msra.mxu0 %v1550
    %1676 = vmatprep.subr.bf16.mxu0 %v1555
    %1677 = vmatpush1.bf16.msra.mxu0 %v1554
    %1678 = vmatprep.subr.bf16.mxu0 %v1559
    %1679 = vmatpush1.bf16.msra.mxu0 %v1558
    %1680 = vmatprep.subr.bf16.mxu0 %v1563
    %1681 = vmatpush1.bf16.msra.mxu0 %v1562
    %1682 = vmatprep.subr.bf16.mxu0 %v1567
    %1683 = vmatpush1.bf16.msra.mxu0 %v1566
    %1684 = vmatprep.subr.bf16.mxu0 %v1571
    %1685 = vmatpush1.bf16.msra.mxu0 %v1570
    %1686 = vmatprep.subr.bf16.mxu0 %v1575
    %1687 = vmatpush1.bf16.msra.mxu0 %v1574
    %1688 = vmatprep.subr.bf16.mxu0 %v1579
    %1689 = vmatpush1.bf16.msra.mxu0 %v1578
    %1690 = vmatprep.subr.bf16.mxu0 %v1583
    %1691 = vmatpush1.bf16.msra.mxu0 %v1582
    %1692 = vmatprep.subr.bf16.mxu0 %v1587
    %1693 = vmatpush1.bf16.msra.mxu0 %v1586
    %1694 = vmatprep.subr.bf16.mxu0 %v1591
    %1695 = vmatpush1.bf16.msra.mxu0 %v1590
    %1696 = vmatprep.subr.bf16.mxu0 %v1595
    %1697 = vmatpush1.bf16.msra.mxu0 %v1594
    %1698 = vmatprep.subr.bf16.mxu0 %v1599
    %1699 = vmatpush1.bf16.msra.mxu0 %v1598
    %1700 = vmatprep.subr.bf16.mxu0 %v1603
    %1701 = vmatpush1.bf16.msra.mxu0 %v1602
    %1702 = vmatprep.mubr.bf16.mxu0 %v1263
    %1703 = vmatmul.mubr.bf16.gmra.mrb[0].mxu0 %v1262
    %v1704 = vpop.f32.mrb[0].mxu0
    %v1705 = vadd.f32 %v1333, %v1704
    %v1706 = vpop.f32.mrb[0].mxu0
    %v1707 = vadd.f32 %v1337, %v1706
    %v1708 = vpop.f32.mrb[0].mxu0
    %v1709 = vpop.f32.mrb[0].mxu0
    %1710 = vdwg.mxu0
    %1711 = vmatprep.subr.bf16.mxu0 %v1545
    %1712 = vmatpush1.bf16.msra.mxu0 %v1544
    %1713 = vmatprep.subr.bf16.mxu0 %v1549
    %1714 = vmatpush1.bf16.msra.mxu0 %v1548
    %1715 = vmatprep.subr.bf16.mxu0 %v1553
    %1716 = vmatpush1.bf16.msra.mxu0 %v1552
    %1717 = vmatprep.subr.bf16.mxu0 %v1557
    %1718 = vmatpush1.bf16.msra.mxu0 %v1556
    %1719 = vmatprep.subr.bf16.mxu0 %v1561
    %1720 = vmatpush1.bf16.msra.mxu0 %v1560
    %1721 = vmatprep.subr.bf16.mxu0 %v1565
    %1722 = vmatpush1.bf16.msra.mxu0 %v1564
    %1723 = vmatprep.subr.bf16.mxu0 %v1569
    %1724 = vmatpush1.bf16.msra.mxu0 %v1568
    %1725 = vmatprep.subr.bf16.mxu0 %v1573
    %1726 = vmatpush1.bf16.msra.mxu0 %v1572
    %1727 = vmatprep.subr.bf16.mxu0 %v1577
    %1728 = vmatpush1.bf16.msra.mxu0 %v1576
    %1729 = vmatprep.subr.bf16.mxu0 %v1581
    %1730 = vmatpush1.bf16.msra.mxu0 %v1580
    %1731 = vmatprep.subr.bf16.mxu0 %v1585
    %1732 = vmatpush1.bf16.msra.mxu0 %v1584
    %1733 = vmatprep.subr.bf16.mxu0 %v1589
    %1734 = vmatpush1.bf16.msra.mxu0 %v1588
    %1735 = vmatprep.subr.bf16.mxu0 %v1593
    %1736 = vmatpush1.bf16.msra.mxu0 %v1592
    %1737 = vmatprep.subr.bf16.mxu0 %v1597
    %1738 = vmatpush1.bf16.msra.mxu0 %v1596
    %1739 = vmatprep.subr.bf16.mxu0 %v1601
    %1740 = vmatpush1.bf16.msra.mxu0 %v1600
    %1741 = vmatprep.subr.bf16.mxu0 %v1605
    %1742 = vmatpush1.bf16.msra.mxu0 %v1604
    %1743 = vmatprep.mubr.bf16.mxu0 %v1263
    %1744 = vmatmul.mubr.bf16.gmra.mrb[0].mxu0 %v1262
    %v1745 = vpop.f32.mrb[0].mxu0
    %v1746 = vadd.f32 %v1341, %v1745
    %v1747 = vpop.f32.mrb[0].mxu0
    %v1748 = vadd.f32 %v1345, %v1747
    %v1749 = vpop.f32.mrb[0].mxu0
    %v1750 = vpop.f32.mrb[0].mxu0
    %1751 = vdwg.mxu0
    %v1752 = vsel %vm257, %v1705, 0.0
    %v1753 = vrot.slane %v1752, 4
    %v1754 = vadd.f32 %v1752, %v1753
    %v1755 = vrot.slane %v1754, 2
    %v1756 = vadd.f32 %v1754, %v1755
    %v1757 = vrot.slane %v1756, 1
    %v1758 = vadd.f32 %v1756, %v1757
    %v1759 = vsel %vm257, %v1707, 0.0
    %v1760 = vrot.slane %v1759, 4
    %v1761 = vadd.f32 %v1759, %v1760
    %v1762 = vrot.slane %v1761, 2
    %v1763 = vadd.f32 %v1761, %v1762
    %v1764 = vrot.slane %v1763, 1
    %v1765 = vadd.f32 %v1763, %v1764
    %v1766 = vsel %vm257, %v1746, 0.0
    %v1767 = vrot.slane %v1766, 4
    %v1768 = vadd.f32 %v1766, %v1767
    %v1769 = vrot.slane %v1768, 2
    %v1770 = vadd.f32 %v1768, %v1769
    %v1771 = vrot.slane %v1770, 1
    %v1772 = vadd.f32 %v1770, %v1771
    %v1773 = vsel %vm257, %v1748, 0.0
    %v1774 = vrot.slane %v1773, 4
    %v1775 = vadd.f32 %v1773, %v1774
    %v1776 = vrot.slane %v1775, 2
    %v1777 = vadd.f32 %v1775, %v1776
    %v1778 = vrot.slane %v1777, 1
    %v1779 = vadd.f32 %v1777, %v1778
    %v1780 = vmul.f32 %v1705, %v1705
    %v1781 = vmul.f32 %v1707, %v1707
    %v1782 = vmul.f32 %v1746, %v1746
    %v1783 = vmul.f32 %v1748, %v1748
    %v1784 = vsel %vm257, %v1780, 0.0
    %v1785 = vrot.slane %v1784, 4
    %v1786 = vadd.f32 %v1784, %v1785
    %v1787 = vrot.slane %v1786, 2
    %v1788 = vadd.f32 %v1786, %v1787
    %v1789 = vrot.slane %v1788, 1
    %v1790 = vadd.f32 %v1788, %v1789
    %v1791 = vsel %vm257, %v1781, 0.0
    %v1792 = vrot.slane %v1791, 4
    %v1793 = vadd.f32 %v1791, %v1792
    %v1794 = vrot.slane %v1793, 2
    %v1795 = vadd.f32 %v1793, %v1794
    %v1796 = vrot.slane %v1795, 1
    %v1797 = vadd.f32 %v1795, %v1796
    %v1798 = vsel %vm257, %v1782, 0.0
    %v1799 = vrot.slane %v1798, 4
    %v1800 = vadd.f32 %v1798, %v1799
    %v1801 = vrot.slane %v1800, 2
    %v1802 = vadd.f32 %v1800, %v1801
    %v1803 = vrot.slane %v1802, 1
    %v1804 = vadd.f32 %v1802, %v1803
    %v1805 = vsel %vm257, %v1783, 0.0
    %v1806 = vrot.slane %v1805, 4
    %v1807 = vadd.f32 %v1805, %v1806
    %v1808 = vrot.slane %v1807, 2
    %v1809 = vadd.f32 %v1807, %v1808
    %v1810 = vrot.slane %v1809, 1
    %v1811 = vadd.f32 %v1809, %v1810
    %v1812 = vsel %vm1047, %v1758, %v1790
    %v1813 = vsel %vm1047, %v1765, %v1797
    %v1814 = vsel %vm1047, %v1772, %v1804
    %v1815 = vsel %vm1047, %v1779, %v1811
    %v1816 = vld [vmem:[%s6] sm:$0xff]
    %v1817 = vld [vmem:[%s6 + $0x8] sm:$0xff]
    %v1818 = vld [vmem:[%s6 + $0x10] sm:$0xff]
    %v1819 = vld [vmem:[%s6 + $0x18] sm:$0xff]
    %v1820 = vld [vmem:[%s6 + $0x20] sm:$0xff]
    %v1821 = vld [vmem:[%s6 + $0x28] sm:$0xff]
    %v1822 = vld [vmem:[%s6 + $0x30] sm:$0xff]
    %v1823 = vld [vmem:[%s6 + $0x38] sm:$0xff]
    %v1824 = vld [vmem:[%s6 + $0x40] sm:$0xff]
    %v1825 = vld [vmem:[%s6 + $0x48] sm:$0xff]
    %v1826 = vld [vmem:[%s6 + $0x50] sm:$0xff]
    %v1827 = vld [vmem:[%s6 + $0x58] sm:$0xff]
    %v1828 = vld [vmem:[%s6 + $0x60] sm:$0xff]
    %v1829 = vld [vmem:[%s6 + $0x68] sm:$0xff]
    %v1830 = vld [vmem:[%s6 + $0x70] sm:$0xff]
    %v1831 = vld [vmem:[%s6 + $0x78] sm:$0xff]
    %v1832 = vld [vmem:[%s6 + $0x80] sm:$0xff]
    %v1833 = vld [vmem:[%s6 + $0x88] sm:$0xff]
    %v1834 = vld [vmem:[%s6 + $0x90] sm:$0xff]
    %v1835 = vld [vmem:[%s6 + $0x98] sm:$0xff]
    %v1836 = vld [vmem:[%s6 + $0xa0] sm:$0xff]
    %v1837 = vld [vmem:[%s6 + $0xa8] sm:$0xff]
    %v1838 = vld [vmem:[%s6 + $0xb0] sm:$0xff]
    %v1839 = vld [vmem:[%s6 + $0xb8] sm:$0xff]
    %v1840 = vld [vmem:[%s6 + $0xc0] sm:$0xff]
    %v1841 = vld [vmem:[%s6 + $0xc8] sm:$0xff]
    %v1842 = vld [vmem:[%s6 + $0xd0] sm:$0xff]
    %v1843 = vld [vmem:[%s6 + $0xd8] sm:$0xff]
    %v1844 = vld [vmem:[%s6 + $0xe0] sm:$0xff]
    %v1845 = vld [vmem:[%s6 + $0xe8] sm:$0xff]
    %v1846 = vld [vmem:[%s6 + $0xf0] sm:$0xff]
    %v1847 = vld [vmem:[%s6 + $0xf8] sm:$0xff]
    %v1848 = vld [vmem:[%s6 + $0x100] sm:$0xff]
    %v1849 = vld [vmem:[%s6 + $0x108] sm:$0xff]
    %v1850 = vld [vmem:[%s6 + $0x110] sm:$0xff]
    %v1851 = vld [vmem:[%s6 + $0x118] sm:$0xff]
    %v1852 = vld [vmem:[%s6 + $0x120] sm:$0xff]
    %v1853 = vld [vmem:[%s6 + $0x128] sm:$0xff]
    %v1854 = vld [vmem:[%s6 + $0x130] sm:$0xff]
    %v1855 = vld [vmem:[%s6 + $0x138] sm:$0xff]
    %v1856 = vld [vmem:[%s6 + $0x140] sm:$0xff]
    %v1857 = vld [vmem:[%s6 + $0x148] sm:$0xff]
    %v1858 = vld [vmem:[%s6 + $0x150] sm:$0xff]
    %v1859 = vld [vmem:[%s6 + $0x158] sm:$0xff]
    %v1860 = vld [vmem:[%s6 + $0x160] sm:$0xff]
    %v1861 = vld [vmem:[%s6 + $0x168] sm:$0xff]
    %v1862 = vld [vmem:[%s6 + $0x170] sm:$0xff]
    %v1863 = vld [vmem:[%s6 + $0x178] sm:$0xff]
    %v1864 = vld [vmem:[%s6 + $0x180] sm:$0xff]
    %v1865 = vld [vmem:[%s6 + $0x188] sm:$0xff]
    %v1866 = vld [vmem:[%s6 + $0x190] sm:$0xff]
    %v1867 = vld [vmem:[%s6 + $0x198] sm:$0xff]
    %v1868 = vld [vmem:[%s6 + $0x1a0] sm:$0xff]
    %v1869 = vld [vmem:[%s6 + $0x1a8] sm:$0xff]
    %v1870 = vld [vmem:[%s6 + $0x1b0] sm:$0xff]
    %v1871 = vld [vmem:[%s6 + $0x1b8] sm:$0xff]
    %v1872 = vld [vmem:[%s6 + $0x1c0] sm:$0xff]
    %v1873 = vld [vmem:[%s6 + $0x1c8] sm:$0xff]
    %v1874 = vld [vmem:[%s6 + $0x1d0] sm:$0xff]
    %v1875 = vld [vmem:[%s6 + $0x1d8] sm:$0xff]
    %v1876 = vld [vmem:[%s6 + $0x1e0] sm:$0xff]
    %v1877 = vld [vmem:[%s6 + $0x1e8] sm:$0xff]
    %v1878 = vld [vmem:[%s6 + $0x1f0] sm:$0xff]
    %v1879 = vld [vmem:[%s6 + $0x1f8] sm:$0xff]
    %1880 = vmatprep.subr.mxu0 0.0
    %1881 = vmatpush1.msra.mxu0 %v1816
    %1882 = vmatprep.subr.mxu0 0.0
    %1883 = vmatpush1.msra.mxu0 %v1817
    %1884 = vmatprep.subr.mxu0 0.0
    %1885 = vmatpush1.msra.mxu0 %v1818
    %1886 = vmatprep.subr.mxu0 0.0
    %1887 = vmatpush1.msra.mxu0 %v1819
    %1888 = vmatprep.subr.mxu0 0.0
    %1889 = vmatpush1.msra.mxu0 %v1820
    %1890 = vmatprep.subr.mxu0 0.0
    %1891 = vmatpush1.msra.mxu0 %v1821
    %1892 = vmatprep.subr.mxu0 0.0
    %1893 = vmatpush1.msra.mxu0 %v1822
    %1894 = vmatprep.subr.mxu0 0.0
    %1895 = vmatpush1.msra.mxu0 %v1823
    %1896 = vmatprep.subr.mxu0 0.0
    %1897 = vmatpush1.msra.mxu0 %v1824
    %1898 = vmatprep.subr.mxu0 0.0
    %1899 = vmatpush1.msra.mxu0 %v1825
    %1900 = vmatprep.subr.mxu0 0.0
    %1901 = vmatpush1.msra.mxu0 %v1826
    %1902 = vmatprep.subr.mxu0 0.0
    %1903 = vmatpush1.msra.mxu0 %v1827
    %1904 = vmatprep.subr.mxu0 0.0
    %1905 = vmatpush1.msra.mxu0 %v1828
    %1906 = vmatprep.subr.mxu0 0.0
    %1907 = vmatpush1.msra.mxu0 %v1829
    %1908 = vmatprep.subr.mxu0 0.0
    %1909 = vmatpush1.msra.mxu0 %v1830
    %1910 = vmatprep.subr.mxu0 0.0
    %1911 = vmatpush1.msra.mxu0 %v1831
    %1912 = vmatprep.subr.mxu0 0.0
    %1913 = vmatpush1.msra.mxu0 %v1832
    %1914 = vmatprep.subr.mxu0 0.0
    %1915 = vmatpush1.msra.mxu0 %v1833
    %1916 = vmatprep.subr.mxu0 0.0
    %1917 = vmatpush1.msra.mxu0 %v1834
    %1918 = vmatprep.subr.mxu0 0.0
    %1919 = vmatpush1.msra.mxu0 %v1835
    %1920 = vmatprep.subr.mxu0 0.0
    %1921 = vmatpush1.msra.mxu0 %v1836
    %1922 = vmatprep.subr.mxu0 0.0
    %1923 = vmatpush1.msra.mxu0 %v1837
    %1924 = vmatprep.subr.mxu0 0.0
    %1925 = vmatpush1.msra.mxu0 %v1838
    %1926 = vmatprep.subr.mxu0 0.0
    %1927 = vmatpush1.msra.mxu0 %v1839
    %1928 = vmatprep.subr.mxu0 0.0
    %1929 = vmatpush1.msra.mxu0 %v1840
    %1930 = vmatprep.subr.mxu0 0.0
    %1931 = vmatpush1.msra.mxu0 %v1841
    %1932 = vmatprep.subr.mxu0 0.0
    %1933 = vmatpush1.msra.mxu0 %v1842
    %1934 = vmatprep.subr.mxu0 0.0
    %1935 = vmatpush1.msra.mxu0 %v1843
    %1936 = vmatprep.subr.mxu0 0.0
    %1937 = vmatpush1.msra.mxu0 %v1844
    %1938 = vmatprep.subr.mxu0 0.0
    %1939 = vmatpush1.msra.mxu0 %v1845
    %1940 = vmatprep.subr.mxu0 0.0
    %1941 = vmatpush1.msra.mxu0 %v1846
    %1942 = vmatprep.subr.mxu0 0.0
    %1943 = vmatpush1.msra.mxu0 %v1847
    %1944 = vmatprep.mubr.f32.mxu0 %v1813
    %1945 = vmatmul.mubr.f32.gmra.mrb[0].mxu0 %v1812
    %v1946 = vpop.f32.mrb[0].mxu0
    %v1947 = vadd.f32 0.0, %v1946
    %v1948 = vpop.f32.mrb[0].mxu0
    %1949 = vdwg.mxu0
    %1950 = vmatprep.subr.mxu0 0.0
    %1951 = vmatpush1.msra.mxu0 %v1848
    %1952 = vmatprep.subr.mxu0 0.0
    %1953 = vmatpush1.msra.mxu0 %v1849
    %1954 = vmatprep.subr.mxu0 0.0
    %1955 = vmatpush1.msra.mxu0 %v1850
    %1956 = vmatprep.subr.mxu0 0.0
    %1957 = vmatpush1.msra.mxu0 %v1851
    %1958 = vmatprep.subr.mxu0 0.0
    %1959 = vmatpush1.msra.mxu0 %v1852
    %1960 = vmatprep.subr.mxu0 0.0
    %1961 = vmatpush1.msra.mxu0 %v1853
    %1962 = vmatprep.subr.mxu0 0.0
    %1963 = vmatpush1.msra.mxu0 %v1854
    %1964 = vmatprep.subr.mxu0 0.0
    %1965 = vmatpush1.msra.mxu0 %v1855
    %1966 = vmatprep.subr.mxu0 0.0
    %1967 = vmatpush1.msra.mxu0 %v1856
    %1968 = vmatprep.subr.mxu0 0.0
    %1969 = vmatpush1.msra.mxu0 %v1857
    %1970 = vmatprep.subr.mxu0 0.0
    %1971 = vmatpush1.msra.mxu0 %v1858
    %1972 = vmatprep.subr.mxu0 0.0
    %1973 = vmatpush1.msra.mxu0 %v1859
    %1974 = vmatprep.subr.mxu0 0.0
    %1975 = vmatpush1.msra.mxu0 %v1860
    %1976 = vmatprep.subr.mxu0 0.0
    %1977 = vmatpush1.msra.mxu0 %v1861
    %1978 = vmatprep.subr.mxu0 0.0
    %1979 = vmatpush1.msra.mxu0 %v1862
    %1980 = vmatprep.subr.mxu0 0.0
    %1981 = vmatpush1.msra.mxu0 %v1863
    %1982 = vmatprep.subr.mxu0 0.0
    %1983 = vmatpush1.msra.mxu0 %v1864
    %1984 = vmatprep.subr.mxu0 0.0
    %1985 = vmatpush1.msra.mxu0 %v1865
    %1986 = vmatprep.subr.mxu0 0.0
    %1987 = vmatpush1.msra.mxu0 %v1866
    %1988 = vmatprep.subr.mxu0 0.0
    %1989 = vmatpush1.msra.mxu0 %v1867
    %1990 = vmatprep.subr.mxu0 0.0
    %1991 = vmatpush1.msra.mxu0 %v1868
    %1992 = vmatprep.subr.mxu0 0.0
    %1993 = vmatpush1.msra.mxu0 %v1869
    %1994 = vmatprep.subr.mxu0 0.0
    %1995 = vmatpush1.msra.mxu0 %v1870
    %1996 = vmatprep.subr.mxu0 0.0
    %1997 = vmatpush1.msra.mxu0 %v1871
    %1998 = vmatprep.subr.mxu0 0.0
    %1999 = vmatpush1.msra.mxu0 %v1872
    %2000 = vmatprep.subr.mxu0 0.0
    %2001 = vmatpush1.msra.mxu0 %v1873
    %2002 = vmatprep.subr.mxu0 0.0
    %2003 = vmatpush1.msra.mxu0 %v1874
    %2004 = vmatprep.subr.mxu0 0.0
    %2005 = vmatpush1.msra.mxu0 %v1875
    %2006 = vmatprep.subr.mxu0 0.0
    %2007 = vmatpush1.msra.mxu0 %v1876
    %2008 = vmatprep.subr.mxu0 0.0
    %2009 = vmatpush1.msra.mxu0 %v1877
    %2010 = vmatprep.subr.mxu0 0.0
    %2011 = vmatpush1.msra.mxu0 %v1878
    %2012 = vmatprep.subr.mxu0 0.0
    %2013 = vmatpush1.msra.mxu0 %v1879
    %2014 = vmatprep.mubr.f32.mxu0 %v1815
    %2015 = vmatmul.mubr.f32.gmra.mrb[0].mxu0 %v1814
    %v2016 = vpop.f32.mrb[0].mxu0
    %v2017 = vadd.f32 %v1947, %v2016
    %v2018 = vpop.f32.mrb[0].mxu0
    %2019 = vdwg.mxu0
    %v2020 = vmul.f32 %v2017, 0.015625
    %v2021 = vmul.f32 %v2020, %v2020
    %v2023 = vrot.slane %v2021, 7
    %v2025 = vsub.f32 %v2020, %v2023
    %v2026 = vadd.f32 %v2025, 1e-05
    %v2027 = vrsqrt.pop %v2026
    %v2028 = vsel %vm1047, %v2020, %v2027
    %v2029 = vld [vmem:[#allocation10] sm:$0xff]
    %v2030 = vld [vmem:[#allocation10 + $0x8] sm:$0xff]
    %v2031 = vld [vmem:[#allocation10 + $0x10] sm:$0xff]
    %v2032 = vld [vmem:[#allocation10 + $0x18] sm:$0xff]
    %v2033 = vld [vmem:[#allocation10 + $0x20] sm:$0xff]
    %v2034 = vld [vmem:[#allocation10 + $0x28] sm:$0xff]
    %v2035 = vld [vmem:[#allocation10 + $0x30] sm:$0xff]
    %v2036 = vld [vmem:[#allocation10 + $0x38] sm:$0xff]
    %v2037 = vld [vmem:[#allocation10 + $0x40] sm:$0xff]
    %v2038 = vld [vmem:[#allocation10 + $0x48] sm:$0xff]
    %v2039 = vld [vmem:[#allocation10 + $0x50] sm:$0xff]
    %v2040 = vld [vmem:[#allocation10 + $0x58] sm:$0xff]
    %v2041 = vld [vmem:[#allocation10 + $0x60] sm:$0xff]
    %v2042 = vld [vmem:[#allocation10 + $0x68] sm:$0xff]
    %v2043 = vld [vmem:[#allocation10 + $0x70] sm:$0xff]
    %v2044 = vld [vmem:[#allocation10 + $0x78] sm:$0xff]
    %vm2045 = vcmask 261120
    %v2047 = vsel %vm2045, %v2028, 0
    %2049 = vmatprep.subr.mxu0 %v2030
    %2050 = vmatpush1.msra.mxu0 %v2029
    %2051 = vmatprep.subr.mxu0 %v2034
    %2052 = vmatpush1.msra.mxu0 %v2033
    %2053 = vmatprep.subr.mxu0 %v2038
    %2054 = vmatpush1.msra.mxu0 %v2037
    %2055 = vmatprep.subr.mxu0 %v2042
    %2056 = vmatpush1.msra.mxu0 %v2041
    %2057 = vmatprep.subr.mxu0 0.0
    %2058 = vmatpush1.msra.mxu0 0.0
    %2059 = vmatprep.subr.mxu0 0.0
    %2060 = vmatpush1.msra.mxu0 0.0
    %2061 = vmatprep.subr.mxu0 0.0
    %2062 = vmatpush1.msra.mxu0 0.0
    %2063 = vmatprep.subr.mxu0 0.0
    %2064 = vmatpush1.msra.mxu0 0.0
    %2065 = vmatprep.subr.mxu0 0.0
    %2066 = vmatpush1.msra.mxu0 0.0
    %2067 = vmatprep.subr.mxu0 0.0
    %2068 = vmatpush1.msra.mxu0 0.0
    %2069 = vmatprep.subr.mxu0 0.0
    %2070 = vmatpush1.msra.mxu0 0.0
    %2071 = vmatprep.subr.mxu0 0.0
    %2072 = vmatpush1.msra.mxu0 0.0
    %2073 = vmatprep.subr.mxu0 0.0
    %2074 = vmatpush1.msra.mxu0 0.0
    %2075 = vmatprep.subr.mxu0 0.0
    %2076 = vmatpush1.msra.mxu0 0.0
    %2077 = vmatprep.subr.mxu0 0.0
    %2078 = vmatpush1.msra.mxu0 0.0
    %2079 = vmatprep.subr.mxu0 0.0
    %2080 = vmatpush1.msra.mxu0 0.0
    %2081 = vmatprep.subr.mxu0 0.0
    %2082 = vmatpush1.msra.mxu0 0.0
    %2083 = vmatprep.subr.mxu0 0.0
    %2084 = vmatpush1.msra.mxu0 0.0
    %2085 = vmatprep.subr.mxu0 0.0
    %2086 = vmatpush1.msra.mxu0 0.0
    %2087 = vmatprep.subr.mxu0 0.0
    %2088 = vmatpush1.msra.mxu0 0.0
    %2089 = vmatprep.subr.mxu0 0.0
    %2090 = vmatpush1.msra.mxu0 0.0
    %2091 = vmatprep.subr.mxu0 0.0
    %2092 = vmatpush1.msra.mxu0 0.0
    %2093 = vmatprep.subr.mxu0 0.0
    %2094 = vmatpush1.msra.mxu0 0.0
    %2095 = vmatprep.subr.mxu0 0.0
    %2096 = vmatpush1.msra.mxu0 0.0
    %2097 = vmatprep.subr.mxu0 0.0
    %2098 = vmatpush1.msra.mxu0 0.0
    %2099 = vmatprep.subr.mxu0 0.0
    %2100 = vmatpush1.msra.mxu0 0.0
    %2101 = vmatprep.subr.mxu0 0.0
    %2102 = vmatpush1.msra.mxu0 0.0
    %2103 = vmatprep.subr.mxu0 0.0
    %2104 = vmatpush1.msra.mxu0 0.0
    %2105 = vmatprep.subr.mxu0 0.0
    %2106 = vmatpush1.msra.mxu0 0.0
    %2107 = vmatprep.subr.mxu0 0.0
    %2108 = vmatpush1.msra.mxu0 0.0
    %2109 = vmatprep.subr.mxu0 0.0
    %2110 = vmatpush1.msra.mxu0 0.0
    %2111 = vmatprep.subr.mxu0 0.0
    %2112 = vmatpush1.msra.mxu0 0.0
    %2113 = vmatprep.mubr.f32.mxu0 0.0
    %2114 = vmatmul.mubr.f32.gmra.mrb[0].mxu0 %v2047
    %v2115 = vpop.f32.mrb[0].mxu0
    %v2116 = vadd.f32 0.0, %v2115
    %v2117 = vpop.f32.mrb[0].mxu0
    %v2118 = vadd.f32 0.0, %v2117
    %2119 = vdwg.mxu0
    %2120 = vmatprep.subr.mxu0 %v2032
    %2121 = vmatpush1.msra.mxu0 %v2031
    %2122 = vmatprep.subr.mxu0 %v2036
    %2123 = vmatpush1.msra.mxu0 %v2035
    %2124 = vmatprep.subr.mxu0 %v2040
    %2125 = vmatpush1.msra.mxu0 %v2039
    %2126 = vmatprep.subr.mxu0 %v2044
    %2127 = vmatpush1.msra.mxu0 %v2043
    %2128 = vmatprep.subr.mxu0 0.0
    %2129 = vmatpush1.msra.mxu0 0.0
    %2130 = vmatprep.subr.mxu0 0.0
    %2131 = vmatpush1.msra.mxu0 0.0
    %2132 = vmatprep.subr.mxu0 0.0
    %2133 = vmatpush1.msra.mxu0 0.0
    %2134 = vmatprep.subr.mxu0 0.0
    %2135 = vmatpush1.msra.mxu0 0.0
    %2136 = vmatprep.subr.mxu0 0.0
    %2137 = vmatpush1.msra.mxu0 0.0
    %2138 = vmatprep.subr.mxu0 0.0
    %2139 = vmatpush1.msra.mxu0 0.0
    %2140 = vmatprep.subr.mxu0 0.0
    %2141 = vmatpush1.msra.mxu0 0.0
    %2142 = vmatprep.subr.mxu0 0.0
    %2143 = vmatpush1.msra.mxu0 0.0
    %2144 = vmatprep.subr.mxu0 0.0
    %2145 = vmatpush1.msra.mxu0 0.0
    %2146 = vmatprep.subr.mxu0 0.0
    %2147 = vmatpush1.msra.mxu0 0.0
    %2148 = vmatprep.subr.mxu0 0.0
    %2149 = vmatpush1.msra.mxu0 0.0
    %2150 = vmatprep.subr.mxu0 0.0
    %2151 = vmatpush1.msra.mxu0 0.0
    %2152 = vmatprep.subr.mxu0 0.0
    %2153 = vmatpush1.msra.mxu0 0.0
    %2154 = vmatprep.subr.mxu0 0.0
    %2155 = vmatpush1.msra.mxu0 0.0
    %2156 = vmatprep.subr.mxu0 0.0
    %2157 = vmatpush1.msra.mxu0 0.0
    %2158 = vmatprep.subr.mxu0 0.0
    %2159 = vmatpush1.msra.mxu0 0.0
    %2160 = vmatprep.subr.mxu0 0.0
    %2161 = vmatpush1.msra.mxu0 0.0
    %2162 = vmatprep.subr.mxu0 0.0
    %2163 = vmatpush1.msra.mxu0 0.0
    %2164 = vmatprep.subr.mxu0 0.0
    %2165 = vmatpush1.msra.mxu0 0.0
    %2166 = vmatprep.subr.mxu0 0.0
    %2167 = vmatpush1.msra.mxu0 0.0
    %2168 = vmatprep.subr.mxu0 0.0
    %2169 = vmatpush1.msra.mxu0 0.0
    %2170 = vmatprep.subr.mxu0 0.0
    %2171 = vmatpush1.msra.mxu0 0.0
    %2172 = vmatprep.subr.mxu0 0.0
    %2173 = vmatpush1.msra.mxu0 0.0
    %2174 = vmatprep.subr.mxu0 0.0
    %2175 = vmatpush1.msra.mxu0 0.0
    %2176 = vmatprep.subr.mxu0 0.0
    %2177 = vmatpush1.msra.mxu0 0.0
    %2178 = vmatprep.subr.mxu0 0.0
    %2179 = vmatpush1.msra.mxu0 0.0
    %2180 = vmatprep.subr.mxu0 0.0
    %2181 = vmatpush1.msra.mxu0 0.0
    %2182 = vmatprep.subr.mxu0 0.0
    %2183 = vmatpush1.msra.mxu0 0.0
    %2184 = vmatprep.mubr.f32.mxu0 0.0
    %2185 = vmatmul.mubr.f32.gmra.mrb[0].mxu0 %v2047
    %v2186 = vpop.f32.mrb[0].mxu0
    %v2187 = vadd.f32 0.0, %v2186
    %v2188 = vpop.f32.mrb[0].mxu0
    %v2189 = vadd.f32 0.0, %v2188
    %2190 = vdwg.mxu0
    %v2191 = vlaneseq
    %v2192 = vshrl.u32 %v2191, 7
    %v2193 = vsub.s32 0, %v2192
    %v2194 = vrot.slane %v2116, %v2193
    %v2195 = vlaneseq
    %v2196 = vshrl.u32 %v2195, 7
    %v2197 = vsub.s32 0, %v2196
    %v2198 = vrot.slane %v2118, %v2197
    %v2199 = vlaneseq
    %v2200 = vshrl.u32 %v2199, 7
    %v2201 = vsub.s32 0, %v2200
    %v2202 = vrot.slane %v2187, %v2201
    %v2203 = vlaneseq
    %v2204 = vshrl.u32 %v2203, 7
    %v2205 = vsub.s32 0, %v2204
    %v2206 = vrot.slane %v2189, %v2205
    %v2207 = vsub.f32 %v1705, %v2194
    %v2208 = vsub.f32 %v1707, %v2198
    %v2209 = vsub.f32 %v1746, %v2202
    %v2210 = vsub.f32 %v1748, %v2206
    %v2211 = vlaneseq
    %v2212 = vshrl.u32 %v2211, 7
    %v2213 = vsub.s32 1, %v2212
    %v2214 = vrot.slane %v2116, %v2213
    %v2215 = vlaneseq
    %v2216 = vshrl.u32 %v2215, 7
    %v2217 = vsub.s32 1, %v2216
    %v2218 = vrot.slane %v2118, %v2217
    %v2219 = vlaneseq
    %v2220 = vshrl.u32 %v2219, 7
    %v2221 = vsub.s32 1, %v2220
    %v2222 = vrot.slane %v2187, %v2221
    %v2223 = vlaneseq
    %v2224 = vshrl.u32 %v2223, 7
    %v2225 = vsub.s32 1, %v2224
    %v2226 = vrot.slane %v2189, %v2225
    %v2227 = vmul.f32 %v2207, %v2214
    %v2228 = vmul.f32 %v2208, %v2218
    %v2229 = vmul.f32 %v2209, %v2222
    %v2230 = vmul.f32 %v2210, %v2226
    %v2231 = vmax.f32 %v2227, 0.0
    %v2232 = vmax.f32 %v2228, 0.0
    %v2233 = vmax.f32 %v2229, 0.0
    %v2234 = vmax.f32 %v2230, 0.0
    %v2235 = vpack.c.bf16 %v2231, %v2231
    %v2236 = vpack.c.bf16 %v2232, %v2232
    %v2237 = vpack.c.bf16 %v2233, %v2233
    %v2238 = vpack.c.bf16 %v2234, %v2234
    %v2239 = vld [vmem:[%s10] sm:$0xff]
    %v2240 = vld [vmem:[%s10 + $0x8] sm:$0xff]
    %v2241 = vld [vmem:[%s10 + $0x10] sm:$0xff]
    %v2242 = vld [vmem:[%s10 + $0x18] sm:$0xff]
    %v2243 = vld [vmem:[%s10 + $0x20] sm:$0xff]
    %v2244 = vld [vmem:[%s10 + $0x28] sm:$0xff]
    %v2245 = vld [vmem:[%s10 + $0x30] sm:$0xff]
    %v2246 = vld [vmem:[%s10 + $0x38] sm:$0xff]
    %v2247 = vld [vmem:[%s10 + $0x40] sm:$0xff]
    %v2248 = vld [vmem:[%s10 + $0x48] sm:$0xff]
    %v2249 = vld [vmem:[%s10 + $0x50] sm:$0xff]
    %v2250 = vld [vmem:[%s10 + $0x58] sm:$0xff]
    %v2251 = vld [vmem:[%s10 + $0x60] sm:$0xff]
    %v2252 = vld [vmem:[%s10 + $0x68] sm:$0xff]
    %v2253 = vld [vmem:[%s10 + $0x70] sm:$0xff]
    %v2254 = vld [vmem:[%s10 + $0x78] sm:$0xff]
    %v2255 = vld [vmem:[%s10 + $0x80] sm:$0xff]
    %v2256 = vld [vmem:[%s10 + $0x88] sm:$0xff]
    %v2257 = vld [vmem:[%s10 + $0x90] sm:$0xff]
    %v2258 = vld [vmem:[%s10 + $0x98] sm:$0xff]
    %v2259 = vld [vmem:[%s10 + $0xa0] sm:$0xff]
    %v2260 = vld [vmem:[%s10 + $0xa8] sm:$0xff]
    %v2261 = vld [vmem:[%s10 + $0xb0] sm:$0xff]
    %v2262 = vld [vmem:[%s10 + $0xb8] sm:$0xff]
    %v2263 = vld [vmem:[%s10 + $0xc0] sm:$0xff]
    %v2264 = vld [vmem:[%s10 + $0xc8] sm:$0xff]
    %v2265 = vld [vmem:[%s10 + $0xd0] sm:$0xff]
    %v2266 = vld [vmem:[%s10 + $0xd8] sm:$0xff]
    %v2267 = vld [vmem:[%s10 + $0xe0] sm:$0xff]
    %v2268 = vld [vmem:[%s10 + $0xe8] sm:$0xff]
    %v2269 = vld [vmem:[%s10 + $0xf0] sm:$0xff]
    %v2270 = vld [vmem:[%s10 + $0xf8] sm:$0xff]
    %v2271 = vld [vmem:[%s10 + $0x100] sm:$0xff]
    %v2272 = vld [vmem:[%s10 + $0x108] sm:$0xff]
    %v2273 = vld [vmem:[%s10 + $0x110] sm:$0xff]
    %v2274 = vld [vmem:[%s10 + $0x118] sm:$0xff]
    %v2275 = vld [vmem:[%s10 + $0x120] sm:$0xff]
    %v2276 = vld [vmem:[%s10 + $0x128] sm:$0xff]
    %v2277 = vld [vmem:[%s10 + $0x130] sm:$0xff]
    %v2278 = vld [vmem:[%s10 + $0x138] sm:$0xff]
    %v2279 = vld [vmem:[%s10 + $0x140] sm:$0xff]
    %v2280 = vld [vmem:[%s10 + $0x148] sm:$0xff]
    %v2281 = vld [vmem:[%s10 + $0x150] sm:$0xff]
    %v2282 = vld [vmem:[%s10 + $0x158] sm:$0xff]
    %v2283 = vld [vmem:[%s10 + $0x160] sm:$0xff]
    %v2284 = vld [vmem:[%s10 + $0x168] sm:$0xff]
    %v2285 = vld [vmem:[%s10 + $0x170] sm:$0xff]
    %v2286 = vld [vmem:[%s10 + $0x178] sm:$0xff]
    %v2287 = vld [vmem:[%s10 + $0x180] sm:$0xff]
    %v2288 = vld [vmem:[%s10 + $0x188] sm:$0xff]
    %v2289 = vld [vmem:[%s10 + $0x190] sm:$0xff]
    %v2290 = vld [vmem:[%s10 + $0x198] sm:$0xff]
    %v2291 = vld [vmem:[%s10 + $0x1a0] sm:$0xff]
    %v2292 = vld [vmem:[%s10 + $0x1a8] sm:$0xff]
    %v2293 = vld [vmem:[%s10 + $0x1b0] sm:$0xff]
    %v2294 = vld [vmem:[%s10 + $0x1b8] sm:$0xff]
    %v2295 = vld [vmem:[%s10 + $0x1c0] sm:$0xff]
    %v2296 = vld [vmem:[%s10 + $0x1c8] sm:$0xff]
    %v2297 = vld [vmem:[%s10 + $0x1d0] sm:$0xff]
    %v2298 = vld [vmem:[%s10 + $0x1d8] sm:$0xff]
    %v2299 = vld [vmem:[%s10 + $0x1e0] sm:$0xff]
    %v2300 = vld [vmem:[%s10 + $0x1e8] sm:$0xff]
    %v2301 = vld [vmem:[%s10 + $0x1f0] sm:$0xff]
    %v2302 = vld [vmem:[%s10 + $0x1f8] sm:$0xff]
    %v2303 = vld [vmem:[%s10 + $0x200] sm:$0xff]
    %v2304 = vld [vmem:[%s10 + $0x208] sm:$0xff]
    %v2305 = vld [vmem:[%s10 + $0x210] sm:$0xff]
    %v2306 = vld [vmem:[%s10 + $0x218] sm:$0xff]
    %v2307 = vld [vmem:[%s10 + $0x220] sm:$0xff]
    %v2308 = vld [vmem:[%s10 + $0x228] sm:$0xff]
    %v2309 = vld [vmem:[%s10 + $0x230] sm:$0xff]
    %v2310 = vld [vmem:[%s10 + $0x238] sm:$0xff]
    %v2311 = vld [vmem:[%s10 + $0x240] sm:$0xff]
    %v2312 = vld [vmem:[%s10 + $0x248] sm:$0xff]
    %v2313 = vld [vmem:[%s10 + $0x250] sm:$0xff]
    %v2314 = vld [vmem:[%s10 + $0x258] sm:$0xff]
    %v2315 = vld [vmem:[%s10 + $0x260] sm:$0xff]
    %v2316 = vld [vmem:[%s10 + $0x268] sm:$0xff]
    %v2317 = vld [vmem:[%s10 + $0x270] sm:$0xff]
    %v2318 = vld [vmem:[%s10 + $0x278] sm:$0xff]
    %v2319 = vld [vmem:[%s10 + $0x280] sm:$0xff]
    %v2320 = vld [vmem:[%s10 + $0x288] sm:$0xff]
    %v2321 = vld [vmem:[%s10 + $0x290] sm:$0xff]
    %v2322 = vld [vmem:[%s10 + $0x298] sm:$0xff]
    %v2323 = vld [vmem:[%s10 + $0x2a0] sm:$0xff]
    %v2324 = vld [vmem:[%s10 + $0x2a8] sm:$0xff]
    %v2325 = vld [vmem:[%s10 + $0x2b0] sm:$0xff]
    %v2326 = vld [vmem:[%s10 + $0x2b8] sm:$0xff]
    %v2327 = vld [vmem:[%s10 + $0x2c0] sm:$0xff]
    %v2328 = vld [vmem:[%s10 + $0x2c8] sm:$0xff]
    %v2329 = vld [vmem:[%s10 + $0x2d0] sm:$0xff]
    %v2330 = vld [vmem:[%s10 + $0x2d8] sm:$0xff]
    %v2331 = vld [vmem:[%s10 + $0x2e0] sm:$0xff]
    %v2332 = vld [vmem:[%s10 + $0x2e8] sm:$0xff]
    %v2333 = vld [vmem:[%s10 + $0x2f0] sm:$0xff]
    %v2334 = vld [vmem:[%s10 + $0x2f8] sm:$0xff]
    %v2335 = vld [vmem:[%s10 + $0x300] sm:$0xff]
    %v2336 = vld [vmem:[%s10 + $0x308] sm:$0xff]
    %v2337 = vld [vmem:[%s10 + $0x310] sm:$0xff]
    %v2338 = vld [vmem:[%s10 + $0x318] sm:$0xff]
    %v2339 = vld [vmem:[%s10 + $0x320] sm:$0xff]
    %v2340 = vld [vmem:[%s10 + $0x328] sm:$0xff]
    %v2341 = vld [vmem:[%s10 + $0x330] sm:$0xff]
    %v2342 = vld [vmem:[%s10 + $0x338] sm:$0xff]
    %v2343 = vld [vmem:[%s10 + $0x340] sm:$0xff]
    %v2344 = vld [vmem:[%s10 + $0x348] sm:$0xff]
    %v2345 = vld [vmem:[%s10 + $0x350] sm:$0xff]
    %v2346 = vld [vmem:[%s10 + $0x358] sm:$0xff]
    %v2347 = vld [vmem:[%s10 + $0x360] sm:$0xff]
    %v2348 = vld [vmem:[%s10 + $0x368] sm:$0xff]
    %v2349 = vld [vmem:[%s10 + $0x370] sm:$0xff]
    %v2350 = vld [vmem:[%s10 + $0x378] sm:$0xff]
    %v2351 = vld [vmem:[%s10 + $0x380] sm:$0xff]
    %v2352 = vld [vmem:[%s10 + $0x388] sm:$0xff]
    %v2353 = vld [vmem:[%s10 + $0x390] sm:$0xff]
    %v2354 = vld [vmem:[%s10 + $0x398] sm:$0xff]
    %v2355 = vld [vmem:[%s10 + $0x3a0] sm:$0xff]
    %v2356 = vld [vmem:[%s10 + $0x3a8] sm:$0xff]
    %v2357 = vld [vmem:[%s10 + $0x3b0] sm:$0xff]
    %v2358 = vld [vmem:[%s10 + $0x3b8] sm:$0xff]
    %v2359 = vld [vmem:[%s10 + $0x3c0] sm:$0xff]
    %v2360 = vld [vmem:[%s10 + $0x3c8] sm:$0xff]
    %v2361 = vld [vmem:[%s10 + $0x3d0] sm:$0xff]
    %v2362 = vld [vmem:[%s10 + $0x3d8] sm:$0xff]
    %v2363 = vld [vmem:[%s10 + $0x3e0] sm:$0xff]
    %v2364 = vld [vmem:[%s10 + $0x3e8] sm:$0xff]
    %v2365 = vld [vmem:[%s10 + $0x3f0] sm:$0xff]
    %v2366 = vld [vmem:[%s10 + $0x3f8] sm:$0xff]
    %v2367 = vld [vmem:[#allocation14] sm:$0xf]
    %v2369 = vlaneseq
    %v2370 = vshrl.u32 %v2369, 7
    %v2371 = vsub.s32 0, %v2370
    %v2372 = vrot.slane %v2367, %v2371
    %v2373 = vlaneseq
    %v2374 = vshrl.u32 %v2373, 7
    %v2375 = vsub.s32 1, %v2374
    %v2376 = vrot.slane %v2367, %v2375
    %v2377 = vlaneseq
    %v2378 = vshrl.u32 %v2377, 7
    %v2379 = vsub.s32 2, %v2378
    %v2380 = vrot.slane %v2367, %v2379
    %v2381 = vlaneseq
    %v2382 = vshrl.u32 %v2381, 7
    %v2383 = vsub.s32 3, %v2382
    %v2384 = vrot.slane %v2367, %v2383
    %v2517 = vunpack.c.l.b16 %v2239
    %v2518 = vunpack.c.h.b16 %v2239
    %v2519 = vunpack.c.l.b16 %v2240
    %v2520 = vunpack.c.h.b16 %v2240
    %v2521 = vunpack.c.l.b16 %v2241
    %v2522 = vunpack.c.h.b16 %v2241
    %v2523 = vunpack.c.l.b16 %v2242
    %v2524 = vunpack.c.h.b16 %v2242
    %v2525 = vunpack.c.l.b16 %v2243
    %v2526 = vunpack.c.h.b16 %v2243
    %v2527 = vunpack.c.l.b16 %v2244
    %v2528 = vunpack.c.h.b16 %v2244
    %v2529 = vunpack.c.l.b16 %v2245
    %v2530 = vunpack.c.h.b16 %v2245
    %v2531 = vunpack.c.l.b16 %v2246
    %v2532 = vunpack.c.h.b16 %v2246
    %v2533 = vunpack.c.l.b16 %v2247
    %v2534 = vunpack.c.h.b16 %v2247
    %v2535 = vunpack.c.l.b16 %v2248
    %v2536 = vunpack.c.h.b16 %v2248
    %v2537 = vunpack.c.l.b16 %v2249
    %v2538 = vunpack.c.h.b16 %v2249
    %v2539 = vunpack.c.l.b16 %v2250
    %v2540 = vunpack.c.h.b16 %v2250
    %v2541 = vunpack.c.l.b16 %v2251
    %v2542 = vunpack.c.h.b16 %v2251
    %v2543 = vunpack.c.l.b16 %v2252
    %v2544 = vunpack.c.h.b16 %v2252
    %v2545 = vunpack.c.l.b16 %v2253
    %v2546 = vunpack.c.h.b16 %v2253
    %v2547 = vunpack.c.l.b16 %v2254
    %v2548 = vunpack.c.h.b16 %v2254
    %v2549 = vunpack.c.l.b16 %v2255
    %v2550 = vunpack.c.h.b16 %v2255
    %v2551 = vunpack.c.l.b16 %v2256
    %v2552 = vunpack.c.h.b16 %v2256
    %v2553 = vunpack.c.l.b16 %v2257
    %v2554 = vunpack.c.h.b16 %v2257
    %v2555 = vunpack.c.l.b16 %v2258
    %v2556 = vunpack.c.h.b16 %v2258
    %v2557 = vunpack.c.l.b16 %v2259
    %v2558 = vunpack.c.h.b16 %v2259
    %v2559 = vunpack.c.l.b16 %v2260
    %v2560 = vunpack.c.h.b16 %v2260
    %v2561 = vunpack.c.l.b16 %v2261
    %v2562 = vunpack.c.h.b16 %v2261
    %v2563 = vunpack.c.l.b16 %v2262
    %v2564 = vunpack.c.h.b16 %v2262
    %v2565 = vunpack.c.l.b16 %v2263
    %v2566 = vunpack.c.h.b16 %v2263
    %v2567 = vunpack.c.l.b16 %v2264
    %v2568 = vunpack.c.h.b16 %v2264
    %v2569 = vunpack.c.l.b16 %v2265
    %v2570 = vunpack.c.h.b16 %v2265
    %v2571 = vunpack.c.l.b16 %v2266
    %v2572 = vunpack.c.h.b16 %v2266
    %v2573 = vunpack.c.l.b16 %v2267
    %v2574 = vunpack.c.h.b16 %v2267
    %v2575 = vunpack.c.l.b16 %v2268
    %v2576 = vunpack.c.h.b16 %v2268
    %v2577 = vunpack.c.l.b16 %v2269
    %v2578 = vunpack.c.h.b16 %v2269
    %v2579 = vunpack.c.l.b16 %v2270
    %v2580 = vunpack.c.h.b16 %v2270
    %v2581 = vunpack.c.l.b16 %v2271
    %v2582 = vunpack.c.h.b16 %v2271
    %v2583 = vunpack.c.l.b16 %v2272
    %v2584 = vunpack.c.h.b16 %v2272
    %v2585 = vunpack.c.l.b16 %v2273
    %v2586 = vunpack.c.h.b16 %v2273
    %v2587 = vunpack.c.l.b16 %v2274
    %v2588 = vunpack.c.h.b16 %v2274
    %v2589 = vunpack.c.l.b16 %v2275
    %v2590 = vunpack.c.h.b16 %v2275
    %v2591 = vunpack.c.l.b16 %v2276
    %v2592 = vunpack.c.h.b16 %v2276
    %v2593 = vunpack.c.l.b16 %v2277
    %v2594 = vunpack.c.h.b16 %v2277
    %v2595 = vunpack.c.l.b16 %v2278
    %v2596 = vunpack.c.h.b16 %v2278
    %v2597 = vunpack.c.l.b16 %v2279
    %v2598 = vunpack.c.h.b16 %v2279
    %v2599 = vunpack.c.l.b16 %v2280
    %v2600 = vunpack.c.h.b16 %v2280
    %v2601 = vunpack.c.l.b16 %v2281
    %v2602 = vunpack.c.h.b16 %v2281
    %v2603 = vunpack.c.l.b16 %v2282
    %v2604 = vunpack.c.h.b16 %v2282
    %v2605 = vunpack.c.l.b16 %v2283
    %v2606 = vunpack.c.h.b16 %v2283
    %v2607 = vunpack.c.l.b16 %v2284
    %v2608 = vunpack.c.h.b16 %v2284
    %v2609 = vunpack.c.l.b16 %v2285
    %v2610 = vunpack.c.h.b16 %v2285
    %v2611 = vunpack.c.l.b16 %v2286
    %v2612 = vunpack.c.h.b16 %v2286
    %v2613 = vunpack.c.l.b16 %v2287
    %v2614 = vunpack.c.h.b16 %v2287
    %v2615 = vunpack.c.l.b16 %v2288
    %v2616 = vunpack.c.h.b16 %v2288
    %v2617 = vunpack.c.l.b16 %v2289
    %v2618 = vunpack.c.h.b16 %v2289
    %v2619 = vunpack.c.l.b16 %v2290
    %v2620 = vunpack.c.h.b16 %v2290
    %v2621 = vunpack.c.l.b16 %v2291
    %v2622 = vunpack.c.h.b16 %v2291
    %v2623 = vunpack.c.l.b16 %v2292
    %v2624 = vunpack.c.h.b16 %v2292
    %v2625 = vunpack.c.l.b16 %v2293
    %v2626 = vunpack.c.h.b16 %v2293
    %v2627 = vunpack.c.l.b16 %v2294
    %v2628 = vunpack.c.h.b16 %v2294
    %v2629 = vunpack.c.l.b16 %v2295
    %v2630 = vunpack.c.h.b16 %v2295
    %v2631 = vunpack.c.l.b16 %v2296
    %v2632 = vunpack.c.h.b16 %v2296
    %v2633 = vunpack.c.l.b16 %v2297
    %v2634 = vunpack.c.h.b16 %v2297
    %v2635 = vunpack.c.l.b16 %v2298
    %v2636 = vunpack.c.h.b16 %v2298
    %v2637 = vunpack.c.l.b16 %v2299
    %v2638 = vunpack.c.h.b16 %v2299
    %v2639 = vunpack.c.l.b16 %v2300
    %v2640 = vunpack.c.h.b16 %v2300
    %v2641 = vunpack.c.l.b16 %v2301
    %v2642 = vunpack.c.h.b16 %v2301
    %v2643 = vunpack.c.l.b16 %v2302
    %v2644 = vunpack.c.h.b16 %v2302
    %v2645 = vunpack.c.l.b16 %v2303
    %v2646 = vunpack.c.h.b16 %v2303
    %v2647 = vunpack.c.l.b16 %v2304
    %v2648 = vunpack.c.h.b16 %v2304
    %v2649 = vunpack.c.l.b16 %v2305
    %v2650 = vunpack.c.h.b16 %v2305
    %v2651 = vunpack.c.l.b16 %v2306
    %v2652 = vunpack.c.h.b16 %v2306
    %v2653 = vunpack.c.l.b16 %v2307
    %v2654 = vunpack.c.h.b16 %v2307
    %v2655 = vunpack.c.l.b16 %v2308
    %v2656 = vunpack.c.h.b16 %v2308
    %v2657 = vunpack.c.l.b16 %v2309
    %v2658 = vunpack.c.h.b16 %v2309
    %v2659 = vunpack.c.l.b16 %v2310
    %v2660 = vunpack.c.h.b16 %v2310
    %v2661 = vunpack.c.l.b16 %v2311
    %v2662 = vunpack.c.h.b16 %v2311
    %v2663 = vunpack.c.l.b16 %v2312
    %v2664 = vunpack.c.h.b16 %v2312
    %v2665 = vunpack.c.l.b16 %v2313
    %v2666 = vunpack.c.h.b16 %v2313
    %v2667 = vunpack.c.l.b16 %v2314
    %v2668 = vunpack.c.h.b16 %v2314
    %v2669 = vunpack.c.l.b16 %v2315
    %v2670 = vunpack.c.h.b16 %v2315
    %v2671 = vunpack.c.l.b16 %v2316
    %v2672 = vunpack.c.h.b16 %v2316
    %v2673 = vunpack.c.l.b16 %v2317
    %v2674 = vunpack.c.h.b16 %v2317
    %v2675 = vunpack.c.l.b16 %v2318
    %v2676 = vunpack.c.h.b16 %v2318
    %v2677 = vunpack.c.l.b16 %v2319
    %v2678 = vunpack.c.h.b16 %v2319
    %v2679 = vunpack.c.l.b16 %v2320
    %v2680 = vunpack.c.h.b16 %v2320
    %v2681 = vunpack.c.l.b16 %v2321
    %v2682 = vunpack.c.h.b16 %v2321
    %v2683 = vunpack.c.l.b16 %v2322
    %v2684 = vunpack.c.h.b16 %v2322
    %v2685 = vunpack.c.l.b16 %v2323
    %v2686 = vunpack.c.h.b16 %v2323
    %v2687 = vunpack.c.l.b16 %v2324
    %v2688 = vunpack.c.h.b16 %v2324
    %v2689 = vunpack.c.l.b16 %v2325
    %v2690 = vunpack.c.h.b16 %v2325
    %v2691 = vunpack.c.l.b16 %v2326
    %v2692 = vunpack.c.h.b16 %v2326
    %v2693 = vunpack.c.l.b16 %v2327
    %v2694 = vunpack.c.h.b16 %v2327
    %v2695 = vunpack.c.l.b16 %v2328
    %v2696 = vunpack.c.h.b16 %v2328
    %v2697 = vunpack.c.l.b16 %v2329
    %v2698 = vunpack.c.h.b16 %v2329
    %v2699 = vunpack.c.l.b16 %v2330
    %v2700 = vunpack.c.h.b16 %v2330
    %v2701 = vunpack.c.l.b16 %v2331
    %v2702 = vunpack.c.h.b16 %v2331
    %v2703 = vunpack.c.l.b16 %v2332
    %v2704 = vunpack.c.h.b16 %v2332
    %v2705 = vunpack.c.l.b16 %v2333
    %v2706 = vunpack.c.h.b16 %v2333
    %v2707 = vunpack.c.l.b16 %v2334
    %v2708 = vunpack.c.h.b16 %v2334
    %v2709 = vunpack.c.l.b16 %v2335
    %v2710 = vunpack.c.h.b16 %v2335
    %v2711 = vunpack.c.l.b16 %v2336
    %v2712 = vunpack.c.h.b16 %v2336
    %v2713 = vunpack.c.l.b16 %v2337
    %v2714 = vunpack.c.h.b16 %v2337
    %v2715 = vunpack.c.l.b16 %v2338
    %v2716 = vunpack.c.h.b16 %v2338
    %v2717 = vunpack.c.l.b16 %v2339
    %v2718 = vunpack.c.h.b16 %v2339
    %v2719 = vunpack.c.l.b16 %v2340
    %v2720 = vunpack.c.h.b16 %v2340
    %v2721 = vunpack.c.l.b16 %v2341
    %v2722 = vunpack.c.h.b16 %v2341
    %v2723 = vunpack.c.l.b16 %v2342
    %v2724 = vunpack.c.h.b16 %v2342
    %v2725 = vunpack.c.l.b16 %v2343
    %v2726 = vunpack.c.h.b16 %v2343
    %v2727 = vunpack.c.l.b16 %v2344
    %v2728 = vunpack.c.h.b16 %v2344
    %v2729 = vunpack.c.l.b16 %v2345
    %v2730 = vunpack.c.h.b16 %v2345
    %v2731 = vunpack.c.l.b16 %v2346
    %v2732 = vunpack.c.h.b16 %v2346
    %v2733 = vunpack.c.l.b16 %v2347
    %v2734 = vunpack.c.h.b16 %v2347
    %v2735 = vunpack.c.l.b16 %v2348
    %v2736 = vunpack.c.h.b16 %v2348
    %v2737 = vunpack.c.l.b16 %v2349
    %v2738 = vunpack.c.h.b16 %v2349
    %v2739 = vunpack.c.l.b16 %v2350
    %v2740 = vunpack.c.h.b16 %v2350
    %v2741 = vunpack.c.l.b16 %v2351
    %v2742 = vunpack.c.h.b16 %v2351
    %v2743 = vunpack.c.l.b16 %v2352
    %v2744 = vunpack.c.h.b16 %v2352
    %v2745 = vunpack.c.l.b16 %v2353
    %v2746 = vunpack.c.h.b16 %v2353
    %v2747 = vunpack.c.l.b16 %v2354
    %v2748 = vunpack.c.h.b16 %v2354
    %v2749 = vunpack.c.l.b16 %v2355
    %v2750 = vunpack.c.h.b16 %v2355
    %v2751 = vunpack.c.l.b16 %v2356
    %v2752 = vunpack.c.h.b16 %v2356
    %v2753 = vunpack.c.l.b16 %v2357
    %v2754 = vunpack.c.h.b16 %v2357
    %v2755 = vunpack.c.l.b16 %v2358
    %v2756 = vunpack.c.h.b16 %v2358
    %v2757 = vunpack.c.l.b16 %v2359
    %v2758 = vunpack.c.h.b16 %v2359
    %v2759 = vunpack.c.l.b16 %v2360
    %v2760 = vunpack.c.h.b16 %v2360
    %v2761 = vunpack.c.l.b16 %v2361
    %v2762 = vunpack.c.h.b16 %v2361
    %v2763 = vunpack.c.l.b16 %v2362
    %v2764 = vunpack.c.h.b16 %v2362
    %v2765 = vunpack.c.l.b16 %v2363
    %v2766 = vunpack.c.h.b16 %v2363
    %v2767 = vunpack.c.l.b16 %v2364
    %v2768 = vunpack.c.h.b16 %v2364
    %v2769 = vunpack.c.l.b16 %v2365
    %v2770 = vunpack.c.h.b16 %v2365
    %v2771 = vunpack.c.l.b16 %v2366
    %v2772 = vunpack.c.h.b16 %v2366
    %v2773 = vpack.c.b16 %v2521, %v2517
    %v2774 = vpack.c.b16 %v2522, %v2518
    %v2775 = vpack.c.b16 %v2523, %v2519
    %v2776 = vpack.c.b16 %v2524, %v2520
    %v2777 = vpack.c.b16 %v2529, %v2525
    %v2778 = vpack.c.b16 %v2530, %v2526
    %v2779 = vpack.c.b16 %v2531, %v2527
    %v2780 = vpack.c.b16 %v2532, %v2528
    %v2781 = vpack.c.b16 %v2537, %v2533
    %v2782 = vpack.c.b16 %v2538, %v2534
    %v2783 = vpack.c.b16 %v2539, %v2535
    %v2784 = vpack.c.b16 %v2540, %v2536
    %v2785 = vpack.c.b16 %v2545, %v2541
    %v2786 = vpack.c.b16 %v2546, %v2542
    %v2787 = vpack.c.b16 %v2547, %v2543
    %v2788 = vpack.c.b16 %v2548, %v2544
    %v2789 = vpack.c.b16 %v2553, %v2549
    %v2790 = vpack.c.b16 %v2554, %v2550
    %v2791 = vpack.c.b16 %v2555, %v2551
    %v2792 = vpack.c.b16 %v2556, %v2552
    %v2793 = vpack.c.b16 %v2561, %v2557
    %v2794 = vpack.c.b16 %v2562, %v2558
    %v2795 = vpack.c.b16 %v2563, %v2559
    %v2796 = vpack.c.b16 %v2564, %v2560
    %v2797 = vpack.c.b16 %v2569, %v2565
    %v2798 = vpack.c.b16 %v2570, %v2566
    %v2799 = vpack.c.b16 %v2571, %v2567
    %v2800 = vpack.c.b16 %v2572, %v2568
    %v2801 = vpack.c.b16 %v2577, %v2573
    %v2802 = vpack.c.b16 %v2578, %v2574
    %v2803 = vpack.c.b16 %v2579, %v2575
    %v2804 = vpack.c.b16 %v2580, %v2576
    %v2805 = vpack.c.b16 %v2585, %v2581
    %v2806 = vpack.c.b16 %v2586, %v2582
    %v2807 = vpack.c.b16 %v2587, %v2583
    %v2808 = vpack.c.b16 %v2588, %v2584
    %v2809 = vpack.c.b16 %v2593, %v2589
    %v2810 = vpack.c.b16 %v2594, %v2590
    %v2811 = vpack.c.b16 %v2595, %v2591
    %v2812 = vpack.c.b16 %v2596, %v2592
    %v2813 = vpack.c.b16 %v2601, %v2597
    %v2814 = vpack.c.b16 %v2602, %v2598
    %v2815 = vpack.c.b16 %v2603, %v2599
    %v2816 = vpack.c.b16 %v2604, %v2600
    %v2817 = vpack.c.b16 %v2609, %v2605
    %v2818 = vpack.c.b16 %v2610, %v2606
    %v2819 = vpack.c.b16 %v2611, %v2607
    %v2820 = vpack.c.b16 %v2612, %v2608
    %v2821 = vpack.c.b16 %v2617, %v2613
    %v2822 = vpack.c.b16 %v2618, %v2614
    %v2823 = vpack.c.b16 %v2619, %v2615
    %v2824 = vpack.c.b16 %v2620, %v2616
    %v2825 = vpack.c.b16 %v2625, %v2621
    %v2826 = vpack.c.b16 %v2626, %v2622
    %v2827 = vpack.c.b16 %v2627, %v2623
    %v2828 = vpack.c.b16 %v2628, %v2624
    %v2829 = vpack.c.b16 %v2633, %v2629
    %v2830 = vpack.c.b16 %v2634, %v2630
    %v2831 = vpack.c.b16 %v2635, %v2631
    %v2832 = vpack.c.b16 %v2636, %v2632
    %v2833 = vpack.c.b16 %v2641, %v2637
    %v2834 = vpack.c.b16 %v2642, %v2638
    %v2835 = vpack.c.b16 %v2643, %v2639
    %v2836 = vpack.c.b16 %v2644, %v2640
    %v2837 = vpack.c.b16 %v2649, %v2645
    %v2838 = vpack.c.b16 %v2650, %v2646
    %v2839 = vpack.c.b16 %v2651, %v2647
    %v2840 = vpack.c.b16 %v2652, %v2648
    %v2841 = vpack.c.b16 %v2657, %v2653
    %v2842 = vpack.c.b16 %v2658, %v2654
    %v2843 = vpack.c.b16 %v2659, %v2655
    %v2844 = vpack.c.b16 %v2660, %v2656
    %v2845 = vpack.c.b16 %v2665, %v2661
    %v2846 = vpack.c.b16 %v2666, %v2662
    %v2847 = vpack.c.b16 %v2667, %v2663
    %v2848 = vpack.c.b16 %v2668, %v2664
    %v2849 = vpack.c.b16 %v2673, %v2669
    %v2850 = vpack.c.b16 %v2674, %v2670
    %v2851 = vpack.c.b16 %v2675, %v2671
    %v2852 = vpack.c.b16 %v2676, %v2672
    %v2853 = vpack.c.b16 %v2681, %v2677
    %v2854 = vpack.c.b16 %v2682, %v2678
    %v2855 = vpack.c.b16 %v2683, %v2679
    %v2856 = vpack.c.b16 %v2684, %v2680
    %v2857 = vpack.c.b16 %v2689, %v2685
    %v2858 = vpack.c.b16 %v2690, %v2686
    %v2859 = vpack.c.b16 %v2691, %v2687
    %v2860 = vpack.c.b16 %v2692, %v2688
    %v2861 = vpack.c.b16 %v2697, %v2693
    %v2862 = vpack.c.b16 %v2698, %v2694
    %v2863 = vpack.c.b16 %v2699, %v2695
    %v2864 = vpack.c.b16 %v2700, %v2696
    %v2865 = vpack.c.b16 %v2705, %v2701
    %v2866 = vpack.c.b16 %v2706, %v2702
    %v2867 = vpack.c.b16 %v2707, %v2703
    %v2868 = vpack.c.b16 %v2708, %v2704
    %v2869 = vpack.c.b16 %v2713, %v2709
    %v2870 = vpack.c.b16 %v2714, %v2710
    %v2871 = vpack.c.b16 %v2715, %v2711
    %v2872 = vpack.c.b16 %v2716, %v2712
    %v2873 = vpack.c.b16 %v2721, %v2717
    %v2874 = vpack.c.b16 %v2722, %v2718
    %v2875 = vpack.c.b16 %v2723, %v2719
    %v2876 = vpack.c.b16 %v2724, %v2720
    %v2877 = vpack.c.b16 %v2729, %v2725
    %v2878 = vpack.c.b16 %v2730, %v2726
    %v2879 = vpack.c.b16 %v2731, %v2727
    %v2880 = vpack.c.b16 %v2732, %v2728
    %v2881 = vpack.c.b16 %v2737, %v2733
    %v2882 = vpack.c.b16 %v2738, %v2734
    %v2883 = vpack.c.b16 %v2739, %v2735
    %v2884 = vpack.c.b16 %v2740, %v2736
    %v2885 = vpack.c.b16 %v2745, %v2741
    %v2886 = vpack.c.b16 %v2746, %v2742
    %v2887 = vpack.c.b16 %v2747, %v2743
    %v2888 = vpack.c.b16 %v2748, %v2744
    %v2889 = vpack.c.b16 %v2753, %v2749
    %v2890 = vpack.c.b16 %v2754, %v2750
    %v2891 = vpack.c.b16 %v2755, %v2751
    %v2892 = vpack.c.b16 %v2756, %v2752
    %v2893 = vpack.c.b16 %v2761, %v2757
    %v2894 = vpack.c.b16 %v2762, %v2758
    %v2895 = vpack.c.b16 %v2763, %v2759
    %v2896 = vpack.c.b16 %v2764, %v2760
    %v2897 = vpack.c.b16 %v2769, %v2765
    %v2898 = vpack.c.b16 %v2770, %v2766
    %v2899 = vpack.c.b16 %v2771, %v2767
    %v2900 = vpack.c.b16 %v2772, %v2768
    %3029 = vmatprep.subr.bf16.mxu0 %v2774
    %3030 = vmatpush1.bf16.msra.mxu0 %v2773
    %3031 = vmatprep.subr.bf16.mxu0 %v2778
    %3032 = vmatpush1.bf16.msra.mxu0 %v2777
    %3033 = vmatprep.subr.bf16.mxu0 %v2782
    %3034 = vmatpush1.bf16.msra.mxu0 %v2781
    %3035 = vmatprep.subr.bf16.mxu0 %v2786
    %3036 = vmatpush1.bf16.msra.mxu0 %v2785
    %3037 = vmatprep.subr.bf16.mxu0 %v2790
    %3038 = vmatpush1.bf16.msra.mxu0 %v2789
    %3039 = vmatprep.subr.bf16.mxu0 %v2794
    %3040 = vmatpush1.bf16.msra.mxu0 %v2793
    %3041 = vmatprep.subr.bf16.mxu0 %v2798
    %3042 = vmatpush1.bf16.msra.mxu0 %v2797
    %3043 = vmatprep.subr.bf16.mxu0 %v2802
    %3044 = vmatpush1.bf16.msra.mxu0 %v2801
    %3045 = vmatprep.subr.bf16.mxu0 %v2806
    %3046 = vmatpush1.bf16.msra.mxu0 %v2805
    %3047 = vmatprep.subr.bf16.mxu0 %v2810
    %3048 = vmatpush1.bf16.msra.mxu0 %v2809
    %3049 = vmatprep.subr.bf16.mxu0 %v2814
    %3050 = vmatpush1.bf16.msra.mxu0 %v2813
    %3051 = vmatprep.subr.bf16.mxu0 %v2818
    %3052 = vmatpush1.bf16.msra.mxu0 %v2817
    %3053 = vmatprep.subr.bf16.mxu0 %v2822
    %3054 = vmatpush1.bf16.msra.mxu0 %v2821
    %3055 = vmatprep.subr.bf16.mxu0 %v2826
    %3056 = vmatpush1.bf16.msra.mxu0 %v2825
    %3057 = vmatprep.subr.bf16.mxu0 %v2830
    %3058 = vmatpush1.bf16.msra.mxu0 %v2829
    %3059 = vmatprep.subr.bf16.mxu0 %v2834
    %3060 = vmatpush1.bf16.msra.mxu0 %v2833
    %3061 = vmatprep.mubr.bf16.mxu0 %v2236
    %3062 = vmatmul.mubr.bf16.gmra.mrb[0].mxu0 %v2235
    %v3063 = vpop.f32.mrb[0].mxu0
    %v3064 = vadd.f32 %v2372, %v3063
    %v3065 = vpop.f32.mrb[0].mxu0
    %v3066 = vadd.f32 %v2376, %v3065
    %v3067 = vpop.f32.mrb[0].mxu0
    %v3068 = vpop.f32.mrb[0].mxu0
    %3069 = vdwg.mxu0
    %3070 = vmatprep.subr.bf16.mxu0 %v2838
    %3071 = vmatpush1.bf16.msra.mxu0 %v2837
    %3072 = vmatprep.subr.bf16.mxu0 %v2842
    %3073 = vmatpush1.bf16.msra.mxu0 %v2841
    %3074 = vmatprep.subr.bf16.mxu0 %v2846
    %3075 = vmatpush1.bf16.msra.mxu0 %v2845
    %3076 = vmatprep.subr.bf16.mxu0 %v2850
    %3077 = vmatpush1.bf16.msra.mxu0 %v2849
    %3078 = vmatprep.subr.bf16.mxu0 %v2854
    %3079 = vmatpush1.bf16.msra.mxu0 %v2853
    %3080 = vmatprep.subr.bf16.mxu0 %v2858
    %3081 = vmatpush1.bf16.msra.mxu0 %v2857
    %3082 = vmatprep.subr.bf16.mxu0 %v2862
    %3083 = vmatpush1.bf16.msra.mxu0 %v2861
    %3084 = vmatprep.subr.bf16.mxu0 %v2866
    %3085 = vmatpush1.bf16.msra.mxu0 %v2865
    %3086 = vmatprep.subr.bf16.mxu0 %v2870
    %3087 = vmatpush1.bf16.msra.mxu0 %v2869
    %3088 = vmatprep.subr.bf16.mxu0 %v2874
    %3089 = vmatpush1.bf16.msra.mxu0 %v2873
    %3090 = vmatprep.subr.bf16.mxu0 %v2878
    %3091 = vmatpush1.bf16.msra.mxu0 %v2877
    %3092 = vmatprep.subr.bf16.mxu0 %v2882
    %3093 = vmatpush1.bf16.msra.mxu0 %v2881
    %3094 = vmatprep.subr.bf16.mxu0 %v2886
    %3095 = vmatpush1.bf16.msra.mxu0 %v2885
    %3096 = vmatprep.subr.bf16.mxu0 %v2890
    %3097 = vmatpush1.bf16.msra.mxu0 %v2889
    %3098 = vmatprep.subr.bf16.mxu0 %v2894
    %3099 = vmatpush1.bf16.msra.mxu0 %v2893
    %3100 = vmatprep.subr.bf16.mxu0 %v2898
    %3101 = vmatpush1.bf16.msra.mxu0 %v2897
    %3102 = vmatprep.mubr.bf16.mxu0 %v2238
    %3103 = vmatmul.mubr.bf16.gmra.mrb[0].mxu0 %v2237
    %v3104 = vpop.f32.mrb[0].mxu0
    %v3105 = vadd.f32 %v3064, %v3104
    %v3106 = vpop.f32.mrb[0].mxu0
    %v3107 = vadd.f32 %v3066, %v3106
    %v3108 = vpop.f32.mrb[0].mxu0
    %v3109 = vpop.f32.mrb[0].mxu0
    %3110 = vdwg.mxu0
    %3111 = vmatprep.subr.bf16.mxu0 %v2776
    %3112 = vmatpush1.bf16.msra.mxu0 %v2775
    %3113 = vmatprep.subr.bf16.mxu0 %v2780
    %3114 = vmatpush1.bf16.msra.mxu0 %v2779
    %3115 = vmatprep.subr.bf16.mxu0 %v2784
    %3116 = vmatpush1.bf16.msra.mxu0 %v2783
    %3117 = vmatprep.subr.bf16.mxu0 %v2788
    %3118 = vmatpush1.bf16.msra.mxu0 %v2787
    %3119 = vmatprep.subr.bf16.mxu0 %v2792
    %3120 = vmatpush1.bf16.msra.mxu0 %v2791
    %3121 = vmatprep.subr.bf16.mxu0 %v2796
    %3122 = vmatpush1.bf16.msra.mxu0 %v2795
    %3123 = vmatprep.subr.bf16.mxu0 %v2800
    %3124 = vmatpush1.bf16.msra.mxu0 %v2799
    %3125 = vmatprep.subr.bf16.mxu0 %v2804
    %3126 = vmatpush1.bf16.msra.mxu0 %v2803
    %3127 = vmatprep.subr.bf16.mxu0 %v2808
    %3128 = vmatpush1.bf16.msra.mxu0 %v2807
    %3129 = vmatprep.subr.bf16.mxu0 %v2812
    %3130 = vmatpush1.bf16.msra.mxu0 %v2811
    %3131 = vmatprep.subr.bf16.mxu0 %v2816
    %3132 = vmatpush1.bf16.msra.mxu0 %v2815
    %3133 = vmatprep.subr.bf16.mxu0 %v2820
    %3134 = vmatpush1.bf16.msra.mxu0 %v2819
    %3135 = vmatprep.subr.bf16.mxu0 %v2824
    %3136 = vmatpush1.bf16.msra.mxu0 %v2823
    %3137 = vmatprep.subr.bf16.mxu0 %v2828
    %3138 = vmatpush1.bf16.msra.mxu0 %v2827
    %3139 = vmatprep.subr.bf16.mxu0 %v2832
    %3140 = vmatpush1.bf16.msra.mxu0 %v2831
    %3141 = vmatprep.subr.bf16.mxu0 %v2836
    %3142 = vmatpush1.bf16.msra.mxu0 %v2835
    %3143 = vmatprep.mubr.bf16.mxu0 %v2236
    %3144 = vmatmul.mubr.bf16.gmra.mrb[0].mxu0 %v2235
    %v3145 = vpop.f32.mrb[0].mxu0
    %v3146 = vadd.f32 %v2380, %v3145
    %v3147 = vpop.f32.mrb[0].mxu0
    %v3148 = vadd.f32 %v2384, %v3147
    %v3149 = vpop.f32.mrb[0].mxu0
    %v3150 = vpop.f32.mrb[0].mxu0
    %3151 = vdwg.mxu0
    %3152 = vmatprep.subr.bf16.mxu0 %v2840
    %3153 = vmatpush1.bf16.msra.mxu0 %v2839
    %3154 = vmatprep.subr.bf16.mxu0 %v2844
    %3155 = vmatpush1.bf16.msra.mxu0 %v2843
    %3156 = vmatprep.subr.bf16.mxu0 %v2848
    %3157 = vmatpush1.bf16.msra.mxu0 %v2847
    %3158 = vmatprep.subr.bf16.mxu0 %v2852
    %3159 = vmatpush1.bf16.msra.mxu0 %v2851
    %3160 = vmatprep.subr.bf16.mxu0 %v2856
    %3161 = vmatpush1.bf16.msra.mxu0 %v2855
    %3162 = vmatprep.subr.bf16.mxu0 %v2860
    %3163 = vmatpush1.bf16.msra.mxu0 %v2859
    %3164 = vmatprep.subr.bf16.mxu0 %v2864
    %3165 = vmatpush1.bf16.msra.mxu0 %v2863
    %3166 = vmatprep.subr.bf16.mxu0 %v2868
    %3167 = vmatpush1.bf16.msra.mxu0 %v2867
    %3168 = vmatprep.subr.bf16.mxu0 %v2872
    %3169 = vmatpush1.bf16.msra.mxu0 %v2871
    %3170 = vmatprep.subr.bf16.mxu0 %v2876
    %3171 = vmatpush1.bf16.msra.mxu0 %v2875
    %3172 = vmatprep.subr.bf16.mxu0 %v2880
    %3173 = vmatpush1.bf16.msra.mxu0 %v2879
    %3174 = vmatprep.subr.bf16.mxu0 %v2884
    %3175 = vmatpush1.bf16.msra.mxu0 %v2883
    %3176 = vmatprep.subr.bf16.mxu0 %v2888
    %3177 = vmatpush1.bf16.msra.mxu0 %v2887
    %3178 = vmatprep.subr.bf16.mxu0 %v2892
    %3179 = vmatpush1.bf16.msra.mxu0 %v2891
    %3180 = vmatprep.subr.bf16.mxu0 %v2896
    %3181 = vmatpush1.bf16.msra.mxu0 %v2895
    %3182 = vmatprep.subr.bf16.mxu0 %v2900
    %3183 = vmatpush1.bf16.msra.mxu0 %v2899
    %3184 = vmatprep.mubr.bf16.mxu0 %v2238
    %3185 = vmatmul.mubr.bf16.gmra.mrb[0].mxu0 %v2237
    %v3186 = vpop.f32.mrb[0].mxu0
    %v3187 = vadd.f32 %v3146, %v3186
    %v3188 = vpop.f32.mrb[0].mxu0
    %v3189 = vadd.f32 %v3148, %v3188
    %v3190 = vpop.f32.mrb[0].mxu0
    %v3191 = vpop.f32.mrb[0].mxu0
    %3192 = vdwg.mxu0
    %v3193 = vadd.f32 %v970, %v3105
    %v3194 = vadd.f32 %v972, %v3107
    %v3195 = vadd.f32 %v1011, %v3187
    %v3196 = vadd.f32 %v1013, %v3189
    %v3197 = vpack.c.bf16 %v3193, %v3193
    %v3198 = vpack.c.bf16 %v3194, %v3194
    %v3199 = vpack.c.bf16 %v3195, %v3195
    %v3200 = vpack.c.bf16 %v3196, %v3196
    %v3201 = vld [vmem:[#allocation22] sm:$0xff]
    %v3202 = vld [vmem:[#allocation22 + $0x8] sm:$0xff]
    %v3203 = vld [vmem:[#allocation22 + $0x10] sm:$0xff]
    %v3204 = vld [vmem:[#allocation22 + $0x18] sm:$0xff]
    %v3205 = vld [vmem:[#allocation22 + $0x20] sm:$0xff]
    %v3206 = vld [vmem:[#allocation22 + $0x28] sm:$0xff]
    %v3207 = vld [vmem:[#allocation22 + $0x30] sm:$0xff]
    %v3208 = vld [vmem:[#allocation22 + $0x38] sm:$0xff]
    %v3209 = vld [vmem:[#allocation22 + $0x40] sm:$0xff]
    %v3210 = vld [vmem:[#allocation22 + $0x48] sm:$0xff]
    %v3211 = vld [vmem:[#allocation22 + $0x50] sm:$0xff]
    %v3212 = vld [vmem:[#allocation22 + $0x58] sm:$0xff]
    %v3213 = vld [vmem:[#allocation22 + $0x60] sm:$0xff]
    %v3214 = vld [vmem:[#allocation22 + $0x68] sm:$0xff]
    %v3215 = vld [vmem:[#allocation22 + $0x70] sm:$0xff]
    %v3216 = vld [vmem:[#allocation22 + $0x78] sm:$0xff]
    %v3217 = vld [vmem:[#allocation22 + $0x80] sm:$0xff]
    %v3218 = vld [vmem:[#allocation22 + $0x88] sm:$0xff]
    %v3219 = vld [vmem:[#allocation22 + $0x90] sm:$0xff]
    %v3220 = vld [vmem:[#allocation22 + $0x98] sm:$0xff]
    %v3221 = vld [vmem:[#allocation22 + $0xa0] sm:$0xff]
    %v3222 = vld [vmem:[#allocation22 + $0xa8] sm:$0xff]
    %v3223 = vld [vmem:[#allocation22 + $0xb0] sm:$0xff]
    %v3224 = vld [vmem:[#allocation22 + $0xb8] sm:$0xff]
    %v3225 = vld [vmem:[#allocation22 + $0xc0] sm:$0xff]
    %v3226 = vld [vmem:[#allocation22 + $0xc8] sm:$0xff]
    %v3227 = vld [vmem:[#allocation22 + $0xd0] sm:$0xff]
    %v3228 = vld [vmem:[#allocation22 + $0xd8] sm:$0xff]
    %v3229 = vld [vmem:[#allocation22 + $0xe0] sm:$0xff]
    %v3230 = vld [vmem:[#allocation22 + $0xe8] sm:$0xff]
    %v3231 = vld [vmem:[#allocation22 + $0xf0] sm:$0xff]
    %v3232 = vld [vmem:[#allocation22 + $0xf8] sm:$0xff]
    %v3233 = vld [vmem:[#allocation22 + $0x100] sm:$0xff]
    %v3234 = vld [vmem:[#allocation22 + $0x108] sm:$0xff]
    %v3235 = vld [vmem:[#allocation22 + $0x110] sm:$0xff]
    %v3236 = vld [vmem:[#allocation22 + $0x118] sm:$0xff]
    %v3237 = vld [vmem:[#allocation22 + $0x120] sm:$0xff]
    %v3238 = vld [vmem:[#allocation22 + $0x128] sm:$0xff]
    %v3239 = vld [vmem:[#allocation22 + $0x130] sm:$0xff]
    %v3240 = vld [vmem:[#allocation22 + $0x138] sm:$0xff]
    %v3241 = vld [vmem:[#allocation22 + $0x140] sm:$0xff]
    %v3242 = vld [vmem:[#allocation22 + $0x148] sm:$0xff]
    %v3243 = vld [vmem:[#allocation22 + $0x150] sm:$0xff]
    %v3244 = vld [vmem:[#allocation22 + $0x158] sm:$0xff]
    %v3245 = vld [vmem:[#allocation22 + $0x160] sm:$0xff]
    %v3246 = vld [vmem:[#allocation22 + $0x168] sm:$0xff]
    %v3247 = vld [vmem:[#allocation22 + $0x170] sm:$0xff]
    %v3248 = vld [vmem:[#allocation22 + $0x178] sm:$0xff]
    %v3249 = vld [vmem:[#allocation22 + $0x180] sm:$0xff]
    %v3250 = vld [vmem:[#allocation22 + $0x188] sm:$0xff]
    %v3251 = vld [vmem:[#allocation22 + $0x190] sm:$0xff]
    %v3252 = vld [vmem:[#allocation22 + $0x198] sm:$0xff]
    %v3253 = vld [vmem:[#allocation22 + $0x1a0] sm:$0xff]
    %v3254 = vld [vmem:[#allocation22 + $0x1a8] sm:$0xff]
    %v3255 = vld [vmem:[#allocation22 + $0x1b0] sm:$0xff]
    %v3256 = vld [vmem:[#allocation22 + $0x1b8] sm:$0xff]
    %v3257 = vld [vmem:[#allocation22 + $0x1c0] sm:$0xff]
    %v3258 = vld [vmem:[#allocation22 + $0x1c8] sm:$0xff]
    %v3259 = vld [vmem:[#allocation22 + $0x1d0] sm:$0xff]
    %v3260 = vld [vmem:[#allocation22 + $0x1d8] sm:$0xff]
    %v3261 = vld [vmem:[#allocation22 + $0x1e0] sm:$0xff]
    %v3262 = vld [vmem:[#allocation22 + $0x1e8] sm:$0xff]
    %v3263 = vld [vmem:[#allocation22 + $0x1f0] sm:$0xff]
    %v3264 = vld [vmem:[#allocation22 + $0x1f8] sm:$0xff]
    %v3265 = vld [vmem:[%s19] sm:$0x3]
    %v3267 = vlaneseq
    %v3268 = vshrl.u32 %v3267, 7
    %v3269 = vsub.s32 0, %v3268
    %v3270 = vrot.slane %v3265, %v3269
    %v3271 = vlaneseq
    %v3272 = vshrl.u32 %v3271, 7
    %v3273 = vsub.s32 1, %v3272
    %v3274 = vrot.slane %v3265, %v3273
    %v3341 = vunpack.c.l.b16 %v3201
    %v3342 = vunpack.c.h.b16 %v3201
    %v3343 = vunpack.c.l.b16 %v3202
    %v3344 = vunpack.c.h.b16 %v3202
    %v3345 = vunpack.c.l.b16 %v3203
    %v3346 = vunpack.c.h.b16 %v3203
    %v3347 = vunpack.c.l.b16 %v3204
    %v3348 = vunpack.c.h.b16 %v3204
    %v3349 = vunpack.c.l.b16 %v3205
    %v3350 = vunpack.c.h.b16 %v3205
    %v3351 = vunpack.c.l.b16 %v3206
    %v3352 = vunpack.c.h.b16 %v3206
    %v3353 = vunpack.c.l.b16 %v3207
    %v3354 = vunpack.c.h.b16 %v3207
    %v3355 = vunpack.c.l.b16 %v3208
    %v3356 = vunpack.c.h.b16 %v3208
    %v3357 = vunpack.c.l.b16 %v3209
    %v3358 = vunpack.c.h.b16 %v3209
    %v3359 = vunpack.c.l.b16 %v3210
    %v3360 = vunpack.c.h.b16 %v3210
    %v3361 = vunpack.c.l.b16 %v3211
    %v3362 = vunpack.c.h.b16 %v3211
    %v3363 = vunpack.c.l.b16 %v3212
    %v3364 = vunpack.c.h.b16 %v3212
    %v3365 = vunpack.c.l.b16 %v3213
    %v3366 = vunpack.c.h.b16 %v3213
    %v3367 = vunpack.c.l.b16 %v3214
    %v3368 = vunpack.c.h.b16 %v3214
    %v3369 = vunpack.c.l.b16 %v3215
    %v3370 = vunpack.c.h.b16 %v3215
    %v3371 = vunpack.c.l.b16 %v3216
    %v3372 = vunpack.c.h.b16 %v3216
    %v3373 = vunpack.c.l.b16 %v3217
    %v3374 = vunpack.c.h.b16 %v3217
    %v3375 = vunpack.c.l.b16 %v3218
    %v3376 = vunpack.c.h.b16 %v3218
    %v3377 = vunpack.c.l.b16 %v3219
    %v3378 = vunpack.c.h.b16 %v3219
    %v3379 = vunpack.c.l.b16 %v3220
    %v3380 = vunpack.c.h.b16 %v3220
    %v3381 = vunpack.c.l.b16 %v3221
    %v3382 = vunpack.c.h.b16 %v3221
    %v3383 = vunpack.c.l.b16 %v3222
    %v3384 = vunpack.c.h.b16 %v3222
    %v3385 = vunpack.c.l.b16 %v3223
    %v3386 = vunpack.c.h.b16 %v3223
    %v3387 = vunpack.c.l.b16 %v3224
    %v3388 = vunpack.c.h.b16 %v3224
    %v3389 = vunpack.c.l.b16 %v3225
    %v3390 = vunpack.c.h.b16 %v3225
    %v3391 = vunpack.c.l.b16 %v3226
    %v3392 = vunpack.c.h.b16 %v3226
    %v3393 = vunpack.c.l.b16 %v3227
    %v3394 = vunpack.c.h.b16 %v3227
    %v3395 = vunpack.c.l.b16 %v3228
    %v3396 = vunpack.c.h.b16 %v3228
    %v3397 = vunpack.c.l.b16 %v3229
    %v3398 = vunpack.c.h.b16 %v3229
    %v3399 = vunpack.c.l.b16 %v3230
    %v3400 = vunpack.c.h.b16 %v3230
    %v3401 = vunpack.c.l.b16 %v3231
    %v3402 = vunpack.c.h.b16 %v3231
    %v3403 = vunpack.c.l.b16 %v3232
    %v3404 = vunpack.c.h.b16 %v3232
    %v3405 = vunpack.c.l.b16 %v3233
    %v3406 = vunpack.c.h.b16 %v3233
    %v3407 = vunpack.c.l.b16 %v3234
    %v3408 = vunpack.c.h.b16 %v3234
    %v3409 = vunpack.c.l.b16 %v3235
    %v3410 = vunpack.c.h.b16 %v3235
    %v3411 = vunpack.c.l.b16 %v3236
    %v3412 = vunpack.c.h.b16 %v3236
    %v3413 = vunpack.c.l.b16 %v3237
    %v3414 = vunpack.c.h.b16 %v3237
    %v3415 = vunpack.c.l.b16 %v3238
    %v3416 = vunpack.c.h.b16 %v3238
    %v3417 = vunpack.c.l.b16 %v3239
    %v3418 = vunpack.c.h.b16 %v3239
    %v3419 = vunpack.c.l.b16 %v3240
    %v3420 = vunpack.c.h.b16 %v3240
    %v3421 = vunpack.c.l.b16 %v3241
    %v3422 = vunpack.c.h.b16 %v3241
    %v3423 = vunpack.c.l.b16 %v3242
    %v3424 = vunpack.c.h.b16 %v3242
    %v3425 = vunpack.c.l.b16 %v3243
    %v3426 = vunpack.c.h.b16 %v3243
    %v3427 = vunpack.c.l.b16 %v3244
    %v3428 = vunpack.c.h.b16 %v3244
    %v3429 = vunpack.c.l.b16 %v3245
    %v3430 = vunpack.c.h.b16 %v3245
    %v3431 = vunpack.c.l.b16 %v3246
    %v3432 = vunpack.c.h.b16 %v3246
    %v3433 = vunpack.c.l.b16 %v3247
    %v3434 = vunpack.c.h.b16 %v3247
    %v3435 = vunpack.c.l.b16 %v3248
    %v3436 = vunpack.c.h.b16 %v3248
    %v3437 = vunpack.c.l.b16 %v3249
    %v3438 = vunpack.c.h.b16 %v3249
    %v3439 = vunpack.c.l.b16 %v3250
    %v3440 = vunpack.c.h.b16 %v3250
    %v3441 = vunpack.c.l.b16 %v3251
    %v3442 = vunpack.c.h.b16 %v3251
    %v3443 = vunpack.c.l.b16 %v3252
    %v3444 = vunpack.c.h.b16 %v3252
    %v3445 = vunpack.c.l.b16 %v3253
    %v3446 = vunpack.c.h.b16 %v3253
    %v3447 = vunpack.c.l.b16 %v3254
    %v3448 = vunpack.c.h.b16 %v3254
    %v3449 = vunpack.c.l.b16 %v3255
    %v3450 = vunpack.c.h.b16 %v3255
    %v3451 = vunpack.c.l.b16 %v3256
    %v3452 = vunpack.c.h.b16 %v3256
    %v3453 = vunpack.c.l.b16 %v3257
    %v3454 = vunpack.c.h.b16 %v3257
    %v3455 = vunpack.c.l.b16 %v3258
    %v3456 = vunpack.c.h.b16 %v3258
    %v3457 = vunpack.c.l.b16 %v3259
    %v3458 = vunpack.c.h.b16 %v3259
    %v3459 = vunpack.c.l.b16 %v3260
    %v3460 = vunpack.c.h.b16 %v3260
    %v3461 = vunpack.c.l.b16 %v3261
    %v3462 = vunpack.c.h.b16 %v3261
    %v3463 = vunpack.c.l.b16 %v3262
    %v3464 = vunpack.c.h.b16 %v3262
    %v3465 = vunpack.c.l.b16 %v3263
    %v3466 = vunpack.c.h.b16 %v3263
    %v3467 = vunpack.c.l.b16 %v3264
    %v3468 = vunpack.c.h.b16 %v3264
    %v3469 = vpack.c.b16 %v3343, %v3341
    %v3470 = vpack.c.b16 %v3344, %v3342
    %v3471 = vpack.c.b16 %v3347, %v3345
    %v3472 = vpack.c.b16 %v3348, %v3346
    %v3473 = vpack.c.b16 %v3351, %v3349
    %v3474 = vpack.c.b16 %v3352, %v3350
    %v3475 = vpack.c.b16 %v3355, %v3353
    %v3476 = vpack.c.b16 %v3356, %v3354
    %v3477 = vpack.c.b16 %v3359, %v3357
    %v3478 = vpack.c.b16 %v3360, %v3358
    %v3479 = vpack.c.b16 %v3363, %v3361
    %v3480 = vpack.c.b16 %v3364, %v3362
    %v3481 = vpack.c.b16 %v3367, %v3365
    %v3482 = vpack.c.b16 %v3368, %v3366
    %v3483 = vpack.c.b16 %v3371, %v3369
    %v3484 = vpack.c.b16 %v3372, %v3370
    %v3485 = vpack.c.b16 %v3375, %v3373
    %v3486 = vpack.c.b16 %v3376, %v3374
    %v3487 = vpack.c.b16 %v3379, %v3377
    %v3488 = vpack.c.b16 %v3380, %v3378
    %v3489 = vpack.c.b16 %v3383, %v3381
    %v3490 = vpack.c.b16 %v3384, %v3382
    %v3491 = vpack.c.b16 %v3387, %v3385
    %v3492 = vpack.c.b16 %v3388, %v3386
    %v3493 = vpack.c.b16 %v3391, %v3389
    %v3494 = vpack.c.b16 %v3392, %v3390
    %v3495 = vpack.c.b16 %v3395, %v3393
    %v3496 = vpack.c.b16 %v3396, %v3394
    %v3497 = vpack.c.b16 %v3399, %v3397
    %v3498 = vpack.c.b16 %v3400, %v3398
    %v3499 = vpack.c.b16 %v3403, %v3401
    %v3500 = vpack.c.b16 %v3404, %v3402
    %v3501 = vpack.c.b16 %v3407, %v3405
    %v3502 = vpack.c.b16 %v3408, %v3406
    %v3503 = vpack.c.b16 %v3411, %v3409
    %v3504 = vpack.c.b16 %v3412, %v3410
    %v3505 = vpack.c.b16 %v3415, %v3413
    %v3506 = vpack.c.b16 %v3416, %v3414
    %v3507 = vpack.c.b16 %v3419, %v3417
    %v3508 = vpack.c.b16 %v3420, %v3418
    %v3509 = vpack.c.b16 %v3423, %v3421
    %v3510 = vpack.c.b16 %v3424, %v3422
    %v3511 = vpack.c.b16 %v3427, %v3425
    %v3512 = vpack.c.b16 %v3428, %v3426
    %v3513 = vpack.c.b16 %v3431, %v3429
    %v3514 = vpack.c.b16 %v3432, %v3430
    %v3515 = vpack.c.b16 %v3435, %v3433
    %v3516 = vpack.c.b16 %v3436, %v3434
    %v3517 = vpack.c.b16 %v3439, %v3437
    %v3518 = vpack.c.b16 %v3440, %v3438
    %v3519 = vpack.c.b16 %v3443, %v3441
    %v3520 = vpack.c.b16 %v3444, %v3442
    %v3521 = vpack.c.b16 %v3447, %v3445
    %v3522 = vpack.c.b16 %v3448, %v3446
    %v3523 = vpack.c.b16 %v3451, %v3449
    %v3524 = vpack.c.b16 %v3452, %v3450
    %v3525 = vpack.c.b16 %v3455, %v3453
    %v3526 = vpack.c.b16 %v3456, %v3454
    %v3527 = vpack.c.b16 %v3459, %v3457
    %v3528 = vpack.c.b16 %v3460, %v3458
    %v3529 = vpack.c.b16 %v3463, %v3461
    %v3530 = vpack.c.b16 %v3464, %v3462
    %v3531 = vpack.c.b16 %v3467, %v3465
    %v3532 = vpack.c.b16 %v3468, %v3466
    %3597 = vmatprep.subr.bf16.mxu0 %v3470
    %3598 = vmatpush1.bf16.msra.mxu0 %v3469
    %3599 = vmatprep.subr.bf16.mxu0 %v3472
    %3600 = vmatpush1.bf16.msra.mxu0 %v3471
    %3601 = vmatprep.subr.bf16.mxu0 %v3474
    %3602 = vmatpush1.bf16.msra.mxu0 %v3473
    %3603 = vmatprep.subr.bf16.mxu0 %v3476
    %3604 = vmatpush1.bf16.msra.mxu0 %v3475
    %3605 = vmatprep.subr.bf16.mxu0 %v3478
    %3606 = vmatpush1.bf16.msra.mxu0 %v3477
    %3607 = vmatprep.subr.bf16.mxu0 %v3480
    %3608 = vmatpush1.bf16.msra.mxu0 %v3479
    %3609 = vmatprep.subr.bf16.mxu0 %v3482
    %3610 = vmatpush1.bf16.msra.mxu0 %v3481
    %3611 = vmatprep.subr.bf16.mxu0 %v3484
    %3612 = vmatpush1.bf16.msra.mxu0 %v3483
    %3613 = vmatprep.subr.bf16.mxu0 %v3486
    %3614 = vmatpush1.bf16.msra.mxu0 %v3485
    %3615 = vmatprep.subr.bf16.mxu0 %v3488
    %3616 = vmatpush1.bf16.msra.mxu0 %v3487
    %3617 = vmatprep.subr.bf16.mxu0 %v3490
    %3618 = vmatpush1.bf16.msra.mxu0 %v3489
    %3619 = vmatprep.subr.bf16.mxu0 %v3492
    %3620 = vmatpush1.bf16.msra.mxu0 %v3491
    %3621 = vmatprep.subr.bf16.mxu0 %v3494
    %3622 = vmatpush1.bf16.msra.mxu0 %v3493
    %3623 = vmatprep.subr.bf16.mxu0 %v3496
    %3624 = vmatpush1.bf16.msra.mxu0 %v3495
    %3625 = vmatprep.subr.bf16.mxu0 %v3498
    %3626 = vmatpush1.bf16.msra.mxu0 %v3497
    %3627 = vmatprep.subr.bf16.mxu0 %v3500
    %3628 = vmatpush1.bf16.msra.mxu0 %v3499
    %3629 = vmatprep.mubr.bf16.mxu0 %v3198
    %3630 = vmatmul.mubr.bf16.gmra.mrb[0].mxu0 %v3197
    %v3631 = vpop.f32.mrb[0].mxu0
    %v3632 = vadd.f32 %v3270, %v3631
    %v3633 = vpop.f32.mrb[0].mxu0
    %v3634 = vadd.f32 %v3274, %v3633
    %v3635 = vpop.f32.mrb[0].mxu0
    %v3636 = vpop.f32.mrb[0].mxu0
    %3637 = vdwg.mxu0
    %3638 = vmatprep.subr.bf16.mxu0 %v3502
    %3639 = vmatpush1.bf16.msra.mxu0 %v3501
    %3640 = vmatprep.subr.bf16.mxu0 %v3504
    %3641 = vmatpush1.bf16.msra.mxu0 %v3503
    %3642 = vmatprep.subr.bf16.mxu0 %v3506
    %3643 = vmatpush1.bf16.msra.mxu0 %v3505
    %3644 = vmatprep.subr.bf16.mxu0 %v3508
    %3645 = vmatpush1.bf16.msra.mxu0 %v3507
    %3646 = vmatprep.subr.bf16.mxu0 %v3510
    %3647 = vmatpush1.bf16.msra.mxu0 %v3509
    %3648 = vmatprep.subr.bf16.mxu0 %v3512
    %3649 = vmatpush1.bf16.msra.mxu0 %v3511
    %3650 = vmatprep.subr.bf16.mxu0 %v3514
    %3651 = vmatpush1.bf16.msra.mxu0 %v3513
    %3652 = vmatprep.subr.bf16.mxu0 %v3516
    %3653 = vmatpush1.bf16.msra.mxu0 %v3515
    %3654 = vmatprep.subr.bf16.mxu0 %v3518
    %3655 = vmatpush1.bf16.msra.mxu0 %v3517
    %3656 = vmatprep.subr.bf16.mxu0 %v3520
    %3657 = vmatpush1.bf16.msra.mxu0 %v3519
    %3658 = vmatprep.subr.bf16.mxu0 %v3522
    %3659 = vmatpush1.bf16.msra.mxu0 %v3521
    %3660 = vmatprep.subr.bf16.mxu0 %v3524
    %3661 = vmatpush1.bf16.msra.mxu0 %v3523
    %3662 = vmatprep.subr.bf16.mxu0 %v3526
    %3663 = vmatpush1.bf16.msra.mxu0 %v3525
    %3664 = vmatprep.subr.bf16.mxu0 %v3528
    %3665 = vmatpush1.bf16.msra.mxu0 %v3527
    %3666 = vmatprep.subr.bf16.mxu0 %v3530
    %3667 = vmatpush1.bf16.msra.mxu0 %v3529
    %3668 = vmatprep.subr.bf16.mxu0 %v3532
    %3669 = vmatpush1.bf16.msra.mxu0 %v3531
    %3670 = vmatprep.mubr.bf16.mxu0 %v3200
    %3671 = vmatmul.mubr.bf16.gmra.mrb[0].mxu0 %v3199
    %v3672 = vpop.f32.mrb[0].mxu0
    %v3673 = vadd.f32 %v3632, %v3672
    %v3674 = vpop.f32.mrb[0].mxu0
    %v3675 = vadd.f32 %v3634, %v3674
    %v3676 = vpop.f32.mrb[0].mxu0
    %v3677 = vpop.f32.mrb[0].mxu0
    %3678 = vdwg.mxu0
    %v3679 = vsel %vm257, %v3193, 0.0
    %v3680 = vrot.slane %v3679, 4
    %v3681 = vadd.f32 %v3679, %v3680
    %v3682 = vrot.slane %v3681, 2
    %v3683 = vadd.f32 %v3681, %v3682
    %v3684 = vrot.slane %v3683, 1
    %v3685 = vadd.f32 %v3683, %v3684
    %v3686 = vsel %vm257, %v3194, 0.0
    %v3687 = vrot.slane %v3686, 4
    %v3688 = vadd.f32 %v3686, %v3687
    %v3689 = vrot.slane %v3688, 2
    %v3690 = vadd.f32 %v3688, %v3689
    %v3691 = vrot.slane %v3690, 1
    %v3692 = vadd.f32 %v3690, %v3691
    %v3693 = vsel %vm257, %v3195, 0.0
    %v3694 = vrot.slane %v3693, 4
    %v3695 = vadd.f32 %v3693, %v3694
    %v3696 = vrot.slane %v3695, 2
    %v3697 = vadd.f32 %v3695, %v3696
    %v3698 = vrot.slane %v3697, 1
    %v3699 = vadd.f32 %v3697, %v3698
    %v3700 = vsel %vm257, %v3196, 0.0
    %v3701 = vrot.slane %v3700, 4
    %v3702 = vadd.f32 %v3700, %v3701
    %v3703 = vrot.slane %v3702, 2
    %v3704 = vadd.f32 %v3702, %v3703
    %v3705 = vrot.slane %v3704, 1
    %v3706 = vadd.f32 %v3704, %v3705
    %v3707 = vmul.f32 %v3193, %v3193
    %v3708 = vmul.f32 %v3194, %v3194
    %v3709 = vmul.f32 %v3195, %v3195
    %v3710 = vmul.f32 %v3196, %v3196
    %v3711 = vsel %vm257, %v3707, 0.0
    %v3712 = vrot.slane %v3711, 4
    %v3713 = vadd.f32 %v3711, %v3712
    %v3714 = vrot.slane %v3713, 2
    %v3715 = vadd.f32 %v3713, %v3714
    %v3716 = vrot.slane %v3715, 1
    %v3717 = vadd.f32 %v3715, %v3716
    %v3718 = vsel %vm257, %v3708, 0.0
    %v3719 = vrot.slane %v3718, 4
    %v3720 = vadd.f32 %v3718, %v3719
    %v3721 = vrot.slane %v3720, 2
    %v3722 = vadd.f32 %v3720, %v3721
    %v3723 = vrot.slane %v3722, 1
    %v3724 = vadd.f32 %v3722, %v3723
    %v3725 = vsel %vm257, %v3709, 0.0
    %v3726 = vrot.slane %v3725, 4
    %v3727 = vadd.f32 %v3725, %v3726
    %v3728 = vrot.slane %v3727, 2
    %v3729 = vadd.f32 %v3727, %v3728
    %v3730 = vrot.slane %v3729, 1
    %v3731 = vadd.f32 %v3729, %v3730
    %v3732 = vsel %vm257, %v3710, 0.0
    %v3733 = vrot.slane %v3732, 4
    %v3734 = vadd.f32 %v3732, %v3733
    %v3735 = vrot.slane %v3734, 2
    %v3736 = vadd.f32 %v3734, %v3735
    %v3737 = vrot.slane %v3736, 1
    %v3738 = vadd.f32 %v3736, %v3737
    %v3739 = vsel %vm1047, %v3685, %v3717
    %v3740 = vsel %vm1047, %v3692, %v3724
    %v3741 = vsel %vm1047, %v3699, %v3731
    %v3742 = vsel %vm1047, %v3706, %v3738
    %3743 = vmatprep.subr.mxu0 0.0
    %3744 = vmatpush1.msra.mxu0 %v1816
    %3745 = vmatprep.subr.mxu0 0.0
    %3746 = vmatpush1.msra.mxu0 %v1817
    %3747 = vmatprep.subr.mxu0 0.0
    %3748 = vmatpush1.msra.mxu0 %v1818
    %3749 = vmatprep.subr.mxu0 0.0
    %3750 = vmatpush1.msra.mxu0 %v1819
    %3751 = vmatprep.subr.mxu0 0.0
    %3752 = vmatpush1.msra.mxu0 %v1820
    %3753 = vmatprep.subr.mxu0 0.0
    %3754 = vmatpush1.msra.mxu0 %v1821
    %3755 = vmatprep.subr.mxu0 0.0
    %3756 = vmatpush1.msra.mxu0 %v1822
    %3757 = vmatprep.subr.mxu0 0.0
    %3758 = vmatpush1.msra.mxu0 %v1823
    %3759 = vmatprep.subr.mxu0 0.0
    %3760 = vmatpush1.msra.mxu0 %v1824
    %3761 = vmatprep.subr.mxu0 0.0
    %3762 = vmatpush1.msra.mxu0 %v1825
    %3763 = vmatprep.subr.mxu0 0.0
    %3764 = vmatpush1.msra.mxu0 %v1826
    %3765 = vmatprep.subr.mxu0 0.0
    %3766 = vmatpush1.msra.mxu0 %v1827
    %3767 = vmatprep.subr.mxu0 0.0
    %3768 = vmatpush1.msra.mxu0 %v1828
    %3769 = vmatprep.subr.mxu0 0.0
    %3770 = vmatpush1.msra.mxu0 %v1829
    %3771 = vmatprep.subr.mxu0 0.0
    %3772 = vmatpush1.msra.mxu0 %v1830
    %3773 = vmatprep.subr.mxu0 0.0
    %3774 = vmatpush1.msra.mxu0 %v1831
    %3775 = vmatprep.subr.mxu0 0.0
    %3776 = vmatpush1.msra.mxu0 %v1832
    %3777 = vmatprep.subr.mxu0 0.0
    %3778 = vmatpush1.msra.mxu0 %v1833
    %3779 = vmatprep.subr.mxu0 0.0
    %3780 = vmatpush1.msra.mxu0 %v1834
    %3781 = vmatprep.subr.mxu0 0.0
    %3782 = vmatpush1.msra.mxu0 %v1835
    %3783 = vmatprep.subr.mxu0 0.0
    %3784 = vmatpush1.msra.mxu0 %v1836
    %3785 = vmatprep.subr.mxu0 0.0
    %3786 = vmatpush1.msra.mxu0 %v1837
    %3787 = vmatprep.subr.mxu0 0.0
    %3788 = vmatpush1.msra.mxu0 %v1838
    %3789 = vmatprep.subr.mxu0 0.0
    %3790 = vmatpush1.msra.mxu0 %v1839
    %3791 = vmatprep.subr.mxu0 0.0
    %3792 = vmatpush1.msra.mxu0 %v1840
    %3793 = vmatprep.subr.mxu0 0.0
    %3794 = vmatpush1.msra.mxu0 %v1841
    %3795 = vmatprep.subr.mxu0 0.0
    %3796 = vmatpush1.msra.mxu0 %v1842
    %3797 = vmatprep.subr.mxu0 0.0
    %3798 = vmatpush1.msra.mxu0 %v1843
    %3799 = vmatprep.subr.mxu0 0.0
    %3800 = vmatpush1.msra.mxu0 %v1844
    %3801 = vmatprep.subr.mxu0 0.0
    %3802 = vmatpush1.msra.mxu0 %v1845
    %3803 = vmatprep.subr.mxu0 0.0
    %3804 = vmatpush1.msra.mxu0 %v1846
    %3805 = vmatprep.subr.mxu0 0.0
    %3806 = vmatpush1.msra.mxu0 %v1847
    %3807 = vmatprep.mubr.f32.mxu0 %v3740
    %3808 = vmatmul.mubr.f32.gmra.mrb[0].mxu0 %v3739
    %v3809 = vpop.f32.mrb[0].mxu0
    %v3810 = vadd.f32 0.0, %v3809
    %v3811 = vpop.f32.mrb[0].mxu0
    %3812 = vdwg.mxu0
    %3813 = vmatprep.subr.mxu0 0.0
    %3814 = vmatpush1.msra.mxu0 %v1848
    %3815 = vmatprep.subr.mxu0 0.0
    %3816 = vmatpush1.msra.mxu0 %v1849
    %3817 = vmatprep.subr.mxu0 0.0
    %3818 = vmatpush1.msra.mxu0 %v1850
    %3819 = vmatprep.subr.mxu0 0.0
    %3820 = vmatpush1.msra.mxu0 %v1851
    %3821 = vmatprep.subr.mxu0 0.0
    %3822 = vmatpush1.msra.mxu0 %v1852
    %3823 = vmatprep.subr.mxu0 0.0
    %3824 = vmatpush1.msra.mxu0 %v1853
    %3825 = vmatprep.subr.mxu0 0.0
    %3826 = vmatpush1.msra.mxu0 %v1854
    %3827 = vmatprep.subr.mxu0 0.0
    %3828 = vmatpush1.msra.mxu0 %v1855
    %3829 = vmatprep.subr.mxu0 0.0
    %3830 = vmatpush1.msra.mxu0 %v1856
    %3831 = vmatprep.subr.mxu0 0.0
    %3832 = vmatpush1.msra.mxu0 %v1857
    %3833 = vmatprep.subr.mxu0 0.0
    %3834 = vmatpush1.msra.mxu0 %v1858
    %3835 = vmatprep.subr.mxu0 0.0
    %3836 = vmatpush1.msra.mxu0 %v1859
    %3837 = vmatprep.subr.mxu0 0.0
    %3838 = vmatpush1.msra.mxu0 %v1860
    %3839 = vmatprep.subr.mxu0 0.0
    %3840 = vmatpush1.msra.mxu0 %v1861
    %3841 = vmatprep.subr.mxu0 0.0
    %3842 = vmatpush1.msra.mxu0 %v1862
    %3843 = vmatprep.subr.mxu0 0.0
    %3844 = vmatpush1.msra.mxu0 %v1863
    %3845 = vmatprep.subr.mxu0 0.0
    %3846 = vmatpush1.msra.mxu0 %v1864
    %3847 = vmatprep.subr.mxu0 0.0
    %3848 = vmatpush1.msra.mxu0 %v1865
    %3849 = vmatprep.subr.mxu0 0.0
    %3850 = vmatpush1.msra.mxu0 %v1866
    %3851 = vmatprep.subr.mxu0 0.0
    %3852 = vmatpush1.msra.mxu0 %v1867
    %3853 = vmatprep.subr.mxu0 0.0
    %3854 = vmatpush1.msra.mxu0 %v1868
    %3855 = vmatprep.subr.mxu0 0.0
    %3856 = vmatpush1.msra.mxu0 %v1869
    %3857 = vmatprep.subr.mxu0 0.0
    %3858 = vmatpush1.msra.mxu0 %v1870
    %3859 = vmatprep.subr.mxu0 0.0
    %3860 = vmatpush1.msra.mxu0 %v1871
    %3861 = vmatprep.subr.mxu0 0.0
    %3862 = vmatpush1.msra.mxu0 %v1872
    %3863 = vmatprep.subr.mxu0 0.0
    %3864 = vmatpush1.msra.mxu0 %v1873
    %3865 = vmatprep.subr.mxu0 0.0
    %3866 = vmatpush1.msra.mxu0 %v1874
    %3867 = vmatprep.subr.mxu0 0.0
    %3868 = vmatpush1.msra.mxu0 %v1875
    %3869 = vmatprep.subr.mxu0 0.0
    %3870 = vmatpush1.msra.mxu0 %v1876
    %3871 = vmatprep.subr.mxu0 0.0
    %3872 = vmatpush1.msra.mxu0 %v1877
    %3873 = vmatprep.subr.mxu0 0.0
    %3874 = vmatpush1.msra.mxu0 %v1878
    %3875 = vmatprep.subr.mxu0 0.0
    %3876 = vmatpush1.msra.mxu0 %v1879
    %3877 = vmatprep.mubr.f32.mxu0 %v3742
    %3878 = vmatmul.mubr.f32.gmra.mrb[0].mxu0 %v3741
    %v3879 = vpop.f32.mrb[0].mxu0
    %v3880 = vadd.f32 %v3810, %v3879
    %v3881 = vpop.f32.mrb[0].mxu0
    %3882 = vdwg.mxu0
    %v3883 = vmul.f32 %v3880, 0.015625
    %v3884 = vmul.f32 %v3883, %v3883
    %v3886 = vrot.slane %v3884, 7
    %v3888 = vsub.f32 %v3883, %v3886
    %v3889 = vadd.f32 %v3888, 1e-05
    %v3890 = vrsqrt.pop %v3889
    %v3891 = vsel %vm1047, %v3883, %v3890
    %v3893 = vsel %vm2045, %v3891, 0
    %3895 = vmatprep.subr.mxu0 %v2030
    %3896 = vmatpush1.msra.mxu0 %v2029
    %3897 = vmatprep.subr.mxu0 %v2034
    %3898 = vmatpush1.msra.mxu0 %v2033
    %3899 = vmatprep.subr.mxu0 %v2038
    %3900 = vmatpush1.msra.mxu0 %v2037
    %3901 = vmatprep.subr.mxu0 %v2042
    %3902 = vmatpush1.msra.mxu0 %v2041
    %3903 = vmatprep.subr.mxu0 0.0
    %3904 = vmatpush1.msra.mxu0 0.0
    %3905 = vmatprep.subr.mxu0 0.0
    %3906 = vmatpush1.msra.mxu0 0.0
    %3907 = vmatprep.subr.mxu0 0.0
    %3908 = vmatpush1.msra.mxu0 0.0
    %3909 = vmatprep.subr.mxu0 0.0
    %3910 = vmatpush1.msra.mxu0 0.0
    %3911 = vmatprep.subr.mxu0 0.0
    %3912 = vmatpush1.msra.mxu0 0.0
    %3913 = vmatprep.subr.mxu0 0.0
    %3914 = vmatpush1.msra.mxu0 0.0
    %3915 = vmatprep.subr.mxu0 0.0
    %3916 = vmatpush1.msra.mxu0 0.0
    %3917 = vmatprep.subr.mxu0 0.0
    %3918 = vmatpush1.msra.mxu0 0.0
    %3919 = vmatprep.subr.mxu0 0.0
    %3920 = vmatpush1.msra.mxu0 0.0
    %3921 = vmatprep.subr.mxu0 0.0
    %3922 = vmatpush1.msra.mxu0 0.0
    %3923 = vmatprep.subr.mxu0 0.0
    %3924 = vmatpush1.msra.mxu0 0.0
    %3925 = vmatprep.subr.mxu0 0.0
    %3926 = vmatpush1.msra.mxu0 0.0
    %3927 = vmatprep.subr.mxu0 0.0
    %3928 = vmatpush1.msra.mxu0 0.0
    %3929 = vmatprep.subr.mxu0 0.0
    %3930 = vmatpush1.msra.mxu0 0.0
    %3931 = vmatprep.subr.mxu0 0.0
    %3932 = vmatpush1.msra.mxu0 0.0
    %3933 = vmatprep.subr.mxu0 0.0
    %3934 = vmatpush1.msra.mxu0 0.0
    %3935 = vmatprep.subr.mxu0 0.0
    %3936 = vmatpush1.msra.mxu0 0.0
    %3937 = vmatprep.subr.mxu0 0.0
    %3938 = vmatpush1.msra.mxu0 0.0
    %3939 = vmatprep.subr.mxu0 0.0
    %3940 = vmatpush1.msra.mxu0 0.0
    %3941 = vmatprep.subr.mxu0 0.0
    %3942 = vmatpush1.msra.mxu0 0.0
    %3943 = vmatprep.subr.mxu0 0.0
    %3944 = vmatpush1.msra.mxu0 0.0
    %3945 = vmatprep.subr.mxu0 0.0
    %3946 = vmatpush1.msra.mxu0 0.0
    %3947 = vmatprep.subr.mxu0 0.0
    %3948 = vmatpush1.msra.mxu0 0.0
    %3949 = vmatprep.subr.mxu0 0.0
    %3950 = vmatpush1.msra.mxu0 0.0
    %3951 = vmatprep.subr.mxu0 0.0
    %3952 = vmatpush1.msra.mxu0 0.0
    %3953 = vmatprep.subr.mxu0 0.0
    %3954 = vmatpush1.msra.mxu0 0.0
    %3955 = vmatprep.subr.mxu0 0.0
    %3956 = vmatpush1.msra.mxu0 0.0
    %3957 = vmatprep.subr.mxu0 0.0
    %3958 = vmatpush1.msra.mxu0 0.0
    %3959 = vmatprep.mubr.f32.mxu0 0.0
    %3960 = vmatmul.mubr.f32.gmra.mrb[0].mxu0 %v3893
    %v3961 = vpop.f32.mrb[0].mxu0
    %v3962 = vadd.f32 0.0, %v3961
    %v3963 = vpop.f32.mrb[0].mxu0
    %v3964 = vadd.f32 0.0, %v3963
    %3965 = vdwg.mxu0
    %3966 = vmatprep.subr.mxu0 %v2032
    %3967 = vmatpush1.msra.mxu0 %v2031
    %3968 = vmatprep.subr.mxu0 %v2036
    %3969 = vmatpush1.msra.mxu0 %v2035
    %3970 = vmatprep.subr.mxu0 %v2040
    %3971 = vmatpush1.msra.mxu0 %v2039
    %3972 = vmatprep.subr.mxu0 %v2044
    %3973 = vmatpush1.msra.mxu0 %v2043
    %3974 = vmatprep.subr.mxu0 0.0
    %3975 = vmatpush1.msra.mxu0 0.0
    %3976 = vmatprep.subr.mxu0 0.0
    %3977 = vmatpush1.msra.mxu0 0.0
    %3978 = vmatprep.subr.mxu0 0.0
    %3979 = vmatpush1.msra.mxu0 0.0
    %3980 = vmatprep.subr.mxu0 0.0
    %3981 = vmatpush1.msra.mxu0 0.0
    %3982 = vmatprep.subr.mxu0 0.0
    %3983 = vmatpush1.msra.mxu0 0.0
    %3984 = vmatprep.subr.mxu0 0.0
    %3985 = vmatpush1.msra.mxu0 0.0
    %3986 = vmatprep.subr.mxu0 0.0
    %3987 = vmatpush1.msra.mxu0 0.0
    %3988 = vmatprep.subr.mxu0 0.0
    %3989 = vmatpush1.msra.mxu0 0.0
    %3990 = vmatprep.subr.mxu0 0.0
    %3991 = vmatpush1.msra.mxu0 0.0
    %3992 = vmatprep.subr.mxu0 0.0
    %3993 = vmatpush1.msra.mxu0 0.0
    %3994 = vmatprep.subr.mxu0 0.0
    %3995 = vmatpush1.msra.mxu0 0.0
    %3996 = vmatprep.subr.mxu0 0.0
    %3997 = vmatpush1.msra.mxu0 0.0
    %3998 = vmatprep.subr.mxu0 0.0
    %3999 = vmatpush1.msra.mxu0 0.0
    %4000 = vmatprep.subr.mxu0 0.0
    %4001 = vmatpush1.msra.mxu0 0.0
    %4002 = vmatprep.subr.mxu0 0.0
    %4003 = vmatpush1.msra.mxu0 0.0
    %4004 = vmatprep.subr.mxu0 0.0
    %4005 = vmatpush1.msra.mxu0 0.0
    %4006 = vmatprep.subr.mxu0 0.0
    %4007 = vmatpush1.msra.mxu0 0.0
    %4008 = vmatprep.subr.mxu0 0.0
    %4009 = vmatpush1.msra.mxu0 0.0
    %4010 = vmatprep.subr.mxu0 0.0
    %4011 = vmatpush1.msra.mxu0 0.0
    %4012 = vmatprep.subr.mxu0 0.0
    %4013 = vmatpush1.msra.mxu0 0.0
    %4014 = vmatprep.subr.mxu0 0.0
    %4015 = vmatpush1.msra.mxu0 0.0
    %4016 = vmatprep.subr.mxu0 0.0
    %4017 = vmatpush1.msra.mxu0 0.0
    %4018 = vmatprep.subr.mxu0 0.0
    %4019 = vmatpush1.msra.mxu0 0.0
    %4020 = vmatprep.subr.mxu0 0.0
    %4021 = vmatpush1.msra.mxu0 0.0
    %4022 = vmatprep.subr.mxu0 0.0
    %4023 = vmatpush1.msra.mxu0 0.0
    %4024 = vmatprep.subr.mxu0 0.0
    %4025 = vmatpush1.msra.mxu0 0.0
    %4026 = vmatprep.subr.mxu0 0.0
    %4027 = vmatpush1.msra.mxu0 0.0
    %4028 = vmatprep.subr.mxu0 0.0
    %4029 = vmatpush1.msra.mxu0 0.0
    %4030 = vmatprep.mubr.f32.mxu0 0.0
    %4031 = vmatmul.mubr.f32.gmra.mrb[0].mxu0 %v3893
    %v4032 = vpop.f32.mrb[0].mxu0
    %v4033 = vadd.f32 0.0, %v4032
    %v4034 = vpop.f32.mrb[0].mxu0
    %v4035 = vadd.f32 0.0, %v4034
    %4036 = vdwg.mxu0
    %v4037 = vlaneseq
    %v4038 = vshrl.u32 %v4037, 7
    %v4039 = vsub.s32 0, %v4038
    %v4040 = vrot.slane %v3962, %v4039
    %v4041 = vlaneseq
    %v4042 = vshrl.u32 %v4041, 7
    %v4043 = vsub.s32 0, %v4042
    %v4044 = vrot.slane %v3964, %v4043
    %v4045 = vlaneseq
    %v4046 = vshrl.u32 %v4045, 7
    %v4047 = vsub.s32 0, %v4046
    %v4048 = vrot.slane %v4033, %v4047
    %v4049 = vlaneseq
    %v4050 = vshrl.u32 %v4049, 7
    %v4051 = vsub.s32 0, %v4050
    %v4052 = vrot.slane %v4035, %v4051
    %v4053 = vsub.f32 %v3193, %v4040
    %v4054 = vsub.f32 %v3194, %v4044
    %v4055 = vsub.f32 %v3195, %v4048
    %v4056 = vsub.f32 %v3196, %v4052
    %v4057 = vlaneseq
    %v4058 = vshrl.u32 %v4057, 7
    %v4059 = vsub.s32 1, %v4058
    %v4060 = vrot.slane %v3962, %v4059
    %v4061 = vlaneseq
    %v4062 = vshrl.u32 %v4061, 7
    %v4063 = vsub.s32 1, %v4062
    %v4064 = vrot.slane %v3964, %v4063
    %v4065 = vlaneseq
    %v4066 = vshrl.u32 %v4065, 7
    %v4067 = vsub.s32 1, %v4066
    %v4068 = vrot.slane %v4033, %v4067
    %v4069 = vlaneseq
    %v4070 = vshrl.u32 %v4069, 7
    %v4071 = vsub.s32 1, %v4070
    %v4072 = vrot.slane %v4035, %v4071
    %v4073 = vmul.f32 %v4053, %v4060
    %v4074 = vmul.f32 %v4054, %v4064
    %v4075 = vmul.f32 %v4055, %v4068
    %v4076 = vmul.f32 %v4056, %v4072
    %v4077 = vmax.f32 %v4073, 0.0
    %v4078 = vmax.f32 %v4074, 0.0
    %v4079 = vmax.f32 %v4075, 0.0
    %v4080 = vmax.f32 %v4076, 0.0
    %v4081 = vpack.c.bf16 %v4077, %v4077
    %v4082 = vpack.c.bf16 %v4078, %v4078
    %v4083 = vpack.c.bf16 %v4079, %v4079
    %v4084 = vpack.c.bf16 %v4080, %v4080
    %v4085 = vld [vmem:[#allocation19] sm:$0xff]
    %v4086 = vld [vmem:[#allocation19 + $0x8] sm:$0xff]
    %v4087 = vld [vmem:[#allocation19 + $0x10] sm:$0xff]
    %v4088 = vld [vmem:[#allocation19 + $0x18] sm:$0xff]
    %v4089 = vld [vmem:[#allocation19 + $0x20] sm:$0xff]
    %v4090 = vld [vmem:[#allocation19 + $0x28] sm:$0xff]
    %v4091 = vld [vmem:[#allocation19 + $0x30] sm:$0xff]
    %v4092 = vld [vmem:[#allocation19 + $0x38] sm:$0xff]
    %v4093 = vld [vmem:[#allocation19 + $0x40] sm:$0xff]
    %v4094 = vld [vmem:[#allocation19 + $0x48] sm:$0xff]
    %v4095 = vld [vmem:[#allocation19 + $0x50] sm:$0xff]
    %v4096 = vld [vmem:[#allocation19 + $0x58] sm:$0xff]
    %v4097 = vld [vmem:[#allocation19 + $0x60] sm:$0xff]
    %v4098 = vld [vmem:[#allocation19 + $0x68] sm:$0xff]
    %v4099 = vld [vmem:[#allocation19 + $0x70] sm:$0xff]
    %v4100 = vld [vmem:[#allocation19 + $0x78] sm:$0xff]
    %v4101 = vld [vmem:[#allocation19 + $0x80] sm:$0xff]
    %v4102 = vld [vmem:[#allocation19 + $0x88] sm:$0xff]
    %v4103 = vld [vmem:[#allocation19 + $0x90] sm:$0xff]
    %v4104 = vld [vmem:[#allocation19 + $0x98] sm:$0xff]
    %v4105 = vld [vmem:[#allocation19 + $0xa0] sm:$0xff]
    %v4106 = vld [vmem:[#allocation19 + $0xa8] sm:$0xff]
    %v4107 = vld [vmem:[#allocation19 + $0xb0] sm:$0xff]
    %v4108 = vld [vmem:[#allocation19 + $0xb8] sm:$0xff]
    %v4109 = vld [vmem:[#allocation19 + $0xc0] sm:$0xff]
    %v4110 = vld [vmem:[#allocation19 + $0xc8] sm:$0xff]
    %v4111 = vld [vmem:[#allocation19 + $0xd0] sm:$0xff]
    %v4112 = vld [vmem:[#allocation19 + $0xd8] sm:$0xff]
    %v4113 = vld [vmem:[#allocation19 + $0xe0] sm:$0xff]
    %v4114 = vld [vmem:[#allocation19 + $0xe8] sm:$0xff]
    %v4115 = vld [vmem:[#allocation19 + $0xf0] sm:$0xff]
    %v4116 = vld [vmem:[#allocation19 + $0xf8] sm:$0xff]
    %v4117 = vld [vmem:[#allocation19 + $0x100] sm:$0xff]
    %v4118 = vld [vmem:[#allocation19 + $0x108] sm:$0xff]
    %v4119 = vld [vmem:[#allocation19 + $0x110] sm:$0xff]
    %v4120 = vld [vmem:[#allocation19 + $0x118] sm:$0xff]
    %v4121 = vld [vmem:[#allocation19 + $0x120] sm:$0xff]
    %v4122 = vld [vmem:[#allocation19 + $0x128] sm:$0xff]
    %v4123 = vld [vmem:[#allocation19 + $0x130] sm:$0xff]
    %v4124 = vld [vmem:[#allocation19 + $0x138] sm:$0xff]
    %v4125 = vld [vmem:[#allocation19 + $0x140] sm:$0xff]
    %v4126 = vld [vmem:[#allocation19 + $0x148] sm:$0xff]
    %v4127 = vld [vmem:[#allocation19 + $0x150] sm:$0xff]
    %v4128 = vld [vmem:[#allocation19 + $0x158] sm:$0xff]
    %v4129 = vld [vmem:[#allocation19 + $0x160] sm:$0xff]
    %v4130 = vld [vmem:[#allocation19 + $0x168] sm:$0xff]
    %v4131 = vld [vmem:[#allocation19 + $0x170] sm:$0xff]
    %v4132 = vld [vmem:[#allocation19 + $0x178] sm:$0xff]
    %v4133 = vld [vmem:[#allocation19 + $0x180] sm:$0xff]
    %v4134 = vld [vmem:[#allocation19 + $0x188] sm:$0xff]
    %v4135 = vld [vmem:[#allocation19 + $0x190] sm:$0xff]
    %v4136 = vld [vmem:[#allocation19 + $0x198] sm:$0xff]
    %v4137 = vld [vmem:[#allocation19 + $0x1a0] sm:$0xff]
    %v4138 = vld [vmem:[#allocation19 + $0x1a8] sm:$0xff]
    %v4139 = vld [vmem:[#allocation19 + $0x1b0] sm:$0xff]
    %v4140 = vld [vmem:[#allocation19 + $0x1b8] sm:$0xff]
    %v4141 = vld [vmem:[#allocation19 + $0x1c0] sm:$0xff]
    %v4142 = vld [vmem:[#allocation19 + $0x1c8] sm:$0xff]
    %v4143 = vld [vmem:[#allocation19 + $0x1d0] sm:$0xff]
    %v4144 = vld [vmem:[#allocation19 + $0x1d8] sm:$0xff]
    %v4145 = vld [vmem:[#allocation19 + $0x1e0] sm:$0xff]
    %v4146 = vld [vmem:[#allocation19 + $0x1e8] sm:$0xff]
    %v4147 = vld [vmem:[#allocation19 + $0x1f0] sm:$0xff]
    %v4148 = vld [vmem:[#allocation19 + $0x1f8] sm:$0xff]
    %v4149 = vld [vmem:[%s15] sm:$0x3]
    %v4151 = vlaneseq
    %v4152 = vshrl.u32 %v4151, 7
    %v4153 = vsub.s32 0, %v4152
    %v4154 = vrot.slane %v4149, %v4153
    %v4155 = vlaneseq
    %v4156 = vshrl.u32 %v4155, 7
    %v4157 = vsub.s32 1, %v4156
    %v4158 = vrot.slane %v4149, %v4157
    %v4225 = vunpack.c.l.b16 %v4085
    %v4226 = vunpack.c.h.b16 %v4085
    %v4227 = vunpack.c.l.b16 %v4086
    %v4228 = vunpack.c.h.b16 %v4086
    %v4229 = vunpack.c.l.b16 %v4087
    %v4230 = vunpack.c.h.b16 %v4087
    %v4231 = vunpack.c.l.b16 %v4088
    %v4232 = vunpack.c.h.b16 %v4088
    %v4233 = vunpack.c.l.b16 %v4089
    %v4234 = vunpack.c.h.b16 %v4089
    %v4235 = vunpack.c.l.b16 %v4090
    %v4236 = vunpack.c.h.b16 %v4090
    %v4237 = vunpack.c.l.b16 %v4091
    %v4238 = vunpack.c.h.b16 %v4091
    %v4239 = vunpack.c.l.b16 %v4092
    %v4240 = vunpack.c.h.b16 %v4092
    %v4241 = vunpack.c.l.b16 %v4093
    %v4242 = vunpack.c.h.b16 %v4093
    %v4243 = vunpack.c.l.b16 %v4094
    %v4244 = vunpack.c.h.b16 %v4094
    %v4245 = vunpack.c.l.b16 %v4095
    %v4246 = vunpack.c.h.b16 %v4095
    %v4247 = vunpack.c.l.b16 %v4096
    %v4248 = vunpack.c.h.b16 %v4096
    %v4249 = vunpack.c.l.b16 %v4097
    %v4250 = vunpack.c.h.b16 %v4097
    %v4251 = vunpack.c.l.b16 %v4098
    %v4252 = vunpack.c.h.b16 %v4098
    %v4253 = vunpack.c.l.b16 %v4099
    %v4254 = vunpack.c.h.b16 %v4099
    %v4255 = vunpack.c.l.b16 %v4100
    %v4256 = vunpack.c.h.b16 %v4100
    %v4257 = vunpack.c.l.b16 %v4101
    %v4258 = vunpack.c.h.b16 %v4101
    %v4259 = vunpack.c.l.b16 %v4102
    %v4260 = vunpack.c.h.b16 %v4102
    %v4261 = vunpack.c.l.b16 %v4103
    %v4262 = vunpack.c.h.b16 %v4103
    %v4263 = vunpack.c.l.b16 %v4104
    %v4264 = vunpack.c.h.b16 %v4104
    %v4265 = vunpack.c.l.b16 %v4105
    %v4266 = vunpack.c.h.b16 %v4105
    %v4267 = vunpack.c.l.b16 %v4106
    %v4268 = vunpack.c.h.b16 %v4106
    %v4269 = vunpack.c.l.b16 %v4107
    %v4270 = vunpack.c.h.b16 %v4107
    %v4271 = vunpack.c.l.b16 %v4108
    %v4272 = vunpack.c.h.b16 %v4108
    %v4273 = vunpack.c.l.b16 %v4109
    %v4274 = vunpack.c.h.b16 %v4109
    %v4275 = vunpack.c.l.b16 %v4110
    %v4276 = vunpack.c.h.b16 %v4110
    %v4277 = vunpack.c.l.b16 %v4111
    %v4278 = vunpack.c.h.b16 %v4111
    %v4279 = vunpack.c.l.b16 %v4112
    %v4280 = vunpack.c.h.b16 %v4112
    %v4281 = vunpack.c.l.b16 %v4113
    %v4282 = vunpack.c.h.b16 %v4113
    %v4283 = vunpack.c.l.b16 %v4114
    %v4284 = vunpack.c.h.b16 %v4114
    %v4285 = vunpack.c.l.b16 %v4115
    %v4286 = vunpack.c.h.b16 %v4115
    %v4287 = vunpack.c.l.b16 %v4116
    %v4288 = vunpack.c.h.b16 %v4116
    %v4289 = vunpack.c.l.b16 %v4117
    %v4290 = vunpack.c.h.b16 %v4117
    %v4291 = vunpack.c.l.b16 %v4118
    %v4292 = vunpack.c.h.b16 %v4118
    %v4293 = vunpack.c.l.b16 %v4119
    %v4294 = vunpack.c.h.b16 %v4119
    %v4295 = vunpack.c.l.b16 %v4120
    %v4296 = vunpack.c.h.b16 %v4120
    %v4297 = vunpack.c.l.b16 %v4121
    %v4298 = vunpack.c.h.b16 %v4121
    %v4299 = vunpack.c.l.b16 %v4122
    %v4300 = vunpack.c.h.b16 %v4122
    %v4301 = vunpack.c.l.b16 %v4123
    %v4302 = vunpack.c.h.b16 %v4123
    %v4303 = vunpack.c.l.b16 %v4124
    %v4304 = vunpack.c.h.b16 %v4124
    %v4305 = vunpack.c.l.b16 %v4125
    %v4306 = vunpack.c.h.b16 %v4125
    %v4307 = vunpack.c.l.b16 %v4126
    %v4308 = vunpack.c.h.b16 %v4126
    %v4309 = vunpack.c.l.b16 %v4127
    %v4310 = vunpack.c.h.b16 %v4127
    %v4311 = vunpack.c.l.b16 %v4128
    %v4312 = vunpack.c.h.b16 %v4128
    %v4313 = vunpack.c.l.b16 %v4129
    %v4314 = vunpack.c.h.b16 %v4129
    %v4315 = vunpack.c.l.b16 %v4130
    %v4316 = vunpack.c.h.b16 %v4130
    %v4317 = vunpack.c.l.b16 %v4131
    %v4318 = vunpack.c.h.b16 %v4131
    %v4319 = vunpack.c.l.b16 %v4132
    %v4320 = vunpack.c.h.b16 %v4132
    %v4321 = vunpack.c.l.b16 %v4133
    %v4322 = vunpack.c.h.b16 %v4133
    %v4323 = vunpack.c.l.b16 %v4134
    %v4324 = vunpack.c.h.b16 %v4134
    %v4325 = vunpack.c.l.b16 %v4135
    %v4326 = vunpack.c.h.b16 %v4135
    %v4327 = vunpack.c.l.b16 %v4136
    %v4328 = vunpack.c.h.b16 %v4136
    %v4329 = vunpack.c.l.b16 %v4137
    %v4330 = vunpack.c.h.b16 %v4137
    %v4331 = vunpack.c.l.b16 %v4138
    %v4332 = vunpack.c.h.b16 %v4138
    %v4333 = vunpack.c.l.b16 %v4139
    %v4334 = vunpack.c.h.b16 %v4139
    %v4335 = vunpack.c.l.b16 %v4140
    %v4336 = vunpack.c.h.b16 %v4140
    %v4337 = vunpack.c.l.b16 %v4141
    %v4338 = vunpack.c.h.b16 %v4141
    %v4339 = vunpack.c.l.b16 %v4142
    %v4340 = vunpack.c.h.b16 %v4142
    %v4341 = vunpack.c.l.b16 %v4143
    %v4342 = vunpack.c.h.b16 %v4143
    %v4343 = vunpack.c.l.b16 %v4144
    %v4344 = vunpack.c.h.b16 %v4144
    %v4345 = vunpack.c.l.b16 %v4145
    %v4346 = vunpack.c.h.b16 %v4145
    %v4347 = vunpack.c.l.b16 %v4146
    %v4348 = vunpack.c.h.b16 %v4146
    %v4349 = vunpack.c.l.b16 %v4147
    %v4350 = vunpack.c.h.b16 %v4147
    %v4351 = vunpack.c.l.b16 %v4148
    %v4352 = vunpack.c.h.b16 %v4148
    %v4353 = vpack.c.b16 %v4227, %v4225
    %v4354 = vpack.c.b16 %v4228, %v4226
    %v4355 = vpack.c.b16 %v4231, %v4229
    %v4356 = vpack.c.b16 %v4232, %v4230
    %v4357 = vpack.c.b16 %v4235, %v4233
    %v4358 = vpack.c.b16 %v4236, %v4234
    %v4359 = vpack.c.b16 %v4239, %v4237
    %v4360 = vpack.c.b16 %v4240, %v4238
    %v4361 = vpack.c.b16 %v4243, %v4241
    %v4362 = vpack.c.b16 %v4244, %v4242
    %v4363 = vpack.c.b16 %v4247, %v4245
    %v4364 = vpack.c.b16 %v4248, %v4246
    %v4365 = vpack.c.b16 %v4251, %v4249
    %v4366 = vpack.c.b16 %v4252, %v4250
    %v4367 = vpack.c.b16 %v4255, %v4253
    %v4368 = vpack.c.b16 %v4256, %v4254
    %v4369 = vpack.c.b16 %v4259, %v4257
    %v4370 = vpack.c.b16 %v4260, %v4258
    %v4371 = vpack.c.b16 %v4263, %v4261
    %v4372 = vpack.c.b16 %v4264, %v4262
    %v4373 = vpack.c.b16 %v4267, %v4265
    %v4374 = vpack.c.b16 %v4268, %v4266
    %v4375 = vpack.c.b16 %v4271, %v4269
    %v4376 = vpack.c.b16 %v4272, %v4270
    %v4377 = vpack.c.b16 %v4275, %v4273
    %v4378 = vpack.c.b16 %v4276, %v4274
    %v4379 = vpack.c.b16 %v4279, %v4277
    %v4380 = vpack.c.b16 %v4280, %v4278
    %v4381 = vpack.c.b16 %v4283, %v4281
    %v4382 = vpack.c.b16 %v4284, %v4282
    %v4383 = vpack.c.b16 %v4287, %v4285
    %v4384 = vpack.c.b16 %v4288, %v4286
    %v4385 = vpack.c.b16 %v4291, %v4289
    %v4386 = vpack.c.b16 %v4292, %v4290
    %v4387 = vpack.c.b16 %v4295, %v4293
    %v4388 = vpack.c.b16 %v4296, %v4294
    %v4389 = vpack.c.b16 %v4299, %v4297
    %v4390 = vpack.c.b16 %v4300, %v4298
    %v4391 = vpack.c.b16 %v4303, %v4301
    %v4392 = vpack.c.b16 %v4304, %v4302
    %v4393 = vpack.c.b16 %v4307, %v4305
    %v4394 = vpack.c.b16 %v4308, %v4306
    %v4395 = vpack.c.b16 %v4311, %v4309
    %v4396 = vpack.c.b16 %v4312, %v4310
    %v4397 = vpack.c.b16 %v4315, %v4313
    %v4398 = vpack.c.b16 %v4316, %v4314
    %v4399 = vpack.c.b16 %v4319, %v4317
    %v4400 = vpack.c.b16 %v4320, %v4318
    %v4401 = vpack.c.b16 %v4323, %v4321
    %v4402 = vpack.c.b16 %v4324, %v4322
    %v4403 = vpack.c.b16 %v4327, %v4325
    %v4404 = vpack.c.b16 %v4328, %v4326
    %v4405 = vpack.c.b16 %v4331, %v4329
    %v4406 = vpack.c.b16 %v4332, %v4330
    %v4407 = vpack.c.b16 %v4335, %v4333
    %v4408 = vpack.c.b16 %v4336, %v4334
    %v4409 = vpack.c.b16 %v4339, %v4337
    %v4410 = vpack.c.b16 %v4340, %v4338
    %v4411 = vpack.c.b16 %v4343, %v4341
    %v4412 = vpack.c.b16 %v4344, %v4342
    %v4413 = vpack.c.b16 %v4347, %v4345
    %v4414 = vpack.c.b16 %v4348, %v4346
    %v4415 = vpack.c.b16 %v4351, %v4349
    %v4416 = vpack.c.b16 %v4352, %v4350
    %4481 = vmatprep.subr.bf16.mxu0 %v4354
    %4482 = vmatpush1.bf16.msra.mxu0 %v4353
    %4483 = vmatprep.subr.bf16.mxu0 %v4356
    %4484 = vmatpush1.bf16.msra.mxu0 %v4355
    %4485 = vmatprep.subr.bf16.mxu0 %v4358
    %4486 = vmatpush1.bf16.msra.mxu0 %v4357
    %4487 = vmatprep.subr.bf16.mxu0 %v4360
    %4488 = vmatpush1.bf16.msra.mxu0 %v4359
    %4489 = vmatprep.subr.bf16.mxu0 %v4362
    %4490 = vmatpush1.bf16.msra.mxu0 %v4361
    %4491 = vmatprep.subr.bf16.mxu0 %v4364
    %4492 = vmatpush1.bf16.msra.mxu0 %v4363
    %4493 = vmatprep.subr.bf16.mxu0 %v4366
    %4494 = vmatpush1.bf16.msra.mxu0 %v4365
    %4495 = vmatprep.subr.bf16.mxu0 %v4368
    %4496 = vmatpush1.bf16.msra.mxu0 %v4367
    %4497 = vmatprep.subr.bf16.mxu0 %v4370
    %4498 = vmatpush1.bf16.msra.mxu0 %v4369
    %4499 = vmatprep.subr.bf16.mxu0 %v4372
    %4500 = vmatpush1.bf16.msra.mxu0 %v4371
    %4501 = vmatprep.subr.bf16.mxu0 %v4374
    %4502 = vmatpush1.bf16.msra.mxu0 %v4373
    %4503 = vmatprep.subr.bf16.mxu0 %v4376
    %4504 = vmatpush1.bf16.msra.mxu0 %v4375
    %4505 = vmatprep.subr.bf16.mxu0 %v4378
    %4506 = vmatpush1.bf16.msra.mxu0 %v4377
    %4507 = vmatprep.subr.bf16.mxu0 %v4380
    %4508 = vmatpush1.bf16.msra.mxu0 %v4379
    %4509 = vmatprep.subr.bf16.mxu0 %v4382
    %4510 = vmatpush1.bf16.msra.mxu0 %v4381
    %4511 = vmatprep.subr.bf16.mxu0 %v4384
    %4512 = vmatpush1.bf16.msra.mxu0 %v4383
    %4513 = vmatprep.mubr.bf16.mxu0 %v4082
    %4514 = vmatmul.mubr.bf16.gmra.mrb[0].mxu0 %v4081
    %v4515 = vpop.f32.mrb[0].mxu0
    %v4516 = vadd.f32 %v4154, %v4515
    %v4517 = vpop.f32.mrb[0].mxu0
    %v4518 = vadd.f32 %v4158, %v4517
    %v4519 = vpop.f32.mrb[0].mxu0
    %v4520 = vpop.f32.mrb[0].mxu0
    %4521 = vdwg.mxu0
    %4522 = vmatprep.subr.bf16.mxu0 %v4386
    %4523 = vmatpush1.bf16.msra.mxu0 %v4385
    %4524 = vmatprep.subr.bf16.mxu0 %v4388
    %4525 = vmatpush1.bf16.msra.mxu0 %v4387
    %4526 = vmatprep.subr.bf16.mxu0 %v4390
    %4527 = vmatpush1.bf16.msra.mxu0 %v4389
    %4528 = vmatprep.subr.bf16.mxu0 %v4392
    %4529 = vmatpush1.bf16.msra.mxu0 %v4391
    %4530 = vmatprep.subr.bf16.mxu0 %v4394
    %4531 = vmatpush1.bf16.msra.mxu0 %v4393
    %4532 = vmatprep.subr.bf16.mxu0 %v4396
    %4533 = vmatpush1.bf16.msra.mxu0 %v4395
    %4534 = vmatprep.subr.bf16.mxu0 %v4398
    %4535 = vmatpush1.bf16.msra.mxu0 %v4397
    %4536 = vmatprep.subr.bf16.mxu0 %v4400
    %4537 = vmatpush1.bf16.msra.mxu0 %v4399
    %4538 = vmatprep.subr.bf16.mxu0 %v4402
    %4539 = vmatpush1.bf16.msra.mxu0 %v4401
    %4540 = vmatprep.subr.bf16.mxu0 %v4404
    %4541 = vmatpush1.bf16.msra.mxu0 %v4403
    %4542 = vmatprep.subr.bf16.mxu0 %v4406
    %4543 = vmatpush1.bf16.msra.mxu0 %v4405
    %4544 = vmatprep.subr.bf16.mxu0 %v4408
    %4545 = vmatpush1.bf16.msra.mxu0 %v4407
    %4546 = vmatprep.subr.bf16.mxu0 %v4410
    %4547 = vmatpush1.bf16.msra.mxu0 %v4409
    %4548 = vmatprep.subr.bf16.mxu0 %v4412
    %4549 = vmatpush1.bf16.msra.mxu0 %v4411
    %4550 = vmatprep.subr.bf16.mxu0 %v4414
    %4551 = vmatpush1.bf16.msra.mxu0 %v4413
    %4552 = vmatprep.subr.bf16.mxu0 %v4416
    %4553 = vmatpush1.bf16.msra.mxu0 %v4415
    %4554 = vmatprep.mubr.bf16.mxu0 %v4084
    %4555 = vmatmul.mubr.bf16.gmra.mrb[0].mxu0 %v4083
    %v4556 = vpop.f32.mrb[0].mxu0
    %v4557 = vadd.f32 %v4516, %v4556
    %v4558 = vpop.f32.mrb[0].mxu0
    %v4559 = vadd.f32 %v4518, %v4558
    %v4560 = vpop.f32.mrb[0].mxu0
    %v4561 = vpop.f32.mrb[0].mxu0
    %4562 = vdwg.mxu0
    %v4563 = vsel %vm257, %v4557, 0.0
    %v4564 = vrot.slane %v4563, 4
    %v4565 = vadd.f32 %v4563, %v4564
    %v4566 = vrot.slane %v4565, 2
    %v4567 = vadd.f32 %v4565, %v4566
    %v4568 = vrot.slane %v4567, 1
    %v4569 = vadd.f32 %v4567, %v4568
    %v4570 = vsel %vm257, %v4559, 0.0
    %v4571 = vrot.slane %v4570, 4
    %v4572 = vadd.f32 %v4570, %v4571
    %v4573 = vrot.slane %v4572, 2
    %v4574 = vadd.f32 %v4572, %v4573
    %v4575 = vrot.slane %v4574, 1
    %v4576 = vadd.f32 %v4574, %v4575
    %v4577 = vmul.f32 %v4557, %v4557
    %v4578 = vmul.f32 %v4559, %v4559
    %v4579 = vsel %vm257, %v4577, 0.0
    %v4580 = vrot.slane %v4579, 4
    %v4581 = vadd.f32 %v4579, %v4580
    %v4582 = vrot.slane %v4581, 2
    %v4583 = vadd.f32 %v4581, %v4582
    %v4584 = vrot.slane %v4583, 1
    %v4585 = vadd.f32 %v4583, %v4584
    %v4586 = vsel %vm257, %v4578, 0.0
    %v4587 = vrot.slane %v4586, 4
    %v4588 = vadd.f32 %v4586, %v4587
    %v4589 = vrot.slane %v4588, 2
    %v4590 = vadd.f32 %v4588, %v4589
    %v4591 = vrot.slane %v4590, 1
    %v4592 = vadd.f32 %v4590, %v4591
    %v4593 = vsel %vm1047, %v4569, %v4585
    %v4594 = vsel %vm1047, %v4576, %v4592
    %4595 = vmatprep.subr.mxu0 0.0
    %4596 = vmatpush1.msra.mxu0 %v1050
    %4597 = vmatprep.subr.mxu0 0.0
    %4598 = vmatpush1.msra.mxu0 %v1051
    %4599 = vmatprep.subr.mxu0 0.0
    %4600 = vmatpush1.msra.mxu0 %v1052
    %4601 = vmatprep.subr.mxu0 0.0
    %4602 = vmatpush1.msra.mxu0 %v1053
    %4603 = vmatprep.subr.mxu0 0.0
    %4604 = vmatpush1.msra.mxu0 %v1054
    %4605 = vmatprep.subr.mxu0 0.0
    %4606 = vmatpush1.msra.mxu0 %v1055
    %4607 = vmatprep.subr.mxu0 0.0
    %4608 = vmatpush1.msra.mxu0 %v1056
    %4609 = vmatprep.subr.mxu0 0.0
    %4610 = vmatpush1.msra.mxu0 %v1057
    %4611 = vmatprep.subr.mxu0 0.0
    %4612 = vmatpush1.msra.mxu0 %v1058
    %4613 = vmatprep.subr.mxu0 0.0
    %4614 = vmatpush1.msra.mxu0 %v1059
    %4615 = vmatprep.subr.mxu0 0.0
    %4616 = vmatpush1.msra.mxu0 %v1060
    %4617 = vmatprep.subr.mxu0 0.0
    %4618 = vmatpush1.msra.mxu0 %v1061
    %4619 = vmatprep.subr.mxu0 0.0
    %4620 = vmatpush1.msra.mxu0 %v1062
    %4621 = vmatprep.subr.mxu0 0.0
    %4622 = vmatpush1.msra.mxu0 %v1063
    %4623 = vmatprep.subr.mxu0 0.0
    %4624 = vmatpush1.msra.mxu0 %v1064
    %4625 = vmatprep.subr.mxu0 0.0
    %4626 = vmatpush1.msra.mxu0 %v1065
    %4627 = vmatprep.subr.mxu0 0.0
    %4628 = vmatpush1.msra.mxu0 %v1066
    %4629 = vmatprep.subr.mxu0 0.0
    %4630 = vmatpush1.msra.mxu0 %v1067
    %4631 = vmatprep.subr.mxu0 0.0
    %4632 = vmatpush1.msra.mxu0 %v1068
    %4633 = vmatprep.subr.mxu0 0.0
    %4634 = vmatpush1.msra.mxu0 %v1069
    %4635 = vmatprep.subr.mxu0 0.0
    %4636 = vmatpush1.msra.mxu0 %v1070
    %4637 = vmatprep.subr.mxu0 0.0
    %4638 = vmatpush1.msra.mxu0 %v1071
    %4639 = vmatprep.subr.mxu0 0.0
    %4640 = vmatpush1.msra.mxu0 %v1072
    %4641 = vmatprep.subr.mxu0 0.0
    %4642 = vmatpush1.msra.mxu0 %v1073
    %4643 = vmatprep.subr.mxu0 0.0
    %4644 = vmatpush1.msra.mxu0 %v1074
    %4645 = vmatprep.subr.mxu0 0.0
    %4646 = vmatpush1.msra.mxu0 %v1075
    %4647 = vmatprep.subr.mxu0 0.0
    %4648 = vmatpush1.msra.mxu0 %v1076
    %4649 = vmatprep.subr.mxu0 0.0
    %4650 = vmatpush1.msra.mxu0 %v1077
    %4651 = vmatprep.subr.mxu0 0.0
    %4652 = vmatpush1.msra.mxu0 %v1078
    %4653 = vmatprep.subr.mxu0 0.0
    %4654 = vmatpush1.msra.mxu0 %v1079
    %4655 = vmatprep.subr.mxu0 0.0
    %4656 = vmatpush1.msra.mxu0 %v1080
    %4657 = vmatprep.subr.mxu0 0.0
    %4658 = vmatpush1.msra.mxu0 %v1081
    %4659 = vmatprep.mubr.f32.mxu0 %v4594
    %4660 = vmatmul.mubr.f32.gmra.mrb[0].mxu0 %v4593
    %v4661 = vpop.f32.mrb[0].mxu0
    %v4662 = vadd.f32 0.0, %v4661
    %v4663 = vpop.f32.mrb[0].mxu0
    %4664 = vdwg.mxu0
    %v4665 = vmul.f32 %v4662, 0.015625
    %v4666 = vmul.f32 %v4665, %v4665
    %v4668 = vrot.slane %v4666, 7
    %v4670 = vsub.f32 %v4665, %v4668
    %v4671 = vadd.f32 %v4670, 1e-05
    %v4672 = vrsqrt.pop %v4671
    %v4673 = vsel %vm1047, %v4665, %v4672
    %v4675 = vsel %vm1165, %v4673, 0
    %4677 = vmatprep.subr.mxu0 %v1162
    %4678 = vmatpush1.msra.mxu0 %v1161
    %4679 = vmatprep.subr.mxu0 %v1164
    %4680 = vmatpush1.msra.mxu0 %v1163
    %4681 = vmatprep.subr.mxu0 0.0
    %4682 = vmatpush1.msra.mxu0 0.0
    %4683 = vmatprep.subr.mxu0 0.0
    %4684 = vmatpush1.msra.mxu0 0.0
    %4685 = vmatprep.subr.mxu0 0.0
    %4686 = vmatpush1.msra.mxu0 0.0
    %4687 = vmatprep.subr.mxu0 0.0
    %4688 = vmatpush1.msra.mxu0 0.0
    %4689 = vmatprep.subr.mxu0 0.0
    %4690 = vmatpush1.msra.mxu0 0.0
    %4691 = vmatprep.subr.mxu0 0.0
    %4692 = vmatpush1.msra.mxu0 0.0
    %4693 = vmatprep.subr.mxu0 0.0
    %4694 = vmatpush1.msra.mxu0 0.0
    %4695 = vmatprep.subr.mxu0 0.0
    %4696 = vmatpush1.msra.mxu0 0.0
    %4697 = vmatprep.subr.mxu0 0.0
    %4698 = vmatpush1.msra.mxu0 0.0
    %4699 = vmatprep.subr.mxu0 0.0
    %4700 = vmatpush1.msra.mxu0 0.0
    %4701 = vmatprep.subr.mxu0 0.0
    %4702 = vmatpush1.msra.mxu0 0.0
    %4703 = vmatprep.subr.mxu0 0.0
    %4704 = vmatpush1.msra.mxu0 0.0
    %4705 = vmatprep.subr.mxu0 0.0
    %4706 = vmatpush1.msra.mxu0 0.0
    %4707 = vmatprep.subr.mxu0 0.0
    %4708 = vmatpush1.msra.mxu0 0.0
    %4709 = vmatprep.subr.mxu0 0.0
    %4710 = vmatpush1.msra.mxu0 0.0
    %4711 = vmatprep.subr.mxu0 0.0
    %4712 = vmatpush1.msra.mxu0 0.0
    %4713 = vmatprep.subr.mxu0 0.0
    %4714 = vmatpush1.msra.mxu0 0.0
    %4715 = vmatprep.subr.mxu0 0.0
    %4716 = vmatpush1.msra.mxu0 0.0
    %4717 = vmatprep.subr.mxu0 0.0
    %4718 = vmatpush1.msra.mxu0 0.0
    %4719 = vmatprep.subr.mxu0 0.0
    %4720 = vmatpush1.msra.mxu0 0.0
    %4721 = vmatprep.subr.mxu0 0.0
    %4722 = vmatpush1.msra.mxu0 0.0
    %4723 = vmatprep.subr.mxu0 0.0
    %4724 = vmatpush1.msra.mxu0 0.0
    %4725 = vmatprep.subr.mxu0 0.0
    %4726 = vmatpush1.msra.mxu0 0.0
    %4727 = vmatprep.subr.mxu0 0.0
    %4728 = vmatpush1.msra.mxu0 0.0
    %4729 = vmatprep.subr.mxu0 0.0
    %4730 = vmatpush1.msra.mxu0 0.0
    %4731 = vmatprep.subr.mxu0 0.0
    %4732 = vmatpush1.msra.mxu0 0.0
    %4733 = vmatprep.subr.mxu0 0.0
    %4734 = vmatpush1.msra.mxu0 0.0
    %4735 = vmatprep.subr.mxu0 0.0
    %4736 = vmatpush1.msra.mxu0 0.0
    %4737 = vmatprep.subr.mxu0 0.0
    %4738 = vmatpush1.msra.mxu0 0.0
    %4739 = vmatprep.subr.mxu0 0.0
    %4740 = vmatpush1.msra.mxu0 0.0
    %4741 = vmatprep.mubr.f32.mxu0 0.0
    %4742 = vmatmul.mubr.f32.gmra.mrb[0].mxu0 %v4675
    %v4743 = vpop.f32.mrb[0].mxu0
    %v4744 = vadd.f32 0.0, %v4743
    %v4745 = vpop.f32.mrb[0].mxu0
    %v4746 = vadd.f32 0.0, %v4745
    %4747 = vdwg.mxu0
    %v4748 = vlaneseq
    %v4749 = vshrl.u32 %v4748, 7
    %v4750 = vsub.s32 0, %v4749
    %v4751 = vrot.slane %v4744, %v4750
    %v4752 = vlaneseq
    %v4753 = vshrl.u32 %v4752, 7
    %v4754 = vsub.s32 0, %v4753
    %v4755 = vrot.slane %v4746, %v4754
    %v4756 = vsub.f32 %v4557, %v4751
    %v4757 = vsub.f32 %v4559, %v4755
    %v4758 = vlaneseq
    %v4759 = vshrl.u32 %v4758, 7
    %v4760 = vsub.s32 1, %v4759
    %v4761 = vrot.slane %v4744, %v4760
    %v4762 = vlaneseq
    %v4763 = vshrl.u32 %v4762, 7
    %v4764 = vsub.s32 1, %v4763
    %v4765 = vrot.slane %v4746, %v4764
    %v4766 = vmul.f32 %v4756, %v4761
    %v4767 = vmul.f32 %v4757, %v4765
    %v4768 = vmax.f32 %v4766, 0.0
    %v4769 = vmax.f32 %v4767, 0.0
    %v4770 = vpack.c.bf16 %v4768, %v4768
    %v4771 = vpack.c.bf16 %v4769, %v4769
    %v4772 = vld [vmem:[#allocation20] sm:$0xff]
    %v4773 = vld [vmem:[#allocation20 + $0x8] sm:$0xff]
    %v4774 = vld [vmem:[#allocation20 + $0x10] sm:$0xff]
    %v4775 = vld [vmem:[#allocation20 + $0x18] sm:$0xff]
    %v4776 = vld [vmem:[#allocation20 + $0x20] sm:$0xff]
    %v4777 = vld [vmem:[#allocation20 + $0x28] sm:$0xff]
    %v4778 = vld [vmem:[#allocation20 + $0x30] sm:$0xff]
    %v4779 = vld [vmem:[#allocation20 + $0x38] sm:$0xff]
    %v4780 = vld [vmem:[#allocation20 + $0x40] sm:$0xff]
    %v4781 = vld [vmem:[#allocation20 + $0x48] sm:$0xff]
    %v4782 = vld [vmem:[#allocation20 + $0x50] sm:$0xff]
    %v4783 = vld [vmem:[#allocation20 + $0x58] sm:$0xff]
    %v4784 = vld [vmem:[#allocation20 + $0x60] sm:$0xff]
    %v4785 = vld [vmem:[#allocation20 + $0x68] sm:$0xff]
    %v4786 = vld [vmem:[#allocation20 + $0x70] sm:$0xff]
    %v4787 = vld [vmem:[#allocation20 + $0x78] sm:$0xff]
    %v4788 = vld [vmem:[#allocation20 + $0x80] sm:$0xff]
    %v4789 = vld [vmem:[#allocation20 + $0x88] sm:$0xff]
    %v4790 = vld [vmem:[#allocation20 + $0x90] sm:$0xff]
    %v4791 = vld [vmem:[#allocation20 + $0x98] sm:$0xff]
    %v4792 = vld [vmem:[#allocation20 + $0xa0] sm:$0xff]
    %v4793 = vld [vmem:[#allocation20 + $0xa8] sm:$0xff]
    %v4794 = vld [vmem:[#allocation20 + $0xb0] sm:$0xff]
    %v4795 = vld [vmem:[#allocation20 + $0xb8] sm:$0xff]
    %v4796 = vld [vmem:[#allocation20 + $0xc0] sm:$0xff]
    %v4797 = vld [vmem:[#allocation20 + $0xc8] sm:$0xff]
    %v4798 = vld [vmem:[#allocation20 + $0xd0] sm:$0xff]
    %v4799 = vld [vmem:[#allocation20 + $0xd8] sm:$0xff]
    %v4800 = vld [vmem:[#allocation20 + $0xe0] sm:$0xff]
    %v4801 = vld [vmem:[#allocation20 + $0xe8] sm:$0xff]
    %v4802 = vld [vmem:[#allocation20 + $0xf0] sm:$0xff]
    %v4803 = vld [vmem:[#allocation20 + $0xf8] sm:$0xff]
    %v4804 = vld [vmem:[%s17] sm:$0x3]
    %v4806 = vlaneseq
    %v4807 = vshrl.u32 %v4806, 7
    %v4808 = vsub.s32 0, %v4807
    %v4809 = vrot.slane %v4804, %v4808
    %v4810 = vlaneseq
    %v4811 = vshrl.u32 %v4810, 7
    %v4812 = vsub.s32 1, %v4811
    %v4813 = vrot.slane %v4804, %v4812
    %v4848 = vunpack.c.l.b16 %v4772
    %v4849 = vunpack.c.h.b16 %v4772
    %v4850 = vunpack.c.l.b16 %v4773
    %v4851 = vunpack.c.h.b16 %v4773
    %v4852 = vunpack.c.l.b16 %v4774
    %v4853 = vunpack.c.h.b16 %v4774
    %v4854 = vunpack.c.l.b16 %v4775
    %v4855 = vunpack.c.h.b16 %v4775
    %v4856 = vunpack.c.l.b16 %v4776
    %v4857 = vunpack.c.h.b16 %v4776
    %v4858 = vunpack.c.l.b16 %v4777
    %v4859 = vunpack.c.h.b16 %v4777
    %v4860 = vunpack.c.l.b16 %v4778
    %v4861 = vunpack.c.h.b16 %v4778
    %v4862 = vunpack.c.l.b16 %v4779
    %v4863 = vunpack.c.h.b16 %v4779
    %v4864 = vunpack.c.l.b16 %v4780
    %v4865 = vunpack.c.h.b16 %v4780
    %v4866 = vunpack.c.l.b16 %v4781
    %v4867 = vunpack.c.h.b16 %v4781
    %v4868 = vunpack.c.l.b16 %v4782
    %v4869 = vunpack.c.h.b16 %v4782
    %v4870 = vunpack.c.l.b16 %v4783
    %v4871 = vunpack.c.h.b16 %v4783
    %v4872 = vunpack.c.l.b16 %v4784
    %v4873 = vunpack.c.h.b16 %v4784
    %v4874 = vunpack.c.l.b16 %v4785
    %v4875 = vunpack.c.h.b16 %v4785
    %v4876 = vunpack.c.l.b16 %v4786
    %v4877 = vunpack.c.h.b16 %v4786
    %v4878 = vunpack.c.l.b16 %v4787
    %v4879 = vunpack.c.h.b16 %v4787
    %v4880 = vunpack.c.l.b16 %v4788
    %v4881 = vunpack.c.h.b16 %v4788
    %v4882 = vunpack.c.l.b16 %v4789
    %v4883 = vunpack.c.h.b16 %v4789
    %v4884 = vunpack.c.l.b16 %v4790
    %v4885 = vunpack.c.h.b16 %v4790
    %v4886 = vunpack.c.l.b16 %v4791
    %v4887 = vunpack.c.h.b16 %v4791
    %v4888 = vunpack.c.l.b16 %v4792
    %v4889 = vunpack.c.h.b16 %v4792
    %v4890 = vunpack.c.l.b16 %v4793
    %v4891 = vunpack.c.h.b16 %v4793
    %v4892 = vunpack.c.l.b16 %v4794
    %v4893 = vunpack.c.h.b16 %v4794
    %v4894 = vunpack.c.l.b16 %v4795
    %v4895 = vunpack.c.h.b16 %v4795
    %v4896 = vunpack.c.l.b16 %v4796
    %v4897 = vunpack.c.h.b16 %v4796
    %v4898 = vunpack.c.l.b16 %v4797
    %v4899 = vunpack.c.h.b16 %v4797
    %v4900 = vunpack.c.l.b16 %v4798
    %v4901 = vunpack.c.h.b16 %v4798
    %v4902 = vunpack.c.l.b16 %v4799
    %v4903 = vunpack.c.h.b16 %v4799
    %v4904 = vunpack.c.l.b16 %v4800
    %v4905 = vunpack.c.h.b16 %v4800
    %v4906 = vunpack.c.l.b16 %v4801
    %v4907 = vunpack.c.h.b16 %v4801
    %v4908 = vunpack.c.l.b16 %v4802
    %v4909 = vunpack.c.h.b16 %v4802
    %v4910 = vunpack.c.l.b16 %v4803
    %v4911 = vunpack.c.h.b16 %v4803
    %v4912 = vpack.c.b16 %v4850, %v4848
    %v4913 = vpack.c.b16 %v4851, %v4849
    %v4914 = vpack.c.b16 %v4854, %v4852
    %v4915 = vpack.c.b16 %v4855, %v4853
    %v4916 = vpack.c.b16 %v4858, %v4856
    %v4917 = vpack.c.b16 %v4859, %v4857
    %v4918 = vpack.c.b16 %v4862, %v4860
    %v4919 = vpack.c.b16 %v4863, %v4861
    %v4920 = vpack.c.b16 %v4866, %v4864
    %v4921 = vpack.c.b16 %v4867, %v4865
    %v4922 = vpack.c.b16 %v4870, %v4868
    %v4923 = vpack.c.b16 %v4871, %v4869
    %v4924 = vpack.c.b16 %v4874, %v4872
    %v4925 = vpack.c.b16 %v4875, %v4873
    %v4926 = vpack.c.b16 %v4878, %v4876
    %v4927 = vpack.c.b16 %v4879, %v4877
    %v4928 = vpack.c.b16 %v4882, %v4880
    %v4929 = vpack.c.b16 %v4883, %v4881
    %v4930 = vpack.c.b16 %v4886, %v4884
    %v4931 = vpack.c.b16 %v4887, %v4885
    %v4932 = vpack.c.b16 %v4890, %v4888
    %v4933 = vpack.c.b16 %v4891, %v4889
    %v4934 = vpack.c.b16 %v4894, %v4892
    %v4935 = vpack.c.b16 %v4895, %v4893
    %v4936 = vpack.c.b16 %v4898, %v4896
    %v4937 = vpack.c.b16 %v4899, %v4897
    %v4938 = vpack.c.b16 %v4902, %v4900
    %v4939 = vpack.c.b16 %v4903, %v4901
    %v4940 = vpack.c.b16 %v4906, %v4904
    %v4941 = vpack.c.b16 %v4907, %v4905
    %v4942 = vpack.c.b16 %v4910, %v4908
    %v4943 = vpack.c.b16 %v4911, %v4909
    %4976 = vmatprep.subr.bf16.mxu0 %v4913
    %4977 = vmatpush1.bf16.msra.mxu0 %v4912
    %4978 = vmatprep.subr.bf16.mxu0 %v4915
    %4979 = vmatpush1.bf16.msra.mxu0 %v4914
    %4980 = vmatprep.subr.bf16.mxu0 %v4917
    %4981 = vmatpush1.bf16.msra.mxu0 %v4916
    %4982 = vmatprep.subr.bf16.mxu0 %v4919
    %4983 = vmatpush1.bf16.msra.mxu0 %v4918
    %4984 = vmatprep.subr.bf16.mxu0 %v4921
    %4985 = vmatpush1.bf16.msra.mxu0 %v4920
    %4986 = vmatprep.subr.bf16.mxu0 %v4923
    %4987 = vmatpush1.bf16.msra.mxu0 %v4922
    %4988 = vmatprep.subr.bf16.mxu0 %v4925
    %4989 = vmatpush1.bf16.msra.mxu0 %v4924
    %4990 = vmatprep.subr.bf16.mxu0 %v4927
    %4991 = vmatpush1.bf16.msra.mxu0 %v4926
    %4992 = vmatprep.subr.bf16.mxu0 %v4929
    %4993 = vmatpush1.bf16.msra.mxu0 %v4928
    %4994 = vmatprep.subr.bf16.mxu0 %v4931
    %4995 = vmatpush1.bf16.msra.mxu0 %v4930
    %4996 = vmatprep.subr.bf16.mxu0 %v4933
    %4997 = vmatpush1.bf16.msra.mxu0 %v4932
    %4998 = vmatprep.subr.bf16.mxu0 %v4935
    %4999 = vmatpush1.bf16.msra.mxu0 %v4934
    %5000 = vmatprep.subr.bf16.mxu0 %v4937
    %5001 = vmatpush1.bf16.msra.mxu0 %v4936
    %5002 = vmatprep.subr.bf16.mxu0 %v4939
    %5003 = vmatpush1.bf16.msra.mxu0 %v4938
    %5004 = vmatprep.subr.bf16.mxu0 %v4941
    %5005 = vmatpush1.bf16.msra.mxu0 %v4940
    %5006 = vmatprep.subr.bf16.mxu0 %v4943
    %5007 = vmatpush1.bf16.msra.mxu0 %v4942
    %5008 = vmatprep.mubr.bf16.mxu0 %v4771
    %5009 = vmatmul.mubr.bf16.gmra.mrb[0].mxu0 %v4770
    %v5010 = vpop.f32.mrb[0].mxu0
    %v5011 = vadd.f32 %v4809, %v5010
    %v5012 = vpop.f32.mrb[0].mxu0
    %v5013 = vadd.f32 %v4813, %v5012
    %v5014 = vpop.f32.mrb[0].mxu0
    %v5015 = vpop.f32.mrb[0].mxu0
    %5016 = vdwg.mxu0
    %v5017 = vadd.f32 %v3673, %v5011
    %v5018 = vadd.f32 %v3675, %v5013
    %v5019 = vpack.c.bf16 %v5017, %v5017
    %v5020 = vpack.c.bf16 %v5018, %v5018
    %v5021 = vld [vmem:[#allocation23] sm:$0xff]
    %v5022 = vld [vmem:[#allocation23 + $0x8] sm:$0xff]
    %v5023 = vld [vmem:[#allocation23 + $0x10] sm:$0xff]
    %v5024 = vld [vmem:[#allocation23 + $0x18] sm:$0xff]
    %v5025 = vld [vmem:[#allocation23 + $0x20] sm:$0xff]
    %v5026 = vld [vmem:[#allocation23 + $0x28] sm:$0xff]
    %v5027 = vld [vmem:[#allocation23 + $0x30] sm:$0xff]
    %v5028 = vld [vmem:[#allocation23 + $0x38] sm:$0xff]
    %v5029 = vld [vmem:[#allocation23 + $0x40] sm:$0xff]
    %v5030 = vld [vmem:[#allocation23 + $0x48] sm:$0xff]
    %v5031 = vld [vmem:[#allocation23 + $0x50] sm:$0xff]
    %v5032 = vld [vmem:[#allocation23 + $0x58] sm:$0xff]
    %v5033 = vld [vmem:[#allocation23 + $0x60] sm:$0xff]
    %v5034 = vld [vmem:[#allocation23 + $0x68] sm:$0xff]
    %v5035 = vld [vmem:[#allocation23 + $0x70] sm:$0xff]
    %v5036 = vld [vmem:[#allocation23 + $0x78] sm:$0xff]
    %v5037 = vld [vmem:[#allocation23 + $0x80] sm:$0xff]
    %v5038 = vld [vmem:[#allocation23 + $0x88] sm:$0xff]
    %v5039 = vld [vmem:[#allocation23 + $0x90] sm:$0xff]
    %v5040 = vld [vmem:[#allocation23 + $0x98] sm:$0xff]
    %v5041 = vld [vmem:[#allocation23 + $0xa0] sm:$0xff]
    %v5042 = vld [vmem:[#allocation23 + $0xa8] sm:$0xff]
    %v5043 = vld [vmem:[#allocation23 + $0xb0] sm:$0xff]
    %v5044 = vld [vmem:[#allocation23 + $0xb8] sm:$0xff]
    %v5045 = vld [vmem:[#allocation23 + $0xc0] sm:$0xff]
    %v5046 = vld [vmem:[#allocation23 + $0xc8] sm:$0xff]
    %v5047 = vld [vmem:[#allocation23 + $0xd0] sm:$0xff]
    %v5048 = vld [vmem:[#allocation23 + $0xd8] sm:$0xff]
    %v5049 = vld [vmem:[#allocation23 + $0xe0] sm:$0xff]
    %v5050 = vld [vmem:[#allocation23 + $0xe8] sm:$0xff]
    %v5051 = vld [vmem:[#allocation23 + $0xf0] sm:$0xff]
    %v5052 = vld [vmem:[#allocation23 + $0xf8] sm:$0xff]
    %v5053 = vld [vmem:[%s21] sm:$0x3]
    %v5055 = vlaneseq
    %v5056 = vshrl.u32 %v5055, 7
    %v5057 = vsub.s32 0, %v5056
    %v5058 = vrot.slane %v5053, %v5057
    %v5059 = vlaneseq
    %v5060 = vshrl.u32 %v5059, 7
    %v5061 = vsub.s32 1, %v5060
    %v5062 = vrot.slane %v5053, %v5061
    %v5097 = vunpack.c.l.b16 %v5021
    %v5098 = vunpack.c.h.b16 %v5021
    %v5099 = vunpack.c.l.b16 %v5022
    %v5100 = vunpack.c.h.b16 %v5022
    %v5101 = vunpack.c.l.b16 %v5023
    %v5102 = vunpack.c.h.b16 %v5023
    %v5103 = vunpack.c.l.b16 %v5024
    %v5104 = vunpack.c.h.b16 %v5024
    %v5105 = vunpack.c.l.b16 %v5025
    %v5106 = vunpack.c.h.b16 %v5025
    %v5107 = vunpack.c.l.b16 %v5026
    %v5108 = vunpack.c.h.b16 %v5026
    %v5109 = vunpack.c.l.b16 %v5027
    %v5110 = vunpack.c.h.b16 %v5027
    %v5111 = vunpack.c.l.b16 %v5028
    %v5112 = vunpack.c.h.b16 %v5028
    %v5113 = vunpack.c.l.b16 %v5029
    %v5114 = vunpack.c.h.b16 %v5029
    %v5115 = vunpack.c.l.b16 %v5030
    %v5116 = vunpack.c.h.b16 %v5030
    %v5117 = vunpack.c.l.b16 %v5031
    %v5118 = vunpack.c.h.b16 %v5031
    %v5119 = vunpack.c.l.b16 %v5032
    %v5120 = vunpack.c.h.b16 %v5032
    %v5121 = vunpack.c.l.b16 %v5033
    %v5122 = vunpack.c.h.b16 %v5033
    %v5123 = vunpack.c.l.b16 %v5034
    %v5124 = vunpack.c.h.b16 %v5034
    %v5125 = vunpack.c.l.b16 %v5035
    %v5126 = vunpack.c.h.b16 %v5035
    %v5127 = vunpack.c.l.b16 %v5036
    %v5128 = vunpack.c.h.b16 %v5036
    %v5129 = vunpack.c.l.b16 %v5037
    %v5130 = vunpack.c.h.b16 %v5037
    %v5131 = vunpack.c.l.b16 %v5038
    %v5132 = vunpack.c.h.b16 %v5038
    %v5133 = vunpack.c.l.b16 %v5039
    %v5134 = vunpack.c.h.b16 %v5039
    %v5135 = vunpack.c.l.b16 %v5040
    %v5136 = vunpack.c.h.b16 %v5040
    %v5137 = vunpack.c.l.b16 %v5041
    %v5138 = vunpack.c.h.b16 %v5041
    %v5139 = vunpack.c.l.b16 %v5042
    %v5140 = vunpack.c.h.b16 %v5042
    %v5141 = vunpack.c.l.b16 %v5043
    %v5142 = vunpack.c.h.b16 %v5043
    %v5143 = vunpack.c.l.b16 %v5044
    %v5144 = vunpack.c.h.b16 %v5044
    %v5145 = vunpack.c.l.b16 %v5045
    %v5146 = vunpack.c.h.b16 %v5045
    %v5147 = vunpack.c.l.b16 %v5046
    %v5148 = vunpack.c.h.b16 %v5046
    %v5149 = vunpack.c.l.b16 %v5047
    %v5150 = vunpack.c.h.b16 %v5047
    %v5151 = vunpack.c.l.b16 %v5048
    %v5152 = vunpack.c.h.b16 %v5048
    %v5153 = vunpack.c.l.b16 %v5049
    %v5154 = vunpack.c.h.b16 %v5049
    %v5155 = vunpack.c.l.b16 %v5050
    %v5156 = vunpack.c.h.b16 %v5050
    %v5157 = vunpack.c.l.b16 %v5051
    %v5158 = vunpack.c.h.b16 %v5051
    %v5159 = vunpack.c.l.b16 %v5052
    %v5160 = vunpack.c.h.b16 %v5052
    %v5161 = vpack.c.b16 %v5099, %v5097
    %v5162 = vpack.c.b16 %v5100, %v5098
    %v5163 = vpack.c.b16 %v5103, %v5101
    %v5164 = vpack.c.b16 %v5104, %v5102
    %v5165 = vpack.c.b16 %v5107, %v5105
    %v5166 = vpack.c.b16 %v5108, %v5106
    %v5167 = vpack.c.b16 %v5111, %v5109
    %v5168 = vpack.c.b16 %v5112, %v5110
    %v5169 = vpack.c.b16 %v5115, %v5113
    %v5170 = vpack.c.b16 %v5116, %v5114
    %v5171 = vpack.c.b16 %v5119, %v5117
    %v5172 = vpack.c.b16 %v5120, %v5118
    %v5173 = vpack.c.b16 %v5123, %v5121
    %v5174 = vpack.c.b16 %v5124, %v5122
    %v5175 = vpack.c.b16 %v5127, %v5125
    %v5176 = vpack.c.b16 %v5128, %v5126
    %v5177 = vpack.c.b16 %v5131, %v5129
    %v5178 = vpack.c.b16 %v5132, %v5130
    %v5179 = vpack.c.b16 %v5135, %v5133
    %v5180 = vpack.c.b16 %v5136, %v5134
    %v5181 = vpack.c.b16 %v5139, %v5137
    %v5182 = vpack.c.b16 %v5140, %v5138
    %v5183 = vpack.c.b16 %v5143, %v5141
    %v5184 = vpack.c.b16 %v5144, %v5142
    %v5185 = vpack.c.b16 %v5147, %v5145
    %v5186 = vpack.c.b16 %v5148, %v5146
    %v5187 = vpack.c.b16 %v5151, %v5149
    %v5188 = vpack.c.b16 %v5152, %v5150
    %v5189 = vpack.c.b16 %v5155, %v5153
    %v5190 = vpack.c.b16 %v5156, %v5154
    %v5191 = vpack.c.b16 %v5159, %v5157
    %v5192 = vpack.c.b16 %v5160, %v5158
    %5225 = vmatprep.subr.bf16.mxu0 %v5162
    %5226 = vmatpush1.bf16.msra.mxu0 %v5161
    %5227 = vmatprep.subr.bf16.mxu0 %v5164
    %5228 = vmatpush1.bf16.msra.mxu0 %v5163
    %5229 = vmatprep.subr.bf16.mxu0 %v5166
    %5230 = vmatpush1.bf16.msra.mxu0 %v5165
    %5231 = vmatprep.subr.bf16.mxu0 %v5168
    %5232 = vmatpush1.bf16.msra.mxu0 %v5167
    %5233 = vmatprep.subr.bf16.mxu0 %v5170
    %5234 = vmatpush1.bf16.msra.mxu0 %v5169
    %5235 = vmatprep.subr.bf16.mxu0 %v5172
    %5236 = vmatpush1.bf16.msra.mxu0 %v5171
    %5237 = vmatprep.subr.bf16.mxu0 %v5174
    %5238 = vmatpush1.bf16.msra.mxu0 %v5173
    %5239 = vmatprep.subr.bf16.mxu0 %v5176
    %5240 = vmatpush1.bf16.msra.mxu0 %v5175
    %5241 = vmatprep.subr.bf16.mxu0 %v5178
    %5242 = vmatpush1.bf16.msra.mxu0 %v5177
    %5243 = vmatprep.subr.bf16.mxu0 %v5180
    %5244 = vmatpush1.bf16.msra.mxu0 %v5179
    %5245 = vmatprep.subr.bf16.mxu0 %v5182
    %5246 = vmatpush1.bf16.msra.mxu0 %v5181
    %5247 = vmatprep.subr.bf16.mxu0 %v5184
    %5248 = vmatpush1.bf16.msra.mxu0 %v5183
    %5249 = vmatprep.subr.bf16.mxu0 %v5186
    %5250 = vmatpush1.bf16.msra.mxu0 %v5185
    %5251 = vmatprep.subr.bf16.mxu0 %v5188
    %5252 = vmatpush1.bf16.msra.mxu0 %v5187
    %5253 = vmatprep.subr.bf16.mxu0 %v5190
    %5254 = vmatpush1.bf16.msra.mxu0 %v5189
    %5255 = vmatprep.subr.bf16.mxu0 %v5192
    %5256 = vmatpush1.bf16.msra.mxu0 %v5191
    %5257 = vmatprep.mubr.bf16.mxu0 %v5020
    %5258 = vmatmul.mubr.bf16.gmra.mrb[0].mxu0 %v5019
    %v5259 = vpop.f32.mrb[0].mxu0
    %v5260 = vadd.f32 %v5058, %v5259
    %v5261 = vpop.f32.mrb[0].mxu0
    %v5262 = vadd.f32 %v5062, %v5261
    %v5263 = vpop.f32.mrb[0].mxu0
    %v5264 = vpop.f32.mrb[0].mxu0
    %5265 = vdwg.mxu0
    %v5268 = vcombine.low %v5260, %v5262
    %5270 = vst [vmem:[#allocation25] sm:$0xff] %v5268
    // Predicated region
    $region146: #{atk_generator_pallas.1} parent=1 // pred_check
      _
    $region147: #{atk_generator_pallas.1} parent=1 // pred_check_branch
      %5272 = sbr.rel (0) target = $region149
    $region148: #{atk_generator_pallas.1} parent=1 // pred_region
      %s5274 = ssub.s32 128, 128
      %5275 = vsyncadd [#allocation4], %s5274
      %s5277 = sshll.u32 [#allocation25], 4
      %s5278 = int_to_ptr.vmem [resolvable:$true] %s5277
      %5280 = dma.vmem_to_hbm [thread:$0]  %s5278, 128, %s22, [#allocation4]
    $region149: #{atk_generator_pallas.1} parent=1 // pred_fallthru
      _
    // Predicated region
    $region150: #{atk_generator_pallas.1} parent=1 // pred_check
      _
    $region151: #{atk_generator_pallas.1} parent=1 // pred_check_branch
      %5282 = sbr.rel (0) target = $region153
    $region152: #{atk_generator_pallas.1} parent=1 // pred_region
      %5283 = dma.done [#allocation4], 128
    $region153: #{atk_generator_pallas.1} parent=1 // pred_fallthru
      _
    %5284 = vsyncpa [#allocation3], 1
    %5285 = vsyncpa [#allocation6], 1
    %5286 = vsyncpa [#allocation9], 1
    %5287 = vsyncpa [#allocation12], 1
    %5288 = vsyncpa [#allocation15], 1
    %5289 = vsyncpa [#allocation18], 1
    %5290 = vsyncpa [#allocation21], 1
    %5291 = vsyncpa [#allocation24], 1
    %5292 = vsyncpa [#allocation4], 1

</llo_original>
